<compile_context>
chip_gen: v6e
topology: v6e:2x2x1
jax: 0.10.0
libtpu: 0.0.40
codegen_flags: <defaults>
</compile_context>

<pallas_src>
import jax
import jax.numpy as jnp
from jax.experimental import pallas as pl
from jax.experimental.pallas import tpu as pltpu


def make_deepgcn_kernel(M, K, D, MK, Hin,
                        eps_msg=1e-7, eps_bn=1e-5, eps_ln=1e-5):
    """Kernel over grid=(n_layers,). The output block is resident across the
    grid and carries the node embeddings x; per-layer params are indexed by
    the layer grid axis."""

    def kernel(x_ref, nbr_ref, dist_ref,
               wn_ref, bn_node_ref, we_ref, be_ref,
               bng_ref, bnb_ref, t_ref,
               w1_ref, b1_ref, lng_ref, lnb_ref, w2_ref, b2_ref,
               out_ref, sel_ref):
        l = pl.program_id(0)

        @pl.when(l == 0)
        def _():
            # node encoder: Linear(input_h_dim=2 -> D); Hin is tiny so do it
            # as broadcast MACs instead of a degenerate-contraction matmul.
            xv = x_ref[...]                                  # (M, Hin)
            wn = wn_ref[...]                                 # (Hin, D)
            node = jnp.zeros((M, D), jnp.float32) + bn_node_ref[...]
            for c in range(Hin):                             # static unroll
                node = node + xv[:, c:c + 1] * wn[c:c + 1, :]
            out_ref[...] = node
            # one-hot gather matrix: built once, cached as bf16, reused by
            # every layer (removes per-layer iota+compare work).
            sel = (nbr_ref[...] ==
                   jax.lax.broadcasted_iota(jnp.int32, (MK, M), 1))
            sel_ref[...] = sel.astype(jnp.float32).astype(jnp.bfloat16)

        x = out_ref[...]                                     # (M, D) f32

        # ---- DeepGCNLayer 'res+': h = ReLU(BatchNorm1d(x)) ----
        # BatchNorm1d with training-mode batch statistics (module default).
        mu = jnp.mean(x, axis=0, keepdims=True)
        var = jnp.mean((x - mu) ** 2, axis=0, keepdims=True)
        h = (x - mu) * jax.lax.rsqrt(var + eps_bn)
        h = h * bng_ref[0] + bnb_ref[0]
        h = jnp.maximum(h, 0.0)

        # ---- GENConv message passing ----
        # Gather source-node features on the MXU via the cached bf16 one-hot
        # (bf16 x bf16 -> f32 accumulation).
        # TODO(synk): for large M, replace the cached one-hot with a DMA /
        # scalar-prefetch gather and tile the node axis (grid=(L, M//TM)) with
        # a two-pass BatchNorm; at this demo scale the whole graph fits VMEM.
        h_src = jnp.dot(sel_ref[...], h.astype(jnp.bfloat16),
                        preferred_element_type=jnp.float32)     # (MK, D)

        # edge encoder Linear(1 -> D), recomputed each layer (one FMA over
        # MK*D) instead of holding an (MK, D) buffer resident in VMEM.
        e = dist_ref[...] * we_ref[...] + be_ref[...]            # (MK, D)

        msg = jnp.maximum(h_src + e, 0.0) + eps_msg              # (MK, D)
        msg3 = msg.reshape(M, K, D)

        # softmax aggregation over the K neighbors (temperature t), fused:
        # num/den sums + EUP reciprocal, no alpha temporary, no VPU divide.
        t = t_ref[l]                                             # SMEM scalar
        z = msg3 * t
        z = z - jnp.max(z, axis=1, keepdims=True)
        ez = jnp.exp(z)
        num = jnp.sum(ez * msg3, axis=1)                         # (M, D)
        den = jnp.sum(ez, axis=1)                                # (M, D)
        aggr = num * pl.reciprocal(den, approx=True)

        out = aggr + h                                           # + x_dst

        # ---- GENConv MLP: Linear(D,2D) -> LayerNorm -> ReLU -> Linear(2D,D)
        # bf16 MXU operands, f32 accumulation; bias / LayerNorm math in f32.
        u = jnp.dot(out.astype(jnp.bfloat16), w1_ref[0],
                    preferred_element_type=jnp.float32) + b1_ref[0]
        mu2 = jnp.mean(u, axis=-1, keepdims=True)
        var2 = jnp.mean((u - mu2) ** 2, axis=-1, keepdims=True)
        u = (u - mu2) * jax.lax.rsqrt(var2 + eps_ln)
        u = u * lng_ref[0] + lnb_ref[0]
        u = jnp.maximum(u, 0.0)
        y = jnp.dot(u.astype(jnp.bfloat16), w2_ref[0],
                    preferred_element_type=jnp.float32) + b2_ref[0]

        # ---- DeepGCNLayer 'res+' outer residual ----
        out_ref[...] = x + y

    return kernel


def pyg_deepgcn_encoder_forward(coords, params, n_neighbors):
    B, N, Hin = coords.shape
    D = params["wn"].shape[1]
    L = params["w1"].shape[0]
    Kn = n_neighbors
    M = B * N
    MK = M * Kn

    # ---- utils.make_graphs(batch, n_neighbors, 'pyg') glue (plain JAX) ----
    # TODO(synk): exact rl4cop utils.make_graphs semantics unavailable; assuming
    # a kNN graph over Euclidean distance with node features = coordinates
    # (input_h_dim=2) and edge_attr = Euclidean distance (input_e_dim=1),
    # no self loops.
    diff = coords[:, :, None, :] - coords[:, None, :, :]
    d2 = jnp.sum(diff * diff, axis=-1)                              # (B, N, N)
    d2 = d2 + jnp.eye(N, dtype=coords.dtype)[None] * 1e9            # no self loops
    neg_d2, nbr = jax.lax.top_k(-d2, Kn)                            # (B, N, K)
    dist = jnp.sqrt(jnp.maximum(-neg_d2, 0.0))
    nbr_g = nbr + (jnp.arange(B, dtype=nbr.dtype) * N)[:, None, None]
    # TODO(synk): nbr/dist stay sublane-major (MK,1) because the in-kernel
    # broadcasts need them on sublanes; at large MK scalar-prefetch nbr to SMEM.
    nbr_flat = nbr_g.reshape(MK, 1).astype(jnp.int32)
    dist_flat = dist.reshape(MK, 1).astype(jnp.float32)
    x_flat = coords.reshape(M, Hin).astype(jnp.float32)

    # bf16 weights for the MXU (halves per-layer weight DMA); f32 accumulation.
    w1_bf16 = params["w1"].astype(jnp.bfloat16)
    w2_bf16 = params["w2"].astype(jnp.bfloat16)
    t_flat = params["t"].reshape(L).astype(jnp.float32)

    kernel = make_deepgcn_kernel(M, Kn, D, MK, Hin)

    def full(shape):
        return pl.BlockSpec(shape, lambda l, _s=len(shape): (0,) * _s)

    def per_layer(shape):
        return pl.BlockSpec((1,) + shape,
                            lambda l, _s=len(shape): (l,) + (0,) * _s)

    grid_spec = pltpu.PrefetchScalarGridSpec(
        num_scalar_prefetch=0,
        grid=(L,),
        in_specs=[
            full((M, Hin)),          # node coords
            full((MK, 1)),           # neighbor (source) indices, int32
            full((MK, 1)),           # edge distances
            full((Hin, D)),          # node encoder W
            full((1, D)),            # node encoder b
            full((1, D)),            # edge encoder W
            full((1, D)),            # edge encoder b
            per_layer((1, D)),       # BatchNorm gamma
            per_layer((1, D)),       # BatchNorm beta
            pl.BlockSpec(memory_space=pltpu.MemorySpace.SMEM),  # t (L,) scalars
            per_layer((D, 2 * D)),   # MLP lin1 W (bf16)
            per_layer((1, 2 * D)),   # MLP lin1 b
            per_layer((1, 2 * D)),   # MLP LayerNorm gamma
            per_layer((1, 2 * D)),   # MLP LayerNorm beta
            per_layer((2 * D, D)),   # MLP lin2 W (bf16)
            per_layer((1, D)),       # MLP lin2 b
        ],
        out_specs=pl.BlockSpec((M, D), lambda l: (0, 0)),    # resident accumulator
        scratch_shapes=[pltpu.VMEM((MK, M), jnp.bfloat16)],  # cached one-hot gather
    )

    out = pl.pallas_call(
        kernel,
        grid_spec=grid_spec,
        out_shape=jax.ShapeDtypeStruct((M, D), jnp.float32),
        compiler_params=pltpu.CompilerParams(
            dimension_semantics=("arbitrary",),
            vmem_limit_bytes=32 * 1024 * 1024),
    )(x_flat, nbr_flat, dist_flat,
      params["wn"], params["bn"], params["we"], params["be"],
      params["bng"], params["bnb"], t_flat,
      w1_bf16, params["b1"], params["lng"], params["lnb"],
      w2_bf16, params["b2"])

    return out.reshape(B, N, D)


def init_params(key, D, L, Hin=2):
    ks = jax.random.split(key, 12)

    def n(k, shape, s):
        return (jax.random.normal(k, shape) * s).astype(jnp.float32)

    return {
        "wn": n(ks[0], (Hin, D), 0.5),
        "bn": n(ks[1], (1, D), 0.1),
        "we": n(ks[2], (1, D), 0.5),
        "be": n(ks[3], (1, D), 0.1),
        "bng": (1.0 + n(ks[4], (L, 1, D), 0.1)).astype(jnp.float32),
        "bnb": n(ks[5], (L, 1, D), 0.1),
        "t": jnp.ones((L, 1, 1), jnp.float32),          # GENConv t=1.0, learn_t
        "w1": n(ks[6], (L, D, 2 * D), 1.0 / (D ** 0.5)),
        "b1": n(ks[7], (L, 1, 2 * D), 0.05),
        "lng": (1.0 + n(ks[8], (L, 1, 2 * D), 0.1)).astype(jnp.float32),
        "lnb": n(ks[9], (L, 1, 2 * D), 0.05),
        "w2": n(ks[10], (L, 2 * D, D), 1.0 / ((2 * D) ** 0.5)),
        "b2": n(ks[11], (L, 1, D), 0.05),
    }


if __name__ == "__main__":
    B, N = 2, 16              # batch of 2 graphs, 16 nodes each (e.g. TSP-16)
    D = 128                   # embedding_dim (lane-aligned)
    L = 2                     # n_layers
    KNN = 8                   # n_neighbors

    key = jax.random.PRNGKey(0)
    kp, kx = jax.random.split(key)
    params = init_params(kp, D, L)
    coords = jax.random.uniform(kx, (B, N, 2), dtype=jnp.float32)

    out = pyg_deepgcn_encoder_forward(coords, params, KNN)
    out = jax.block_until_ready(out)

    assert out.shape == (B, N, D)
    assert bool(jnp.all(jnp.isfinite(out)))
    print("KERNEL_OK")
</pallas_src>

<mosaic_0001>
module attributes {stable_mosaic.version = 11 : i64} {
  func.func @kernel(%arg0: i32, %arg1: memref<32x2xf32, #tpu.memory_space<vmem>>, %arg2: memref<256x1xi32, #tpu.memory_space<vmem>>, %arg3: memref<256x1xf32, #tpu.memory_space<vmem>>, %arg4: memref<2x128xf32, #tpu.memory_space<vmem>>, %arg5: memref<1x128xf32, #tpu.memory_space<vmem>>, %arg6: memref<1x128xf32, #tpu.memory_space<vmem>>, %arg7: memref<1x128xf32, #tpu.memory_space<vmem>>, %arg8: memref<1x1x128xf32, #tpu.memory_space<vmem>>, %arg9: memref<1x1x128xf32, #tpu.memory_space<vmem>>, %arg10: memref<2xf32, #tpu.memory_space<smem>>, %arg11: memref<1x128x256xbf16, #tpu.memory_space<vmem>>, %arg12: memref<1x1x256xf32, #tpu.memory_space<vmem>>, %arg13: memref<1x1x256xf32, #tpu.memory_space<vmem>>, %arg14: memref<1x1x256xf32, #tpu.memory_space<vmem>>, %arg15: memref<1x256x128xbf16, #tpu.memory_space<vmem>>, %arg16: memref<1x1x128xf32, #tpu.memory_space<vmem>>, %arg17: memref<32x128xf32, #tpu.memory_space<vmem>>, %arg18: memref<256x32xbf16, #tpu.memory_space<vmem>>) attributes {dimension_semantics = [#tpu.dimension_semantics<arbitrary>], iteration_bounds = array<i64: 2>, scalar_prefetch = 0 : i64, scratch_operands = 1 : i64, tpu.core_type = #tpu.core_type<tc>, window_params = [{pipeline_mode = #tpu.pipeline_mode<synchronous>, transform_indices = @transform_0, window_bounds = array<i64: 32, 2>}, {pipeline_mode = #tpu.pipeline_mode<synchronous>, transform_indices = @transform_1, window_bounds = array<i64: 256, 1>}, {pipeline_mode = #tpu.pipeline_mode<synchronous>, transform_indices = @transform_2, window_bounds = array<i64: 256, 1>}, {pipeline_mode = #tpu.pipeline_mode<synchronous>, transform_indices = @transform_3, window_bounds = array<i64: 2, 128>}, {pipeline_mode = #tpu.pipeline_mode<synchronous>, transform_indices = @transform_4, window_bounds = array<i64: 1, 128>}, {pipeline_mode = #tpu.pipeline_mode<synchronous>, transform_indices = @transform_5, window_bounds = array<i64: 1, 128>}, {pipeline_mode = #tpu.pipeline_mode<synchronous>, transform_indices = @transform_6, window_bounds = array<i64: 1, 128>}, {transform_indices = @transform_7, window_bounds = array<i64: 1, 1, 128>}, {transform_indices = @transform_8, window_bounds = array<i64: 1, 1, 128>}, {transform_indices = @transform_9, window_bounds = array<i64: 2>}, {transform_indices = @transform_10, window_bounds = array<i64: 1, 128, 256>}, {transform_indices = @transform_11, window_bounds = array<i64: 1, 1, 256>}, {transform_indices = @transform_12, window_bounds = array<i64: 1, 1, 256>}, {transform_indices = @transform_13, window_bounds = array<i64: 1, 1, 256>}, {transform_indices = @transform_14, window_bounds = array<i64: 1, 256, 128>}, {transform_indices = @transform_15, window_bounds = array<i64: 1, 1, 128>}, {pipeline_mode = #tpu.pipeline_mode<synchronous>, transform_indices = @transform_16, window_bounds = array<i64: 32, 128>}]} {
    %c0_i32 = arith.constant 0 : i32
    %0 = arith.cmpi eq, %arg0, %c0_i32 : i32
    %1 = arith.extui %0 : i1 to i32
    %c0_i32_0 = arith.constant 0 : i32
    %2 = arith.cmpi ne, %1, %c0_i32_0 : i32
    scf.if %2 {
      %c0_55 = arith.constant 0 : index
      %c0_56 = arith.constant 0 : index
      %110 = vector.load %arg1[%c0_55, %c0_56] : memref<32x2xf32, #tpu.memory_space<vmem>>, vector<32x2xf32>
      %c0_57 = arith.constant 0 : index
      %c0_58 = arith.constant 0 : index
      %111 = vector.load %arg4[%c0_57, %c0_58] : memref<2x128xf32, #tpu.memory_space<vmem>>, vector<2x128xf32>
      %cst_59 = arith.constant 0.000000e+00 : f32
      %112 = vector.broadcast %cst_59 : f32 to vector<32x128xf32>
      %c0_60 = arith.constant 0 : index
      %c0_61 = arith.constant 0 : index
      %113 = vector.load %arg5[%c0_60, %c0_61] : memref<1x128xf32, #tpu.memory_space<vmem>>, vector<1x128xf32>
      %114 = vector.broadcast %113 : vector<1x128xf32> to vector<32x128xf32>
      %115 = arith.addf %112, %114 : vector<32x128xf32>
      %116 = vector.extract_strided_slice %110 {offsets = [0, 0], sizes = [32, 1], strides = [1, 1]} : vector<32x2xf32> to vector<32x1xf32>
      %117 = vector.extract_strided_slice %111 {offsets = [0, 0], sizes = [1, 128], strides = [1, 1]} : vector<2x128xf32> to vector<1x128xf32>
      %118 = vector.broadcast %116 : vector<32x1xf32> to vector<32x128xf32>
      %119 = vector.broadcast %117 : vector<1x128xf32> to vector<32x128xf32>
      %120 = arith.mulf %118, %119 : vector<32x128xf32>
      %121 = arith.addf %115, %120 : vector<32x128xf32>
      %122 = vector.extract_strided_slice %110 {offsets = [0, 1], sizes = [32, 1], strides = [1, 1]} : vector<32x2xf32> to vector<32x1xf32>
      %123 = vector.extract_strided_slice %111 {offsets = [1, 0], sizes = [1, 128], strides = [1, 1]} : vector<2x128xf32> to vector<1x128xf32>
      %124 = vector.broadcast %122 : vector<32x1xf32> to vector<32x128xf32>
      %125 = vector.broadcast %123 : vector<1x128xf32> to vector<32x128xf32>
      %126 = arith.mulf %124, %125 : vector<32x128xf32>
      %127 = arith.addf %121, %126 : vector<32x128xf32>
      %c0_62 = arith.constant 0 : index
      %c0_63 = arith.constant 0 : index
      %128 = vector.load %arg17[%c0_62, %c0_63] : memref<32x128xf32, #tpu.memory_space<vmem>>, vector<32x128xf32>
      tpu.vector_store %arg17[%c0_62, %c0_63], %127 {strides = array<i32>} : memref<32x128xf32, #tpu.memory_space<vmem>>, vector<32x128xf32>,
      %c0_64 = arith.constant 0 : index
      %c0_65 = arith.constant 0 : index
      %129 = vector.load %arg2[%c0_64, %c0_65] : memref<256x1xi32, #tpu.memory_space<vmem>>, vector<256x1xi32>
      %130 = tpu.iota {dimensions = array<i32: 1>} : vector<256x32xi32>
      %131 = vector.broadcast %129 : vector<256x1xi32> to vector<256x32xi32>
      %132 = arith.cmpi eq, %131, %130 : vector<256x32xi32>
      %133 = arith.extui %132 : vector<256x32xi1> to vector<256x32xi32>
      %134 = arith.sitofp %133 : vector<256x32xi32> to vector<256x32xf32>
      %135 = arith.truncf %134 : vector<256x32xf32> to vector<256x32xbf16>
      %c0_66 = arith.constant 0 : index
      %c0_67 = arith.constant 0 : index
      %136 = vector.load %arg18[%c0_66, %c0_67] : memref<256x32xbf16, #tpu.memory_space<vmem>>, vector<256x32xbf16>
      tpu.vector_store %arg18[%c0_66, %c0_67], %135 {strides = array<i32>} : memref<256x32xbf16, #tpu.memory_space<vmem>>, vector<256x32xbf16>,
    } else {
    }
    %c0 = arith.constant 0 : index
    %c0_1 = arith.constant 0 : index
    %3 = vector.load %arg17[%c0, %c0_1] : memref<32x128xf32, #tpu.memory_space<vmem>>, vector<32x128xf32>
    %cst = arith.constant dense<0.000000e+00> : vector<128xf32>
    %4 = vector.multi_reduction <add>, %3, %cst [0] : vector<32x128xf32> to vector<128xf32>
    %5 = vector.shape_cast %4 : vector<128xf32> to vector<1x128xf32>
    %cst_2 = arith.constant 3.200000e+01 : f32
    %6 = vector.broadcast %cst_2 : f32 to vector<1x128xf32>
    %7 = arith.divf %5, %6 : vector<1x128xf32>
    %8 = vector.broadcast %7 : vector<1x128xf32> to vector<32x128xf32>
    %9 = arith.subf %3, %8 : vector<32x128xf32>
    %10 = arith.mulf %9, %9 : vector<32x128xf32>
    %cst_3 = arith.constant dense<0.000000e+00> : vector<128xf32>
    %11 = vector.multi_reduction <add>, %10, %cst_3 [0] : vector<32x128xf32> to vector<128xf32>
    %12 = vector.shape_cast %11 : vector<128xf32> to vector<1x128xf32>
    %cst_4 = arith.constant 3.200000e+01 : f32
    %13 = vector.broadcast %cst_4 : f32 to vector<1x128xf32>
    %14 = arith.divf %12, %13 : vector<1x128xf32>
    %15 = vector.broadcast %7 : vector<1x128xf32> to vector<32x128xf32>
    %16 = arith.subf %3, %15 : vector<32x128xf32>
    %cst_5 = arith.constant 9.99999974E-6 : f32
    %17 = vector.broadcast %cst_5 : f32 to vector<1x128xf32>
    %18 = arith.addf %14, %17 : vector<1x128xf32>
    %19 = math.rsqrt %18 : vector<1x128xf32>
    %20 = vector.broadcast %19 : vector<1x128xf32> to vector<32x128xf32>
    %21 = arith.mulf %16, %20 : vector<32x128xf32>
    %c0_6 = arith.constant 0 : index
    %c0_7 = arith.constant 0 : index
    %c0_8 = arith.constant 0 : index
    %22 = vector.load %arg8[%c0_6, %c0_7, %c0_8] : memref<1x1x128xf32, #tpu.memory_space<vmem>>, vector<1x1x128xf32>
    %23 = vector.shape_cast %22 : vector<1x1x128xf32> to vector<1x128xf32>
    %24 = vector.broadcast %23 : vector<1x128xf32> to vector<32x128xf32>
    %25 = arith.mulf %21, %24 : vector<32x128xf32>
    %c0_9 = arith.constant 0 : index
    %c0_10 = arith.constant 0 : index
    %c0_11 = arith.constant 0 : index
    %26 = vector.load %arg9[%c0_9, %c0_10, %c0_11] : memref<1x1x128xf32, #tpu.memory_space<vmem>>, vector<1x1x128xf32>
    %27 = vector.shape_cast %26 : vector<1x1x128xf32> to vector<1x128xf32>
    %28 = vector.broadcast %27 : vector<1x128xf32> to vector<32x128xf32>
    %29 = arith.addf %25, %28 : vector<32x128xf32>
    %cst_12 = arith.constant 0.000000e+00 : f32
    %30 = vector.broadcast %cst_12 : f32 to vector<32x128xf32>
    %31 = arith.maximumf %29, %30 : vector<32x128xf32>
    %c0_13 = arith.constant 0 : index
    %c0_14 = arith.constant 0 : index
    %32 = vector.load %arg18[%c0_13, %c0_14] : memref<256x32xbf16, #tpu.memory_space<vmem>>, vector<256x32xbf16>
    %33 = arith.truncf %31 : vector<32x128xf32> to vector<32x128xbf16>
    %cst_15 = arith.constant dense<0.000000e+00> : vector<256x128xf32>
    %34 = tpu.matmul %32, %33, %cst_15 {dimension_numbers = #tpu.dot_dimension_numbers<[1], [0], [0], [1], [0, 0, 1, 1], [], []>} : vector<256x32xbf16>, vector<32x128xbf16>, vector<256x128xf32> -> vector<256x128xf32>
    %c0_16 = arith.constant 0 : index
    %c0_17 = arith.constant 0 : index
    %35 = vector.load %arg3[%c0_16, %c0_17] : memref<256x1xf32, #tpu.memory_space<vmem>>, vector<256x1xf32>
    %c0_18 = arith.constant 0 : index
    %c0_19 = arith.constant 0 : index
    %36 = vector.load %arg6[%c0_18, %c0_19] : memref<1x128xf32, #tpu.memory_space<vmem>>, vector<1x128xf32>
    %37 = vector.broadcast %35 : vector<256x1xf32> to vector<256x128xf32>
    %38 = vector.broadcast %36 : vector<1x128xf32> to vector<256x128xf32>
    %39 = arith.mulf %37, %38 : vector<256x128xf32>
    %c0_20 = arith.constant 0 : index
    %c0_21 = arith.constant 0 : index
    %40 = vector.load %arg7[%c0_20, %c0_21] : memref<1x128xf32, #tpu.memory_space<vmem>>, vector<1x128xf32>
    %41 = vector.broadcast %40 : vector<1x128xf32> to vector<256x128xf32>
    %42 = arith.addf %39, %41 : vector<256x128xf32>
    %43 = arith.addf %34, %42 : vector<256x128xf32>
    %cst_22 = arith.constant 0.000000e+00 : f32
    %44 = vector.broadcast %cst_22 : f32 to vector<256x128xf32>
    %45 = arith.maximumf %43, %44 : vector<256x128xf32>
    %cst_23 = arith.constant 1.000000e-07 : f32
    %46 = vector.broadcast %cst_23 : f32 to vector<256x128xf32>
    %47 = arith.addf %45, %46 : vector<256x128xf32>
    %48 = vector.shape_cast %47 : vector<256x128xf32> to vector<32x8x128xf32>
    %49 = arith.index_cast %arg0 : i32 to index
    %50 = memref.load %arg10[%49] : memref<2xf32, #tpu.memory_space<smem>>
    %51 = vector.broadcast %50 : f32 to vector<32x8x128xf32>
    %52 = arith.mulf %48, %51 : vector<32x8x128xf32>
    %cst_24 = arith.constant dense<0xFF800000> : vector<32x128xf32>
    %53 = vector.multi_reduction <maximumf>, %52, %cst_24 [1] : vector<32x8x128xf32> to vector<32x128xf32>
    %54 = vector.shape_cast %53 : vector<32x128xf32> to vector<32x1x128xf32>
    %55 = vector.broadcast %54 : vector<32x1x128xf32> to vector<32x8x128xf32>
    %56 = arith.subf %52, %55 : vector<32x8x128xf32>
    %57 = math.exp %56 : vector<32x8x128xf32>
    %58 = arith.mulf %57, %48 : vector<32x8x128xf32>
    %cst_25 = arith.constant dense<0.000000e+00> : vector<32x128xf32>
    %59 = vector.multi_reduction <add>, %58, %cst_25 [1] : vector<32x8x128xf32> to vector<32x128xf32>
    %cst_26 = arith.constant dense<0.000000e+00> : vector<32x128xf32>
    %60 = vector.multi_reduction <add>, %57, %cst_26 [1] : vector<32x8x128xf32> to vector<32x128xf32>
    %61 = tpu.reciprocal %60 {approx = true} : vector<32x128xf32> -> vector<32x128xf32>
    %62 = arith.mulf %59, %61 : vector<32x128xf32>
    %63 = arith.addf %62, %31 : vector<32x128xf32>
    %64 = arith.truncf %63 : vector<32x128xf32> to vector<32x128xbf16>
    %c0_27 = arith.constant 0 : index
    %c0_28 = arith.constant 0 : index
    %c0_29 = arith.constant 0 : index
    %65 = vector.load %arg11[%c0_27, %c0_28, %c0_29] : memref<1x128x256xbf16, #tpu.memory_space<vmem>>, vector<1x128x256xbf16>
    %66 = vector.shape_cast %65 : vector<1x128x256xbf16> to vector<128x256xbf16>
    %cst_30 = arith.constant dense<0.000000e+00> : vector<32x256xf32>
    %67 = tpu.matmul %64, %66, %cst_30 {dimension_numbers = #tpu.dot_dimension_numbers<[1], [0], [0], [1], [0, 0, 1, 1], [], []>} : vector<32x128xbf16>, vector<128x256xbf16>, vector<32x256xf32> -> vector<32x256xf32>
    %c0_31 = arith.constant 0 : index
    %c0_32 = arith.constant 0 : index
    %c0_33 = arith.constant 0 : index
    %68 = vector.load %arg12[%c0_31, %c0_32, %c0_33] : memref<1x1x256xf32, #tpu.memory_space<vmem>>, vector<1x1x256xf32>
    %69 = vector.shape_cast %68 : vector<1x1x256xf32> to vector<1x256xf32>
    %70 = vector.broadcast %69 : vector<1x256xf32> to vector<32x256xf32>
    %71 = arith.addf %67, %70 : vector<32x256xf32>
    %cst_34 = arith.constant dense<0.000000e+00> : vector<32xf32>
    %72 = vector.multi_reduction <add>, %71, %cst_34 [1] : vector<32x256xf32> to vector<32xf32>
    %73 = vector.shape_cast %72 : vector<32xf32> to vector<32x1xf32>
    %cst_35 = arith.constant 2.560000e+02 : f32
    %74 = vector.broadcast %cst_35 : f32 to vector<32x1xf32>
    %75 = arith.divf %73, %74 : vector<32x1xf32>
    %76 = vector.broadcast %75 : vector<32x1xf32> to vector<32x256xf32>
    %77 = arith.subf %71, %76 : vector<32x256xf32>
    %78 = arith.mulf %77, %77 : vector<32x256xf32>
    %cst_36 = arith.constant dense<0.000000e+00> : vector<32xf32>
    %79 = vector.multi_reduction <add>, %78, %cst_36 [1] : vector<32x256xf32> to vector<32xf32>
    %80 = vector.shape_cast %79 : vector<32xf32> to vector<32x1xf32>
    %cst_37 = arith.constant 2.560000e+02 : f32
    %81 = vector.broadcast %cst_37 : f32 to vector<32x1xf32>
    %82 = arith.divf %80, %81 : vector<32x1xf32>
    %83 = vector.broadcast %75 : vector<32x1xf32> to vector<32x256xf32>
    %84 = arith.subf %71, %83 : vector<32x256xf32>
    %cst_38 = arith.constant 9.99999974E-6 : f32
    %85 = vector.broadcast %cst_38 : f32 to vector<32x1xf32>
    %86 = arith.addf %82, %85 : vector<32x1xf32>
    %87 = math.rsqrt %86 : vector<32x1xf32>
    %88 = vector.broadcast %87 : vector<32x1xf32> to vector<32x256xf32>
    %89 = arith.mulf %84, %88 : vector<32x256xf32>
    %c0_39 = arith.constant 0 : index
    %c0_40 = arith.constant 0 : index
    %c0_41 = arith.constant 0 : index
    %90 = vector.load %arg13[%c0_39, %c0_40, %c0_41] : memref<1x1x256xf32, #tpu.memory_space<vmem>>, vector<1x1x256xf32>
    %91 = vector.shape_cast %90 : vector<1x1x256xf32> to vector<1x256xf32>
    %92 = vector.broadcast %91 : vector<1x256xf32> to vector<32x256xf32>
    %93 = arith.mulf %89, %92 : vector<32x256xf32>
    %c0_42 = arith.constant 0 : index
    %c0_43 = arith.constant 0 : index
    %c0_44 = arith.constant 0 : index
    %94 = vector.load %arg14[%c0_42, %c0_43, %c0_44] : memref<1x1x256xf32, #tpu.memory_space<vmem>>, vector<1x1x256xf32>
    %95 = vector.shape_cast %94 : vector<1x1x256xf32> to vector<1x256xf32>
    %96 = vector.broadcast %95 : vector<1x256xf32> to vector<32x256xf32>
    %97 = arith.addf %93, %96 : vector<32x256xf32>
    %cst_45 = arith.constant 0.000000e+00 : f32
    %98 = vector.broadcast %cst_45 : f32 to vector<32x256xf32>
    %99 = arith.maximumf %97, %98 : vector<32x256xf32>
    %100 = arith.truncf %99 : vector<32x256xf32> to vector<32x256xbf16>
    %c0_46 = arith.constant 0 : index
    %c0_47 = arith.constant 0 : index
    %c0_48 = arith.constant 0 : index
    %101 = vector.load %arg15[%c0_46, %c0_47, %c0_48] : memref<1x256x128xbf16, #tpu.memory_space<vmem>>, vector<1x256x128xbf16>
    %102 = vector.shape_cast %101 : vector<1x256x128xbf16> to vector<256x128xbf16>
    %cst_49 = arith.constant dense<0.000000e+00> : vector<32x128xf32>
    %103 = tpu.matmul %100, %102, %cst_49 {dimension_numbers = #tpu.dot_dimension_numbers<[1], [0], [0], [1], [0, 0, 1, 1], [], []>} : vector<32x256xbf16>, vector<256x128xbf16>, vector<32x128xf32> -> vector<32x128xf32>
    %c0_50 = arith.constant 0 : index
    %c0_51 = arith.constant 0 : index
    %c0_52 = arith.constant 0 : index
    %104 = vector.load %arg16[%c0_50, %c0_51, %c0_52] : memref<1x1x128xf32, #tpu.memory_space<vmem>>, vector<1x1x128xf32>
    %105 = vector.shape_cast %104 : vector<1x1x128xf32> to vector<1x128xf32>
    %106 = vector.broadcast %105 : vector<1x128xf32> to vector<32x128xf32>
    %107 = arith.addf %103, %106 : vector<32x128xf32>
    %108 = arith.addf %3, %107 : vector<32x128xf32>
    %c0_53 = arith.constant 0 : index
    %c0_54 = arith.constant 0 : index
    %109 = vector.load %arg17[%c0_53, %c0_54] : memref<32x128xf32, #tpu.memory_space<vmem>>, vector<32x128xf32>
    tpu.vector_store %arg17[%c0_53, %c0_54], %108 {strides = array<i32>} : memref<32x128xf32, #tpu.memory_space<vmem>>, vector<32x128xf32>,
    return
  }
  func.func @transform_0(%arg0: i32) -> (i32, i32) {
    %c0_i32 = arith.constant 0 : i32
    %c0_i32_0 = arith.constant 0 : i32
    %c0_i32_1 = arith.constant 0 : i32
    return %c0_i32, %c0_i32_0 : i32, i32
  }
  func.func @transform_1(%arg0: i32) -> (i32, i32) {
    %c0_i32 = arith.constant 0 : i32
    %c0_i32_0 = arith.constant 0 : i32
    %c0_i32_1 = arith.constant 0 : i32
    return %c0_i32, %c0_i32_0 : i32, i32
  }
  func.func @transform_2(%arg0: i32) -> (i32, i32) {
    %c0_i32 = arith.constant 0 : i32
    %c0_i32_0 = arith.constant 0 : i32
    %c0_i32_1 = arith.constant 0 : i32
    return %c0_i32, %c0_i32_0 : i32, i32
  }
  func.func @transform_3(%arg0: i32) -> (i32, i32) {
    %c0_i32 = arith.constant 0 : i32
    %c0_i32_0 = arith.constant 0 : i32
    %c0_i32_1 = arith.constant 0 : i32
    return %c0_i32, %c0_i32_0 : i32, i32
  }
  func.func @transform_4(%arg0: i32) -> (i32, i32) {
    %c0_i32 = arith.constant 0 : i32
    %c0_i32_0 = arith.constant 0 : i32
    %c0_i32_1 = arith.constant 0 : i32
    return %c0_i32, %c0_i32_0 : i32, i32
  }
  func.func @transform_5(%arg0: i32) -> (i32, i32) {
    %c0_i32 = arith.constant 0 : i32
    %c0_i32_0 = arith.constant 0 : i32
    %c0_i32_1 = arith.constant 0 : i32
    return %c0_i32, %c0_i32_0 : i32, i32
  }
  func.func @transform_6(%arg0: i32) -> (i32, i32) {
    %c0_i32 = arith.constant 0 : i32
    %c0_i32_0 = arith.constant 0 : i32
    %c0_i32_1 = arith.constant 0 : i32
    return %c0_i32, %c0_i32_0 : i32, i32
  }
  func.func @transform_7(%arg0: i32) -> (i32, i32, i32) {
    %c0_i32 = arith.constant 0 : i32
    %c0_i32_0 = arith.constant 0 : i32
    %c0_i32_1 = arith.constant 0 : i32
    return %arg0, %c0_i32, %c0_i32_0 : i32, i32, i32
  }
  func.func @transform_8(%arg0: i32) -> (i32, i32, i32) {
    %c0_i32 = arith.constant 0 : i32
    %c0_i32_0 = arith.constant 0 : i32
    %c0_i32_1 = arith.constant 0 : i32
    return %arg0, %c0_i32, %c0_i32_0 : i32, i32, i32
  }
  func.func @transform_9(%arg0: i32) -> i32 {
    %c0_i32 = arith.constant 0 : i32
    %c0_i32_0 = arith.constant 0 : i32
    return %c0_i32 : i32
  }
  func.func @transform_10(%arg0: i32) -> (i32, i32, i32) {
    %c0_i32 = arith.constant 0 : i32
    %c0_i32_0 = arith.constant 0 : i32
    %c0_i32_1 = arith.constant 0 : i32
    return %arg0, %c0_i32, %c0_i32_0 : i32, i32, i32
  }
  func.func @transform_11(%arg0: i32) -> (i32, i32, i32) {
    %c0_i32 = arith.constant 0 : i32
    %c0_i32_0 = arith.constant 0 : i32
    %c0_i32_1 = arith.constant 0 : i32
    return %arg0, %c0_i32, %c0_i32_0 : i32, i32, i32
  }
  func.func @transform_12(%arg0: i32) -> (i32, i32, i32) {
    %c0_i32 = arith.constant 0 : i32
    %c0_i32_0 = arith.constant 0 : i32
    %c0_i32_1 = arith.constant 0 : i32
    return %arg0, %c0_i32, %c0_i32_0 : i32, i32, i32
  }
  func.func @transform_13(%arg0: i32) -> (i32, i32, i32) {
    %c0_i32 = arith.constant 0 : i32
    %c0_i32_0 = arith.constant 0 : i32
    %c0_i32_1 = arith.constant 0 : i32
    return %arg0, %c0_i32, %c0_i32_0 : i32, i32, i32
  }
  func.func @transform_14(%arg0: i32) -> (i32, i32, i32) {
    %c0_i32 = arith.constant 0 : i32
    %c0_i32_0 = arith.constant 0 : i32
    %c0_i32_1 = arith.constant 0 : i32
    return %arg0, %c0_i32, %c0_i32_0 : i32, i32, i32
  }
  func.func @transform_15(%arg0: i32) -> (i32, i32, i32) {
    %c0_i32 = arith.constant 0 : i32
    %c0_i32_0 = arith.constant 0 : i32
    %c0_i32_1 = arith.constant 0 : i32
    return %arg0, %c0_i32, %c0_i32_0 : i32, i32, i32
  }
  func.func @transform_16(%arg0: i32) -> (i32, i32) {
    %c0_i32 = arith.constant 0 : i32
    %c0_i32_0 = arith.constant 0 : i32
    %c0_i32_1 = arith.constant 0 : i32
    return %c0_i32, %c0_i32_0 : i32, i32
  }
}

</mosaic_0001>

<llo_original>
// kernel: tpu_custom_call.1
$region0: #{tpu_custom_call.1}
  #allocation0 [shape = 'u32[]', space=smem, size = 0x4, offset = 0x4, fixed_abs, tag = 'smem constant byte address 0x4 - core index']
  #allocation1 [shape = 'u32[144,128]{1,0:T(1,128)}', space=vmem, size = 0x12000, scoped, tag = 'internal scratch']
  #allocation2 [shape = 'bf16[256,32]{1,0:T(8,128)(2,1)}', space=vmem, size = 0x10000, scoped, tag = 'scratch operand']
  %s0 = inlined_call_operand.vmem [shape: f32[32,2], index: 0, kind: input, shape index: {}]
  %s1 = inlined_call_operand.vmem [shape: s32[256,1], index: 1, kind: input, shape index: {}]
  %s2 = inlined_call_operand.vmem [shape: f32[256,1], index: 2, kind: input, shape index: {}]
  %s3 = inlined_call_operand.vmem [shape: f32[2,128], index: 3, kind: input, shape index: {}]
  %s4 = inlined_call_operand.vmem [shape: f32[1,128], index: 4, kind: input, shape index: {}]
  %s5 = inlined_call_operand.vmem [shape: f32[1,128], index: 5, kind: input, shape index: {}]
  %s6 = inlined_call_operand.vmem [shape: f32[1,128], index: 6, kind: input, shape index: {}]
  %s7 = inlined_call_operand.vmem [shape: f32[2,1,128], index: 7, kind: input, shape index: {}]
  %s8 = inlined_call_operand.vmem [shape: f32[2,1,128], index: 8, kind: input, shape index: {}]
  %s9 = inlined_call_operand.vmem [shape: f32[2], index: 9, kind: input, shape index: {}]
  %s10 = inlined_call_operand.vmem [shape: bf16[2,128,256], index: 10, kind: input, shape index: {}]
  %s11 = inlined_call_operand.vmem [shape: f32[2,1,256], index: 11, kind: input, shape index: {}]
  %s12 = inlined_call_operand.vmem [shape: f32[2,1,256], index: 12, kind: input, shape index: {}]
  %s13 = inlined_call_operand.vmem [shape: f32[2,1,256], index: 13, kind: input, shape index: {}]
  %s14 = inlined_call_operand.vmem [shape: bf16[2,256,128], index: 14, kind: input, shape index: {}]
  %s15 = inlined_call_operand.vmem [shape: f32[2,1,128], index: 15, kind: input, shape index: {}]
  %s16 = inlined_call_operand.hbm [shape: f32[32,128], index: 16, kind: output, shape index: {}]
  %s17 = sld [smem:[#allocation0]]
  $region105: #{tpu_custom_call.1} parent=0
    _
  %s19 = ssub.s32 1, %s17
  %s20 = scalar_select 0, %s19, %s17
  $region1: #{tpu_custom_call.1} parent=0
    #allocation3 [shape = 'u8[512]{0}', space=smem, size = 0x200, scoped, tag = 'input window, operand 9, single buffered']
    #allocation4 [shape = 's32[2]{0}', space=sflag, size = 0x8, scoped, tag = 'scoped memory for tpu_custom_call.1']
    #allocation5 [shape = 's32[2]{0}', space=sflag, size = 0x8, scoped, tag = 'scoped memory for tpu_custom_call.1']
    #allocation6 [shape = 'u8[16384]{0}', space=vmem, size = 0x4000, scoped, tag = 'output window, operand 0, single buffered']
    %21 = vsyncpa [#allocation5], 0
    %22 = vsyncpa [#allocation4], 0
    loop: start=0, step=1, limit=4
    $region2: #{tpu_custom_call.1} parent=1 // loop_pre_header
      _
    $region3: #{tpu_custom_call.1} parent=1 // loop_header
      %s24 = sphi 0, %s28
      %p25 = scmp.ge.s32.totalorder %s24, 4
      %s32 = sphi 0, %s32
      %s34 = sphi 0, %s32
      %s35 = sphi 0, %s34
      %s49 = sphi 0, %s35
      %s53 = sphi 0, %s53
      %s55 = sphi 0, %s53
      %s56 = sphi 0, %s55
      %s70 = sphi 0, %s56
      %s74 = sphi 0, %s74
      %s76 = sphi 0, %s74
      %s77 = sphi 0, %s76
      %s91 = sphi 0, %s77
      %s95 = sphi 0, %s95
      %s97 = sphi 0, %s95
      %s98 = sphi 0, %s97
      %s112 = sphi 0, %s98
      %s116 = sphi 0, %s116
      %s118 = sphi 0, %s116
      %s119 = sphi 0, %s118
      %s133 = sphi 0, %s119
      %s137 = sphi 0, %s137
      %s139 = sphi 0, %s137
      %s140 = sphi 0, %s139
      %s154 = sphi 0, %s140
      %s158 = sphi 0, %s158
      %s160 = sphi 0, %s158
      %s161 = sphi 0, %s160
      %s175 = sphi 0, %s161
      %s181 = sphi 0, %s183
      %s184 = sphi 0, %s181
      %s185 = sphi 0, %s184
      %s201 = sphi 0, %s185
      %s207 = sphi 0, %s209
      %s210 = sphi 0, %s207
      %s211 = sphi 0, %s210
      %s227 = sphi 0, %s211
      %s231 = sphi 0, %s231
      %s233 = sphi 0, %s231
      %s234 = sphi 0, %s233
      %s248 = sphi 0, %s234
      %s254 = sphi 0, %s256
      %s257 = sphi 0, %s254
      %s258 = sphi 0, %s257
      %s274 = sphi 0, %s258
      %s280 = sphi 0, %s282
      %s283 = sphi 0, %s280
      %s284 = sphi 0, %s283
      %s300 = sphi 0, %s284
      %s306 = sphi 0, %s308
      %s309 = sphi 0, %s306
      %s310 = sphi 0, %s309
      %s326 = sphi 0, %s310
      %s332 = sphi 0, %s334
      %s335 = sphi 0, %s332
      %s336 = sphi 0, %s335
      %s352 = sphi 0, %s336
      %s358 = sphi 0, %s360
      %s361 = sphi 0, %s358
      %s362 = sphi 0, %s361
      %s378 = sphi 0, %s362
      %s384 = sphi 0, %s386
      %s387 = sphi 0, %s384
      %s388 = sphi 0, %s387
      %s404 = sphi 0, %s388
      %s408 = sphi 0, %s408
      %s410 = sphi 0, %s408
      %s411 = sphi 0, %s410
      %s425 = sphi 0, %s411
    $region4: #{tpu_custom_call.1} parent=1 // loop_header_branch
      %27 = sbr.rel (%p25) target = $region8
    $region5: #{tpu_custom_call.1} parent=1 // loop_body
      %s29 = ssub.s32 %s24, 1
      %s30 = ssub.s32 %s24, 2
      %s31 = sadd.s32 %s24, 1
      %s33 = sadd.s32 %s32, 1
      %p36 = scmp.eq.s32.totalorder %s24, 1
      %p37 = scmp.ne.s32.totalorder %s32, %s34
      %p38 = scmp.eq.s32.totalorder %s24, 0
      %p39 = por %p37, %p38
      %p40 = scmp.ne.s32.totalorder %s32, %s34
      %p41 = scmp.eq.s32.totalorder %s29, 1
      %p42 = por %p40, %p41
      %p43 = scmp.ne.s32.totalorder %s34, %s35
      %p44 = scmp.eq.s32.totalorder %s29, 0
      %p45 = por %p43, %p44
      %p46 = scmp.ne.s32.totalorder %s34, %s35
      %p47 = scmp.eq.s32.totalorder %s30, 1
      %p48 = por %p46, %p47
      %p50 = scmp.ne.s32.totalorder %s35, %s49
      %p51 = scmp.eq.s32.totalorder %s30, 0
      %p52 = por %p50, %p51
      %s54 = sadd.s32 %s53, 1
      %p57 = scmp.eq.s32.totalorder %s24, 1
      %p58 = scmp.ne.s32.totalorder %s53, %s55
      %p59 = scmp.eq.s32.totalorder %s24, 0
      %p60 = por %p58, %p59
      %p61 = scmp.ne.s32.totalorder %s53, %s55
      %p62 = scmp.eq.s32.totalorder %s29, 1
      %p63 = por %p61, %p62
      %p64 = scmp.ne.s32.totalorder %s55, %s56
      %p65 = scmp.eq.s32.totalorder %s29, 0
      %p66 = por %p64, %p65
      %p67 = scmp.ne.s32.totalorder %s55, %s56
      %p68 = scmp.eq.s32.totalorder %s30, 1
      %p69 = por %p67, %p68
      %p71 = scmp.ne.s32.totalorder %s56, %s70
      %p72 = scmp.eq.s32.totalorder %s30, 0
      %p73 = por %p71, %p72
      %s75 = sadd.s32 %s74, 1
      %p78 = scmp.eq.s32.totalorder %s24, 1
      %p79 = scmp.ne.s32.totalorder %s74, %s76
      %p80 = scmp.eq.s32.totalorder %s24, 0
      %p81 = por %p79, %p80
      %p82 = scmp.ne.s32.totalorder %s74, %s76
      %p83 = scmp.eq.s32.totalorder %s29, 1
      %p84 = por %p82, %p83
      %p85 = scmp.ne.s32.totalorder %s76, %s77
      %p86 = scmp.eq.s32.totalorder %s29, 0
      %p87 = por %p85, %p86
      %p88 = scmp.ne.s32.totalorder %s76, %s77
      %p89 = scmp.eq.s32.totalorder %s30, 1
      %p90 = por %p88, %p89
      %p92 = scmp.ne.s32.totalorder %s77, %s91
      %p93 = scmp.eq.s32.totalorder %s30, 0
      %p94 = por %p92, %p93
      %s96 = sadd.s32 %s95, 1
      %p99 = scmp.eq.s32.totalorder %s24, 1
      %p100 = scmp.ne.s32.totalorder %s95, %s97
      %p101 = scmp.eq.s32.totalorder %s24, 0
      %p102 = por %p100, %p101
      %p103 = scmp.ne.s32.totalorder %s95, %s97
      %p104 = scmp.eq.s32.totalorder %s29, 1
      %p105 = por %p103, %p104
      %p106 = scmp.ne.s32.totalorder %s97, %s98
      %p107 = scmp.eq.s32.totalorder %s29, 0
      %p108 = por %p106, %p107
      %p109 = scmp.ne.s32.totalorder %s97, %s98
      %p110 = scmp.eq.s32.totalorder %s30, 1
      %p111 = por %p109, %p110
      %p113 = scmp.ne.s32.totalorder %s98, %s112
      %p114 = scmp.eq.s32.totalorder %s30, 0
      %p115 = por %p113, %p114
      %s117 = sadd.s32 %s116, 1
      %p120 = scmp.eq.s32.totalorder %s24, 1
      %p121 = scmp.ne.s32.totalorder %s116, %s118
      %p122 = scmp.eq.s32.totalorder %s24, 0
      %p123 = por %p121, %p122
      %p124 = scmp.ne.s32.totalorder %s116, %s118
      %p125 = scmp.eq.s32.totalorder %s29, 1
      %p126 = por %p124, %p125
      %p127 = scmp.ne.s32.totalorder %s118, %s119
      %p128 = scmp.eq.s32.totalorder %s29, 0
      %p129 = por %p127, %p128
      %p130 = scmp.ne.s32.totalorder %s118, %s119
      %p131 = scmp.eq.s32.totalorder %s30, 1
      %p132 = por %p130, %p131
      %p134 = scmp.ne.s32.totalorder %s119, %s133
      %p135 = scmp.eq.s32.totalorder %s30, 0
      %p136 = por %p134, %p135
      %s138 = sadd.s32 %s137, 1
      %p141 = scmp.eq.s32.totalorder %s24, 1
      %p142 = scmp.ne.s32.totalorder %s137, %s139
      %p143 = scmp.eq.s32.totalorder %s24, 0
      %p144 = por %p142, %p143
      %p145 = scmp.ne.s32.totalorder %s137, %s139
      %p146 = scmp.eq.s32.totalorder %s29, 1
      %p147 = por %p145, %p146
      %p148 = scmp.ne.s32.totalorder %s139, %s140
      %p149 = scmp.eq.s32.totalorder %s29, 0
      %p150 = por %p148, %p149
      %p151 = scmp.ne.s32.totalorder %s139, %s140
      %p152 = scmp.eq.s32.totalorder %s30, 1
      %p153 = por %p151, %p152
      %p155 = scmp.ne.s32.totalorder %s140, %s154
      %p156 = scmp.eq.s32.totalorder %s30, 0
      %p157 = por %p155, %p156
      %s159 = sadd.s32 %s158, 1
      %p162 = scmp.eq.s32.totalorder %s24, 1
      %p163 = scmp.ne.s32.totalorder %s158, %s160
      %p164 = scmp.eq.s32.totalorder %s24, 0
      %p165 = por %p163, %p164
      %p166 = scmp.ne.s32.totalorder %s158, %s160
      %p167 = scmp.eq.s32.totalorder %s29, 1
      %p168 = por %p166, %p167
      %p169 = scmp.ne.s32.totalorder %s160, %s161
      %p170 = scmp.eq.s32.totalorder %s29, 0
      %p171 = por %p169, %p170
      %p172 = scmp.ne.s32.totalorder %s160, %s161
      %p173 = scmp.eq.s32.totalorder %s30, 1
      %p174 = por %p172, %p173
      %p176 = scmp.ne.s32.totalorder %s161, %s175
      %p177 = scmp.eq.s32.totalorder %s30, 0
      %p178 = por %p176, %p177
      %s179 = ssub.s32 %s24, %s31
      %p180 = scmp.eq.s32.totalorder %s179, 0
      %s182 = sadd.s32 %s181, 1
      %s183 = scalar_select %p180, %s181, %s182
      %p186 = pneg %p180
      %p187 = scmp.eq.s32.totalorder %s24, 1
      %p188 = por %p186, %p187
      %p189 = scmp.ne.s32.totalorder %s181, %s184
      %p190 = scmp.eq.s32.totalorder %s24, 0
      %p191 = por %p189, %p190
      %p192 = scmp.ne.s32.totalorder %s181, %s184
      %p193 = scmp.eq.s32.totalorder %s29, 1
      %p194 = por %p192, %p193
      %p195 = scmp.ne.s32.totalorder %s184, %s185
      %p196 = scmp.eq.s32.totalorder %s29, 0
      %p197 = por %p195, %p196
      %p198 = scmp.ne.s32.totalorder %s184, %s185
      %p199 = scmp.eq.s32.totalorder %s30, 1
      %p200 = por %p198, %p199
      %p202 = scmp.ne.s32.totalorder %s185, %s201
      %p203 = scmp.eq.s32.totalorder %s30, 0
      %p204 = por %p202, %p203
      %s205 = ssub.s32 %s24, %s31
      %p206 = scmp.eq.s32.totalorder %s205, 0
      %s208 = sadd.s32 %s207, 1
      %s209 = scalar_select %p206, %s207, %s208
      %p212 = pneg %p206
      %p213 = scmp.eq.s32.totalorder %s24, 1
      %p214 = por %p212, %p213
      %p215 = scmp.ne.s32.totalorder %s207, %s210
      %p216 = scmp.eq.s32.totalorder %s24, 0
      %p217 = por %p215, %p216
      %p218 = scmp.ne.s32.totalorder %s207, %s210
      %p219 = scmp.eq.s32.totalorder %s29, 1
      %p220 = por %p218, %p219
      %p221 = scmp.ne.s32.totalorder %s210, %s211
      %p222 = scmp.eq.s32.totalorder %s29, 0
      %p223 = por %p221, %p222
      %p224 = scmp.ne.s32.totalorder %s210, %s211
      %p225 = scmp.eq.s32.totalorder %s30, 1
      %p226 = por %p224, %p225
      %p228 = scmp.ne.s32.totalorder %s211, %s227
      %p229 = scmp.eq.s32.totalorder %s30, 0
      %p230 = por %p228, %p229
      %s232 = sadd.s32 %s231, 1
      %p235 = scmp.eq.s32.totalorder %s24, 1
      %p236 = scmp.ne.s32.totalorder %s231, %s233
      %p237 = scmp.eq.s32.totalorder %s24, 0
      %p238 = por %p236, %p237
      %p239 = scmp.ne.s32.totalorder %s231, %s233
      %p240 = scmp.eq.s32.totalorder %s29, 1
      %p241 = por %p239, %p240
      %p242 = scmp.ne.s32.totalorder %s233, %s234
      %p243 = scmp.eq.s32.totalorder %s29, 0
      %p244 = por %p242, %p243
      %p245 = scmp.ne.s32.totalorder %s233, %s234
      %p246 = scmp.eq.s32.totalorder %s30, 1
      %p247 = por %p245, %p246
      %p249 = scmp.ne.s32.totalorder %s234, %s248
      %p250 = scmp.eq.s32.totalorder %s30, 0
      %p251 = por %p249, %p250
      %s252 = ssub.s32 %s24, %s31
      %p253 = scmp.eq.s32.totalorder %s252, 0
      %s255 = sadd.s32 %s254, 1
      %s256 = scalar_select %p253, %s254, %s255
      %p259 = pneg %p253
      %p260 = scmp.eq.s32.totalorder %s24, 1
      %p261 = por %p259, %p260
      %p262 = scmp.ne.s32.totalorder %s254, %s257
      %p263 = scmp.eq.s32.totalorder %s24, 0
      %p264 = por %p262, %p263
      %p265 = scmp.ne.s32.totalorder %s254, %s257
      %p266 = scmp.eq.s32.totalorder %s29, 1
      %p267 = por %p265, %p266
      %p268 = scmp.ne.s32.totalorder %s257, %s258
      %p269 = scmp.eq.s32.totalorder %s29, 0
      %p270 = por %p268, %p269
      %p271 = scmp.ne.s32.totalorder %s257, %s258
      %p272 = scmp.eq.s32.totalorder %s30, 1
      %p273 = por %p271, %p272
      %p275 = scmp.ne.s32.totalorder %s258, %s274
      %p276 = scmp.eq.s32.totalorder %s30, 0
      %p277 = por %p275, %p276
      %s278 = ssub.s32 %s24, %s31
      %p279 = scmp.eq.s32.totalorder %s278, 0
      %s281 = sadd.s32 %s280, 1
      %s282 = scalar_select %p279, %s280, %s281
      %p285 = pneg %p279
      %p286 = scmp.eq.s32.totalorder %s24, 1
      %p287 = por %p285, %p286
      %p288 = scmp.ne.s32.totalorder %s280, %s283
      %p289 = scmp.eq.s32.totalorder %s24, 0
      %p290 = por %p288, %p289
      %p291 = scmp.ne.s32.totalorder %s280, %s283
      %p292 = scmp.eq.s32.totalorder %s29, 1
      %p293 = por %p291, %p292
      %p294 = scmp.ne.s32.totalorder %s283, %s284
      %p295 = scmp.eq.s32.totalorder %s29, 0
      %p296 = por %p294, %p295
      %p297 = scmp.ne.s32.totalorder %s283, %s284
      %p298 = scmp.eq.s32.totalorder %s30, 1
      %p299 = por %p297, %p298
      %p301 = scmp.ne.s32.totalorder %s284, %s300
      %p302 = scmp.eq.s32.totalorder %s30, 0
      %p303 = por %p301, %p302
      %s304 = ssub.s32 %s24, %s31
      %p305 = scmp.eq.s32.totalorder %s304, 0
      %s307 = sadd.s32 %s306, 1
      %s308 = scalar_select %p305, %s306, %s307
      %p311 = pneg %p305
      %p312 = scmp.eq.s32.totalorder %s24, 1
      %p313 = por %p311, %p312
      %p314 = scmp.ne.s32.totalorder %s306, %s309
      %p315 = scmp.eq.s32.totalorder %s24, 0
      %p316 = por %p314, %p315
      %p317 = scmp.ne.s32.totalorder %s306, %s309
      %p318 = scmp.eq.s32.totalorder %s29, 1
      %p319 = por %p317, %p318
      %p320 = scmp.ne.s32.totalorder %s309, %s310
      %p321 = scmp.eq.s32.totalorder %s29, 0
      %p322 = por %p320, %p321
      %p323 = scmp.ne.s32.totalorder %s309, %s310
      %p324 = scmp.eq.s32.totalorder %s30, 1
      %p325 = por %p323, %p324
      %p327 = scmp.ne.s32.totalorder %s310, %s326
      %p328 = scmp.eq.s32.totalorder %s30, 0
      %p329 = por %p327, %p328
      %s330 = ssub.s32 %s24, %s31
      %p331 = scmp.eq.s32.totalorder %s330, 0
      %s333 = sadd.s32 %s332, 1
      %s334 = scalar_select %p331, %s332, %s333
      %p337 = pneg %p331
      %p338 = scmp.eq.s32.totalorder %s24, 1
      %p339 = por %p337, %p338
      %p340 = scmp.ne.s32.totalorder %s332, %s335
      %p341 = scmp.eq.s32.totalorder %s24, 0
      %p342 = por %p340, %p341
      %p343 = scmp.ne.s32.totalorder %s332, %s335
      %p344 = scmp.eq.s32.totalorder %s29, 1
      %p345 = por %p343, %p344
      %p346 = scmp.ne.s32.totalorder %s335, %s336
      %p347 = scmp.eq.s32.totalorder %s29, 0
      %p348 = por %p346, %p347
      %p349 = scmp.ne.s32.totalorder %s335, %s336
      %p350 = scmp.eq.s32.totalorder %s30, 1
      %p351 = por %p349, %p350
      %p353 = scmp.ne.s32.totalorder %s336, %s352
      %p354 = scmp.eq.s32.totalorder %s30, 0
      %p355 = por %p353, %p354
      %s356 = ssub.s32 %s24, %s31
      %p357 = scmp.eq.s32.totalorder %s356, 0
      %s359 = sadd.s32 %s358, 1
      %s360 = scalar_select %p357, %s358, %s359
      %p363 = pneg %p357
      %p364 = scmp.eq.s32.totalorder %s24, 1
      %p365 = por %p363, %p364
      %p366 = scmp.ne.s32.totalorder %s358, %s361
      %p367 = scmp.eq.s32.totalorder %s24, 0
      %p368 = por %p366, %p367
      %p369 = scmp.ne.s32.totalorder %s358, %s361
      %p370 = scmp.eq.s32.totalorder %s29, 1
      %p371 = por %p369, %p370
      %p372 = scmp.ne.s32.totalorder %s361, %s362
      %p373 = scmp.eq.s32.totalorder %s29, 0
      %p374 = por %p372, %p373
      %p375 = scmp.ne.s32.totalorder %s361, %s362
      %p376 = scmp.eq.s32.totalorder %s30, 1
      %p377 = por %p375, %p376
      %p379 = scmp.ne.s32.totalorder %s362, %s378
      %p380 = scmp.eq.s32.totalorder %s30, 0
      %p381 = por %p379, %p380
      %s382 = ssub.s32 %s24, %s31
      %p383 = scmp.eq.s32.totalorder %s382, 0
      %s385 = sadd.s32 %s384, 1
      %s386 = scalar_select %p383, %s384, %s385
      %p389 = pneg %p383
      %p390 = scmp.eq.s32.totalorder %s24, 1
      %p391 = por %p389, %p390
      %p392 = scmp.ne.s32.totalorder %s384, %s387
      %p393 = scmp.eq.s32.totalorder %s24, 0
      %p394 = por %p392, %p393
      %p395 = scmp.ne.s32.totalorder %s384, %s387
      %p396 = scmp.eq.s32.totalorder %s29, 1
      %p397 = por %p395, %p396
      %p398 = scmp.ne.s32.totalorder %s387, %s388
      %p399 = scmp.eq.s32.totalorder %s29, 0
      %p400 = por %p398, %p399
      %p401 = scmp.ne.s32.totalorder %s387, %s388
      %p402 = scmp.eq.s32.totalorder %s30, 1
      %p403 = por %p401, %p402
      %p405 = scmp.ne.s32.totalorder %s388, %s404
      %p406 = scmp.eq.s32.totalorder %s30, 0
      %p407 = por %p405, %p406
      %s409 = sadd.s32 %s408, 1
      %p412 = scmp.eq.s32.totalorder %s24, 1
      %p413 = scmp.ne.s32.totalorder %s408, %s410
      %p414 = scmp.eq.s32.totalorder %s24, 0
      %p415 = por %p413, %p414
      %p416 = scmp.ne.s32.totalorder %s408, %s410
      %p417 = scmp.eq.s32.totalorder %s29, 1
      %p418 = por %p416, %p417
      %p419 = scmp.ne.s32.totalorder %s410, %s411
      %p420 = scmp.eq.s32.totalorder %s29, 0
      %p421 = por %p419, %p420
      %p422 = scmp.ne.s32.totalorder %s410, %s411
      %p423 = scmp.eq.s32.totalorder %s30, 1
      %p424 = por %p422, %p423
      %p426 = scmp.ne.s32.totalorder %s411, %s425
      %p427 = scmp.eq.s32.totalorder %s30, 0
      %p428 = por %p426, %p427
      %p429 = scmp.le.s32.totalorder 1, %s24
      %p430 = scmp.lt.s32.totalorder %s24, 3
      %p431 = pnand %p429, %p430
      %p432 = pneg %p431
      // Predicated region
      $region9: #{tpu_custom_call.1} parent=5 // pred_check
        _
      $region10: #{tpu_custom_call.1} parent=5 // pred_check_branch
        %434 = sbr.rel (%p431) target = $region12
      $region11: #{tpu_custom_call.1} parent=5 // pred_region
        %s435 = ssub.s32 %s24, 1
        // Predicated region
        $region13: #{tpu_custom_call.1} parent=11 // pred_check
          %p436 = pneg %p45
        $region14: #{tpu_custom_call.1} parent=11 // pred_check_branch
          %438 = sbr.rel (%p436) target = $region16
        $region15: #{tpu_custom_call.1} parent=11 // pred_region
          _
        $region16: #{tpu_custom_call.1} parent=11 // pred_fallthru
          _
        // Predicated region
        $region17: #{tpu_custom_call.1} parent=11 // pred_check
          %p439 = pneg %p66
        $region18: #{tpu_custom_call.1} parent=11 // pred_check_branch
          %441 = sbr.rel (%p439) target = $region20
        $region19: #{tpu_custom_call.1} parent=11 // pred_region
          _
        $region20: #{tpu_custom_call.1} parent=11 // pred_fallthru
          _
        // Predicated region
        $region21: #{tpu_custom_call.1} parent=11 // pred_check
          %p442 = pneg %p87
        $region22: #{tpu_custom_call.1} parent=11 // pred_check_branch
          %444 = sbr.rel (%p442) target = $region24
        $region23: #{tpu_custom_call.1} parent=11 // pred_region
          _
        $region24: #{tpu_custom_call.1} parent=11 // pred_fallthru
          _
        // Predicated region
        $region25: #{tpu_custom_call.1} parent=11 // pred_check
          %p445 = pneg %p108
        $region26: #{tpu_custom_call.1} parent=11 // pred_check_branch
          %447 = sbr.rel (%p445) target = $region28
        $region27: #{tpu_custom_call.1} parent=11 // pred_region
          _
        $region28: #{tpu_custom_call.1} parent=11 // pred_fallthru
          _
        // Predicated region
        $region29: #{tpu_custom_call.1} parent=11 // pred_check
          %p448 = pneg %p129
        $region30: #{tpu_custom_call.1} parent=11 // pred_check_branch
          %450 = sbr.rel (%p448) target = $region32
        $region31: #{tpu_custom_call.1} parent=11 // pred_region
          _
        $region32: #{tpu_custom_call.1} parent=11 // pred_fallthru
          _
        // Predicated region
        $region33: #{tpu_custom_call.1} parent=11 // pred_check
          %p451 = pneg %p150
        $region34: #{tpu_custom_call.1} parent=11 // pred_check_branch
          %453 = sbr.rel (%p451) target = $region36
        $region35: #{tpu_custom_call.1} parent=11 // pred_region
          _
        $region36: #{tpu_custom_call.1} parent=11 // pred_fallthru
          _
        // Predicated region
        $region37: #{tpu_custom_call.1} parent=11 // pred_check
          %p454 = pneg %p171
        $region38: #{tpu_custom_call.1} parent=11 // pred_check_branch
          %456 = sbr.rel (%p454) target = $region40
        $region39: #{tpu_custom_call.1} parent=11 // pred_region
          _
        $region40: #{tpu_custom_call.1} parent=11 // pred_fallthru
          _
        // Predicated region
        $region41: #{tpu_custom_call.1} parent=11 // pred_check
          %p457 = pneg %p244
        $region42: #{tpu_custom_call.1} parent=11 // pred_check_branch
          %459 = sbr.rel (%p457) target = $region44
        $region43: #{tpu_custom_call.1} parent=11 // pred_region
          %s461 = ssub.s32 16, 16
          %462 = vsyncadd [#allocation5], %s461
          %s464 = sshll.u32 %s9, 4
          %s465 = int_to_ptr.vmem [resolvable:$true] %s464
          %467 = dma.vmem_to_smem %s465, 16, [#allocation3], [#allocation5]
        $region44: #{tpu_custom_call.1} parent=11 // pred_fallthru
          _
      $region12: #{tpu_custom_call.1} parent=5 // pred_fallthru
        _
      %p468 = scmp.lt.s32.totalorder %s24, 2
      // Predicated region
      $region45: #{tpu_custom_call.1} parent=5 // pred_check
        %p469 = pneg %p468
      $region46: #{tpu_custom_call.1} parent=5 // pred_check_branch
        %471 = sbr.rel (%p469) target = $region48
      $region47: #{tpu_custom_call.1} parent=5 // pred_region
        // Predicated region
        $region49: #{tpu_custom_call.1} parent=47 // pred_check
          %p472 = pneg %p191
        $region50: #{tpu_custom_call.1} parent=47 // pred_check_branch
          %474 = sbr.rel (%p472) target = $region52
        $region51: #{tpu_custom_call.1} parent=47 // pred_region
          %p475 = scmp.lt.s32.totalorder %s24, 1
          %s476 = scalar_select %p475, %s24, 1
          %s477 = scalar_lea.vmem %s7, %s476
        $region52: #{tpu_custom_call.1} parent=47 // pred_fallthru
          _
        // Predicated region
        $region53: #{tpu_custom_call.1} parent=47 // pred_check
          %p478 = pneg %p217
        $region54: #{tpu_custom_call.1} parent=47 // pred_check_branch
          %480 = sbr.rel (%p478) target = $region56
        $region55: #{tpu_custom_call.1} parent=47 // pred_region
          %p481 = scmp.lt.s32.totalorder %s24, 1
          %s482 = scalar_select %p481, %s24, 1
          %s483 = scalar_lea.vmem %s8, %s482
        $region56: #{tpu_custom_call.1} parent=47 // pred_fallthru
          _
        // Predicated region
        $region57: #{tpu_custom_call.1} parent=47 // pred_check
          %p484 = pneg %p264
        $region58: #{tpu_custom_call.1} parent=47 // pred_check_branch
          %486 = sbr.rel (%p484) target = $region60
        $region59: #{tpu_custom_call.1} parent=47 // pred_region
          %p487 = scmp.lt.s32.totalorder %s24, 1
          %s488 = scalar_select %p487, %s24, 1
          %s489 = smul.addr %s488, 32
          %s490 = smul.addr %s489, 4
          %s491 = scalar_lea.vmem %s10, %s490
        $region60: #{tpu_custom_call.1} parent=47 // pred_fallthru
          _
        // Predicated region
        $region61: #{tpu_custom_call.1} parent=47 // pred_check
          %p492 = pneg %p290
        $region62: #{tpu_custom_call.1} parent=47 // pred_check_branch
          %494 = sbr.rel (%p492) target = $region64
        $region63: #{tpu_custom_call.1} parent=47 // pred_region
          %p495 = scmp.lt.s32.totalorder %s24, 1
          %s496 = scalar_select %p495, %s24, 1
          %s497 = smul.addr %s496, 2
          %s498 = scalar_lea.vmem %s11, %s497
        $region64: #{tpu_custom_call.1} parent=47 // pred_fallthru
          _
        // Predicated region
        $region65: #{tpu_custom_call.1} parent=47 // pred_check
          %p499 = pneg %p316
        $region66: #{tpu_custom_call.1} parent=47 // pred_check_branch
          %501 = sbr.rel (%p499) target = $region68
        $region67: #{tpu_custom_call.1} parent=47 // pred_region
          %p502 = scmp.lt.s32.totalorder %s24, 1
          %s503 = scalar_select %p502, %s24, 1
          %s504 = smul.addr %s503, 2
          %s505 = scalar_lea.vmem %s12, %s504
        $region68: #{tpu_custom_call.1} parent=47 // pred_fallthru
          _
        // Predicated region
        $region69: #{tpu_custom_call.1} parent=47 // pred_check
          %p506 = pneg %p342
        $region70: #{tpu_custom_call.1} parent=47 // pred_check_branch
          %508 = sbr.rel (%p506) target = $region72
        $region71: #{tpu_custom_call.1} parent=47 // pred_region
          %p509 = scmp.lt.s32.totalorder %s24, 1
          %s510 = scalar_select %p509, %s24, 1
          %s511 = smul.addr %s510, 2
          %s512 = scalar_lea.vmem %s13, %s511
        $region72: #{tpu_custom_call.1} parent=47 // pred_fallthru
          _
        // Predicated region
        $region73: #{tpu_custom_call.1} parent=47 // pred_check
          %p513 = pneg %p368
        $region74: #{tpu_custom_call.1} parent=47 // pred_check_branch
          %515 = sbr.rel (%p513) target = $region76
        $region75: #{tpu_custom_call.1} parent=47 // pred_region
          %p516 = scmp.lt.s32.totalorder %s24, 1
          %s517 = scalar_select %p516, %s24, 1
          %s518 = smul.addr %s517, 32
          %s519 = smul.addr %s518, 4
          %s520 = scalar_lea.vmem %s14, %s519
        $region76: #{tpu_custom_call.1} parent=47 // pred_fallthru
          _
        // Predicated region
        $region77: #{tpu_custom_call.1} parent=47 // pred_check
          %p521 = pneg %p394
        $region78: #{tpu_custom_call.1} parent=47 // pred_check_branch
          %523 = sbr.rel (%p521) target = $region80
        $region79: #{tpu_custom_call.1} parent=47 // pred_region
          %p524 = scmp.lt.s32.totalorder %s24, 1
          %s525 = scalar_select %p524, %s24, 1
          %s526 = scalar_lea.vmem %s15, %s525
        $region80: #{tpu_custom_call.1} parent=47 // pred_fallthru
          _
      $region48: #{tpu_custom_call.1} parent=5 // pred_fallthru
        _
      %p527 = scmp.le.s32.totalorder 1, %s24
      %p528 = scmp.lt.s32.totalorder %s24, 3
      %p529 = pnand %p527, %p528
      %p530 = pneg %p529
      // Predicated region
      $region81: #{tpu_custom_call.1} parent=5 // pred_check
        _
      $region82: #{tpu_custom_call.1} parent=5 // pred_check_branch
        %532 = sbr.rel (%p529) target = $region84
      $region83: #{tpu_custom_call.1} parent=5 // pred_region
        %s533 = ssub.s32 %s24, 1
        // Predicated region
        $region85: #{tpu_custom_call.1} parent=83 // pred_check
          %p534 = pneg %p244
        $region86: #{tpu_custom_call.1} parent=83 // pred_check_branch
          %536 = sbr.rel (%p534) target = $region88
        $region87: #{tpu_custom_call.1} parent=83 // pred_region
          %537 = dma.done [#allocation5], 16
        $region88: #{tpu_custom_call.1} parent=83 // pred_fallthru
          _
        %538 = sfence
        %p539 = pneg %p45
        %p540 = pneg %p42
        %p541 = pneg %p66
        %p542 = pneg %p63
        %p543 = pneg %p87
        %p544 = pneg %p84
        %p545 = pneg %p108
        %p546 = pneg %p105
        %p547 = pneg %p129
        %p548 = pneg %p126
        %p549 = pneg %p150
        %p550 = pneg %p147
        %p551 = pneg %p171
        %p552 = pneg %p168
        %p553 = scmp.lt.s32.totalorder %s29, 1
        %s554 = scalar_select %p553, %s29, 1
        %s555 = scalar_lea.vmem %s7, %s554
        %p556 = pneg %p197
        %p557 = pneg %p194
        %p558 = scmp.lt.s32.totalorder %s29, 1
        %s559 = scalar_select %p558, %s29, 1
        %s560 = scalar_lea.vmem %s8, %s559
        %p561 = pneg %p223
        %p562 = pneg %p220
        %p563 = pneg %p244
        %p564 = pneg %p241
        %p565 = scmp.lt.s32.totalorder %s29, 1
        %s566 = scalar_select %p565, %s29, 1
        %s567 = smul.addr %s566, 32
        %s568 = smul.addr %s567, 4
        %s569 = scalar_lea.vmem %s10, %s568
        %p570 = pneg %p270
        %p571 = pneg %p267
        %p572 = scmp.lt.s32.totalorder %s29, 1
        %s573 = scalar_select %p572, %s29, 1
        %s574 = smul.addr %s573, 2
        %s575 = scalar_lea.vmem %s11, %s574
        %p576 = pneg %p296
        %p577 = pneg %p293
        %p578 = scmp.lt.s32.totalorder %s29, 1
        %s579 = scalar_select %p578, %s29, 1
        %s580 = smul.addr %s579, 2
        %s581 = scalar_lea.vmem %s12, %s580
        %p582 = pneg %p322
        %p583 = pneg %p319
        %p584 = scmp.lt.s32.totalorder %s29, 1
        %s585 = scalar_select %p584, %s29, 1
        %s586 = smul.addr %s585, 2
        %s587 = scalar_lea.vmem %s13, %s586
        %p588 = pneg %p348
        %p589 = pneg %p345
        %p590 = scmp.lt.s32.totalorder %s29, 1
        %s591 = scalar_select %p590, %s29, 1
        %s592 = smul.addr %s591, 32
        %s593 = smul.addr %s592, 4
        %s594 = scalar_lea.vmem %s14, %s593
        %p595 = pneg %p374
        %p596 = pneg %p371
        %p597 = scmp.lt.s32.totalorder %s29, 1
        %s598 = scalar_select %p597, %s29, 1
        %s599 = scalar_lea.vmem %s15, %s598
        %p600 = pneg %p400
        %p601 = pneg %p397
        %p602 = pneg %p421
        %p603 = pneg %p418
        %p604 = scmp.lt.s32.totalorder %s29, 1
        %s605 = scalar_select %p604, %s29, 1
        %s606 = scalar_lea.vmem %s7, %s605
        %p607 = scmp.lt.s32.totalorder %s29, 1
        %s608 = scalar_select %p607, %s29, 1
        %s609 = scalar_lea.vmem %s8, %s608
        %p610 = scmp.lt.s32.totalorder %s29, 1
        %s611 = scalar_select %p610, %s29, 1
        %s612 = smul.addr %s611, 32
        %s613 = smul.addr %s612, 4
        %s614 = scalar_lea.vmem %s10, %s613
        %p615 = scmp.lt.s32.totalorder %s29, 1
        %s616 = scalar_select %p615, %s29, 1
        %s617 = smul.addr %s616, 2
        %s618 = scalar_lea.vmem %s11, %s617
        %p619 = scmp.lt.s32.totalorder %s29, 1
        %s620 = scalar_select %p619, %s29, 1
        %s621 = smul.addr %s620, 2
        %s622 = scalar_lea.vmem %s12, %s621
        %p623 = scmp.lt.s32.totalorder %s29, 1
        %s624 = scalar_select %p623, %s29, 1
        %s625 = smul.addr %s624, 2
        %s626 = scalar_lea.vmem %s13, %s625
        %p627 = scmp.lt.s32.totalorder %s29, 1
        %s628 = scalar_select %p627, %s29, 1
        %s629 = smul.addr %s628, 32
        %s630 = smul.addr %s629, 4
        %s631 = scalar_lea.vmem %s14, %s630
        %p632 = scmp.lt.s32.totalorder %s29, 1
        %s633 = scalar_select %p632, %s29, 1
        %s634 = scalar_lea.vmem %s15, %s633
        %p636 = scmp.eq.s32.totalorder %s29, 0
        // Predicated region
        $region89: #{tpu_custom_call.1} parent=83 // pred_check
          %p637 = pneg %p636
        $region90: #{tpu_custom_call.1} parent=83 // pred_check_branch
          %639 = sbr.rel (%p637) target = $region92
        $region91: #{tpu_custom_call.1} parent=83 // pred_region
          %v640 = vld [vmem:[%s0] sm:$0xff]
          %v641 = vld [vmem:[%s0 + $0x8] sm:$0xff]
          %v642 = vld [vmem:[%s0 + $0x10] sm:$0xff]
          %v643 = vld [vmem:[%s0 + $0x18] sm:$0xff]
          %v644 = vld [vmem:[%s3] sm:$0x3]
          %v645 = vld [vmem:[%s4] sm:$0x1]
          %v647 = vlaneseq
          %v648 = vshrl.u32 %v647, 7
          %v649 = vsub.s32 0, %v648
          %v650 = vrot.slane %v645, %v649
          %v652 = vadd.f32 %v650, 0.0
          %654 = vset.pattern.permute.xlu0 0
          %655 = vperm.xlu0 %654, %v640
          %v656 = vpop.permute.xlu0 %655
          %659 = vset.pattern.permute.xlu0 0
          %660 = vperm.xlu0 %659, %v641
          %v661 = vpop.permute.xlu0 %660
          %664 = vset.pattern.permute.xlu0 0
          %665 = vperm.xlu0 %664, %v642
          %v666 = vpop.permute.xlu0 %665
          %669 = vset.pattern.permute.xlu0 0
          %670 = vperm.xlu0 %669, %v643
          %v671 = vpop.permute.xlu0 %670
          %v673 = vlaneseq
          %v674 = vshrl.u32 %v673, 7
          %v675 = vsub.s32 0, %v674
          %v676 = vrot.slane %v644, %v675
          %v677 = vmul.f32 %v656, %v676
          %v678 = vmul.f32 %v661, %v676
          %v679 = vmul.f32 %v666, %v676
          %v680 = vmul.f32 %v671, %v676
          %v681 = vadd.f32 %v652, %v677
          %v682 = vadd.f32 %v652, %v678
          %v683 = vadd.f32 %v652, %v679
          %v684 = vadd.f32 %v652, %v680
          %685 = vset.pattern.permute.xlu0 1
          %686 = vperm.xlu0 %685, %v640
          %v687 = vpop.permute.xlu0 %686
          %689 = vset.pattern.permute.xlu0 1
          %690 = vperm.xlu0 %689, %v641
          %v691 = vpop.permute.xlu0 %690
          %693 = vset.pattern.permute.xlu0 1
          %694 = vperm.xlu0 %693, %v642
          %v695 = vpop.permute.xlu0 %694
          %697 = vset.pattern.permute.xlu0 1
          %698 = vperm.xlu0 %697, %v643
          %v699 = vpop.permute.xlu0 %698
          %v701 = vlaneseq
          %v702 = vshrl.u32 %v701, 7
          %v703 = vsub.s32 1, %v702
          %v704 = vrot.slane %v644, %v703
          %v705 = vmul.f32 %v687, %v704
          %v706 = vmul.f32 %v691, %v704
          %v707 = vmul.f32 %v695, %v704
          %v708 = vmul.f32 %v699, %v704
          %v709 = vadd.f32 %v681, %v705
          %v710 = vadd.f32 %v682, %v706
          %v711 = vadd.f32 %v683, %v707
          %v712 = vadd.f32 %v684, %v708
          %713 = vst [vmem:[#allocation6] sm:$0xff] %v709
          %714 = vst [vmem:[#allocation6 + $0x8] sm:$0xff] %v710
          %715 = vst [vmem:[#allocation6 + $0x10] sm:$0xff] %v711
          %716 = vst [vmem:[#allocation6 + $0x18] sm:$0xff] %v712
          %v717 = vld [vmem:[%s1] sm:$0xff]
          %v718 = vld [vmem:[%s1 + $0x8] sm:$0xff]
          %v719 = vld [vmem:[%s1 + $0x10] sm:$0xff]
          %v720 = vld [vmem:[%s1 + $0x18] sm:$0xff]
          %v721 = vld [vmem:[%s1 + $0x20] sm:$0xff]
          %v722 = vld [vmem:[%s1 + $0x28] sm:$0xff]
          %v723 = vld [vmem:[%s1 + $0x30] sm:$0xff]
          %v724 = vld [vmem:[%s1 + $0x38] sm:$0xff]
          %v725 = vld [vmem:[%s1 + $0x40] sm:$0xff]
          %v726 = vld [vmem:[%s1 + $0x48] sm:$0xff]
          %v727 = vld [vmem:[%s1 + $0x50] sm:$0xff]
          %v728 = vld [vmem:[%s1 + $0x58] sm:$0xff]
          %v729 = vld [vmem:[%s1 + $0x60] sm:$0xff]
          %v730 = vld [vmem:[%s1 + $0x68] sm:$0xff]
          %v731 = vld [vmem:[%s1 + $0x70] sm:$0xff]
          %v732 = vld [vmem:[%s1 + $0x78] sm:$0xff]
          %v733 = vld [vmem:[%s1 + $0x80] sm:$0xff]
          %v734 = vld [vmem:[%s1 + $0x88] sm:$0xff]
          %v735 = vld [vmem:[%s1 + $0x90] sm:$0xff]
          %v736 = vld [vmem:[%s1 + $0x98] sm:$0xff]
          %v737 = vld [vmem:[%s1 + $0xa0] sm:$0xff]
          %v738 = vld [vmem:[%s1 + $0xa8] sm:$0xff]
          %v739 = vld [vmem:[%s1 + $0xb0] sm:$0xff]
          %v740 = vld [vmem:[%s1 + $0xb8] sm:$0xff]
          %v741 = vld [vmem:[%s1 + $0xc0] sm:$0xff]
          %v742 = vld [vmem:[%s1 + $0xc8] sm:$0xff]
          %v743 = vld [vmem:[%s1 + $0xd0] sm:$0xff]
          %v744 = vld [vmem:[%s1 + $0xd8] sm:$0xff]
          %v745 = vld [vmem:[%s1 + $0xe0] sm:$0xff]
          %v746 = vld [vmem:[%s1 + $0xe8] sm:$0xff]
          %v747 = vld [vmem:[%s1 + $0xf0] sm:$0xff]
          %v748 = vld [vmem:[%s1 + $0xf8] sm:$0xff]
          %v749 = vlaneseq
          %v750 = vand.u32 %v749, 127
          %751 = vset.pattern.permute.xlu0 0
          %752 = vperm.xlu0 %751, %v717
          %v753 = vpop.permute.xlu0 %752
          %754 = vset.pattern.permute.xlu0 0
          %755 = vperm.xlu0 %754, %v718
          %v756 = vpop.permute.xlu0 %755
          %757 = vset.pattern.permute.xlu0 0
          %758 = vperm.xlu0 %757, %v719
          %v759 = vpop.permute.xlu0 %758
          %760 = vset.pattern.permute.xlu0 0
          %761 = vperm.xlu0 %760, %v720
          %v762 = vpop.permute.xlu0 %761
          %763 = vset.pattern.permute.xlu0 0
          %764 = vperm.xlu0 %763, %v721
          %v765 = vpop.permute.xlu0 %764
          %766 = vset.pattern.permute.xlu0 0
          %767 = vperm.xlu0 %766, %v722
          %v768 = vpop.permute.xlu0 %767
          %769 = vset.pattern.permute.xlu0 0
          %770 = vperm.xlu0 %769, %v723
          %v771 = vpop.permute.xlu0 %770
          %772 = vset.pattern.permute.xlu0 0
          %773 = vperm.xlu0 %772, %v724
          %v774 = vpop.permute.xlu0 %773
          %775 = vset.pattern.permute.xlu0 0
          %776 = vperm.xlu0 %775, %v725
          %v777 = vpop.permute.xlu0 %776
          %778 = vset.pattern.permute.xlu0 0
          %779 = vperm.xlu0 %778, %v726
          %v780 = vpop.permute.xlu0 %779
          %781 = vset.pattern.permute.xlu0 0
          %782 = vperm.xlu0 %781, %v727
          %v783 = vpop.permute.xlu0 %782
          %784 = vset.pattern.permute.xlu0 0
          %785 = vperm.xlu0 %784, %v728
          %v786 = vpop.permute.xlu0 %785
          %787 = vset.pattern.permute.xlu0 0
          %788 = vperm.xlu0 %787, %v729
          %v789 = vpop.permute.xlu0 %788
          %790 = vset.pattern.permute.xlu0 0
          %791 = vperm.xlu0 %790, %v730
          %v792 = vpop.permute.xlu0 %791
          %793 = vset.pattern.permute.xlu0 0
          %794 = vperm.xlu0 %793, %v731
          %v795 = vpop.permute.xlu0 %794
          %796 = vset.pattern.permute.xlu0 0
          %797 = vperm.xlu0 %796, %v732
          %v798 = vpop.permute.xlu0 %797
          %799 = vset.pattern.permute.xlu0 0
          %800 = vperm.xlu0 %799, %v733
          %v801 = vpop.permute.xlu0 %800
          %802 = vset.pattern.permute.xlu0 0
          %803 = vperm.xlu0 %802, %v734
          %v804 = vpop.permute.xlu0 %803
          %805 = vset.pattern.permute.xlu0 0
          %806 = vperm.xlu0 %805, %v735
          %v807 = vpop.permute.xlu0 %806
          %808 = vset.pattern.permute.xlu0 0
          %809 = vperm.xlu0 %808, %v736
          %v810 = vpop.permute.xlu0 %809
          %811 = vset.pattern.permute.xlu0 0
          %812 = vperm.xlu0 %811, %v737
          %v813 = vpop.permute.xlu0 %812
          %814 = vset.pattern.permute.xlu0 0
          %815 = vperm.xlu0 %814, %v738
          %v816 = vpop.permute.xlu0 %815
          %817 = vset.pattern.permute.xlu0 0
          %818 = vperm.xlu0 %817, %v739
          %v819 = vpop.permute.xlu0 %818
          %820 = vset.pattern.permute.xlu0 0
          %821 = vperm.xlu0 %820, %v740
          %v822 = vpop.permute.xlu0 %821
          %823 = vset.pattern.permute.xlu0 0
          %824 = vperm.xlu0 %823, %v741
          %v825 = vpop.permute.xlu0 %824
          %826 = vset.pattern.permute.xlu0 0
          %827 = vperm.xlu0 %826, %v742
          %v828 = vpop.permute.xlu0 %827
          %829 = vset.pattern.permute.xlu0 0
          %830 = vperm.xlu0 %829, %v743
          %v831 = vpop.permute.xlu0 %830
          %832 = vset.pattern.permute.xlu0 0
          %833 = vperm.xlu0 %832, %v744
          %v834 = vpop.permute.xlu0 %833
          %835 = vset.pattern.permute.xlu0 0
          %836 = vperm.xlu0 %835, %v745
          %v837 = vpop.permute.xlu0 %836
          %838 = vset.pattern.permute.xlu0 0
          %839 = vperm.xlu0 %838, %v746
          %v840 = vpop.permute.xlu0 %839
          %841 = vset.pattern.permute.xlu0 0
          %842 = vperm.xlu0 %841, %v747
          %v843 = vpop.permute.xlu0 %842
          %844 = vset.pattern.permute.xlu0 0
          %845 = vperm.xlu0 %844, %v748
          %v846 = vpop.permute.xlu0 %845
          %vm847 = vcmp.eq.s32.totalorder %v753, %v750
          %vm848 = vcmp.eq.s32.totalorder %v756, %v750
          %vm849 = vcmp.eq.s32.totalorder %v759, %v750
          %vm850 = vcmp.eq.s32.totalorder %v762, %v750
          %vm851 = vcmp.eq.s32.totalorder %v765, %v750
          %vm852 = vcmp.eq.s32.totalorder %v768, %v750
          %vm853 = vcmp.eq.s32.totalorder %v771, %v750
          %vm854 = vcmp.eq.s32.totalorder %v774, %v750
          %vm855 = vcmp.eq.s32.totalorder %v777, %v750
          %vm856 = vcmp.eq.s32.totalorder %v780, %v750
          %vm857 = vcmp.eq.s32.totalorder %v783, %v750
          %vm858 = vcmp.eq.s32.totalorder %v786, %v750
          %vm859 = vcmp.eq.s32.totalorder %v789, %v750
          %vm860 = vcmp.eq.s32.totalorder %v792, %v750
          %vm861 = vcmp.eq.s32.totalorder %v795, %v750
          %vm862 = vcmp.eq.s32.totalorder %v798, %v750
          %vm863 = vcmp.eq.s32.totalorder %v801, %v750
          %vm864 = vcmp.eq.s32.totalorder %v804, %v750
          %vm865 = vcmp.eq.s32.totalorder %v807, %v750
          %vm866 = vcmp.eq.s32.totalorder %v810, %v750
          %vm867 = vcmp.eq.s32.totalorder %v813, %v750
          %vm868 = vcmp.eq.s32.totalorder %v816, %v750
          %vm869 = vcmp.eq.s32.totalorder %v819, %v750
          %vm870 = vcmp.eq.s32.totalorder %v822, %v750
          %vm871 = vcmp.eq.s32.totalorder %v825, %v750
          %vm872 = vcmp.eq.s32.totalorder %v828, %v750
          %vm873 = vcmp.eq.s32.totalorder %v831, %v750
          %vm874 = vcmp.eq.s32.totalorder %v834, %v750
          %vm875 = vcmp.eq.s32.totalorder %v837, %v750
          %vm876 = vcmp.eq.s32.totalorder %v840, %v750
          %vm877 = vcmp.eq.s32.totalorder %v843, %v750
          %vm878 = vcmp.eq.s32.totalorder %v846, %v750
          %v879 = vsel %vm847, 1, 0
          %v880 = vsel %vm848, 1, 0
          %v881 = vsel %vm849, 1, 0
          %v882 = vsel %vm850, 1, 0
          %v883 = vsel %vm851, 1, 0
          %v884 = vsel %vm852, 1, 0
          %v885 = vsel %vm853, 1, 0
          %v886 = vsel %vm854, 1, 0
          %v887 = vsel %vm855, 1, 0
          %v888 = vsel %vm856, 1, 0
          %v889 = vsel %vm857, 1, 0
          %v890 = vsel %vm858, 1, 0
          %v891 = vsel %vm859, 1, 0
          %v892 = vsel %vm860, 1, 0
          %v893 = vsel %vm861, 1, 0
          %v894 = vsel %vm862, 1, 0
          %v895 = vsel %vm863, 1, 0
          %v896 = vsel %vm864, 1, 0
          %v897 = vsel %vm865, 1, 0
          %v898 = vsel %vm866, 1, 0
          %v899 = vsel %vm867, 1, 0
          %v900 = vsel %vm868, 1, 0
          %v901 = vsel %vm869, 1, 0
          %v902 = vsel %vm870, 1, 0
          %v903 = vsel %vm871, 1, 0
          %v904 = vsel %vm872, 1, 0
          %v905 = vsel %vm873, 1, 0
          %v906 = vsel %vm874, 1, 0
          %v907 = vsel %vm875, 1, 0
          %v908 = vsel %vm876, 1, 0
          %v909 = vsel %vm877, 1, 0
          %v910 = vsel %vm878, 1, 0
          %v911 = vcvt.s32.f32 %v879
          %v912 = vcvt.s32.f32 %v880
          %v913 = vcvt.s32.f32 %v881
          %v914 = vcvt.s32.f32 %v882
          %v915 = vcvt.s32.f32 %v883
          %v916 = vcvt.s32.f32 %v884
          %v917 = vcvt.s32.f32 %v885
          %v918 = vcvt.s32.f32 %v886
          %v919 = vcvt.s32.f32 %v887
          %v920 = vcvt.s32.f32 %v888
          %v921 = vcvt.s32.f32 %v889
          %v922 = vcvt.s32.f32 %v890
          %v923 = vcvt.s32.f32 %v891
          %v924 = vcvt.s32.f32 %v892
          %v925 = vcvt.s32.f32 %v893
          %v926 = vcvt.s32.f32 %v894
          %v927 = vcvt.s32.f32 %v895
          %v928 = vcvt.s32.f32 %v896
          %v929 = vcvt.s32.f32 %v897
          %v930 = vcvt.s32.f32 %v898
          %v931 = vcvt.s32.f32 %v899
          %v932 = vcvt.s32.f32 %v900
          %v933 = vcvt.s32.f32 %v901
          %v934 = vcvt.s32.f32 %v902
          %v935 = vcvt.s32.f32 %v903
          %v936 = vcvt.s32.f32 %v904
          %v937 = vcvt.s32.f32 %v905
          %v938 = vcvt.s32.f32 %v906
          %v939 = vcvt.s32.f32 %v907
          %v940 = vcvt.s32.f32 %v908
          %v941 = vcvt.s32.f32 %v909
          %v942 = vcvt.s32.f32 %v910
          %v943 = vpack.c.bf16 %v912, %v911
          %v944 = vpack.c.bf16 %v914, %v913
          %v945 = vpack.c.bf16 %v916, %v915
          %v946 = vpack.c.bf16 %v918, %v917
          %v947 = vpack.c.bf16 %v920, %v919
          %v948 = vpack.c.bf16 %v922, %v921
          %v949 = vpack.c.bf16 %v924, %v923
          %v950 = vpack.c.bf16 %v926, %v925
          %v951 = vpack.c.bf16 %v928, %v927
          %v952 = vpack.c.bf16 %v930, %v929
          %v953 = vpack.c.bf16 %v932, %v931
          %v954 = vpack.c.bf16 %v934, %v933
          %v955 = vpack.c.bf16 %v936, %v935
          %v956 = vpack.c.bf16 %v938, %v937
          %v957 = vpack.c.bf16 %v940, %v939
          %v958 = vpack.c.bf16 %v942, %v941
          %v975 = vunpack.c.l.b16 %v943
          %v976 = vunpack.c.h.b16 %v943
          %v977 = vunpack.c.l.b16 %v944
          %v978 = vunpack.c.h.b16 %v944
          %v979 = vunpack.c.l.b16 %v945
          %v980 = vunpack.c.h.b16 %v945
          %v981 = vunpack.c.l.b16 %v946
          %v982 = vunpack.c.h.b16 %v946
          %v983 = vunpack.c.l.b16 %v947
          %v984 = vunpack.c.h.b16 %v947
          %v985 = vunpack.c.l.b16 %v948
          %v986 = vunpack.c.h.b16 %v948
          %v987 = vunpack.c.l.b16 %v949
          %v988 = vunpack.c.h.b16 %v949
          %v989 = vunpack.c.l.b16 %v950
          %v990 = vunpack.c.h.b16 %v950
          %v991 = vunpack.c.l.b16 %v951
          %v992 = vunpack.c.h.b16 %v951
          %v993 = vunpack.c.l.b16 %v952
          %v994 = vunpack.c.h.b16 %v952
          %v995 = vunpack.c.l.b16 %v953
          %v996 = vunpack.c.h.b16 %v953
          %v997 = vunpack.c.l.b16 %v954
          %v998 = vunpack.c.h.b16 %v954
          %v999 = vunpack.c.l.b16 %v955
          %v1000 = vunpack.c.h.b16 %v955
          %v1001 = vunpack.c.l.b16 %v956
          %v1002 = vunpack.c.h.b16 %v956
          %v1003 = vunpack.c.l.b16 %v957
          %v1004 = vunpack.c.h.b16 %v957
          %v1005 = vunpack.c.l.b16 %v958
          %v1006 = vunpack.c.h.b16 %v958
          %v1007 = vpack.c.b16 %v975, %v975
          %v1008 = vpack.c.b16 %v976, %v976
          %v1009 = vpack.c.b16 %v977, %v977
          %v1010 = vpack.c.b16 %v978, %v978
          %v1011 = vpack.c.b16 %v979, %v979
          %v1012 = vpack.c.b16 %v980, %v980
          %v1013 = vpack.c.b16 %v981, %v981
          %v1014 = vpack.c.b16 %v982, %v982
          %v1015 = vpack.c.b16 %v983, %v983
          %v1016 = vpack.c.b16 %v984, %v984
          %v1017 = vpack.c.b16 %v985, %v985
          %v1018 = vpack.c.b16 %v986, %v986
          %v1019 = vpack.c.b16 %v987, %v987
          %v1020 = vpack.c.b16 %v988, %v988
          %v1021 = vpack.c.b16 %v989, %v989
          %v1022 = vpack.c.b16 %v990, %v990
          %v1023 = vpack.c.b16 %v991, %v991
          %v1024 = vpack.c.b16 %v992, %v992
          %v1025 = vpack.c.b16 %v993, %v993
          %v1026 = vpack.c.b16 %v994, %v994
          %v1027 = vpack.c.b16 %v995, %v995
          %v1028 = vpack.c.b16 %v996, %v996
          %v1029 = vpack.c.b16 %v997, %v997
          %v1030 = vpack.c.b16 %v998, %v998
          %v1031 = vpack.c.b16 %v999, %v999
          %v1032 = vpack.c.b16 %v1000, %v1000
          %v1033 = vpack.c.b16 %v1001, %v1001
          %v1034 = vpack.c.b16 %v1002, %v1002
          %v1035 = vpack.c.b16 %v1003, %v1003
          %v1036 = vpack.c.b16 %v1004, %v1004
          %v1037 = vpack.c.b16 %v1005, %v1005
          %v1038 = vpack.c.b16 %v1006, %v1006
          %vm1071 = vcmask 257024
          %1072 = vst.msk [vmem:[#allocation2] sm:$0xf] %vm1071, %v1007
          %1073 = vst.msk [vmem:[#allocation2 + $0x4] sm:$0xf] %vm1071, %v1008
          %1074 = vst.msk [vmem:[#allocation2 + $0x8] sm:$0xf] %vm1071, %v1009
          %1075 = vst.msk [vmem:[#allocation2 + $0xc] sm:$0xf] %vm1071, %v1010
          %1076 = vst.msk [vmem:[#allocation2 + $0x10] sm:$0xf] %vm1071, %v1011
          %1077 = vst.msk [vmem:[#allocation2 + $0x14] sm:$0xf] %vm1071, %v1012
          %1078 = vst.msk [vmem:[#allocation2 + $0x18] sm:$0xf] %vm1071, %v1013
          %1079 = vst.msk [vmem:[#allocation2 + $0x1c] sm:$0xf] %vm1071, %v1014
          %1080 = vst.msk [vmem:[#allocation2 + $0x20] sm:$0xf] %vm1071, %v1015
          %1081 = vst.msk [vmem:[#allocation2 + $0x24] sm:$0xf] %vm1071, %v1016
          %1082 = vst.msk [vmem:[#allocation2 + $0x28] sm:$0xf] %vm1071, %v1017
          %1083 = vst.msk [vmem:[#allocation2 + $0x2c] sm:$0xf] %vm1071, %v1018
          %1084 = vst.msk [vmem:[#allocation2 + $0x30] sm:$0xf] %vm1071, %v1019
          %1085 = vst.msk [vmem:[#allocation2 + $0x34] sm:$0xf] %vm1071, %v1020
          %1086 = vst.msk [vmem:[#allocation2 + $0x38] sm:$0xf] %vm1071, %v1021
          %1087 = vst.msk [vmem:[#allocation2 + $0x3c] sm:$0xf] %vm1071, %v1022
          %1088 = vst.msk [vmem:[#allocation2 + $0x40] sm:$0xf] %vm1071, %v1023
          %1089 = vst.msk [vmem:[#allocation2 + $0x44] sm:$0xf] %vm1071, %v1024
          %1090 = vst.msk [vmem:[#allocation2 + $0x48] sm:$0xf] %vm1071, %v1025
          %1091 = vst.msk [vmem:[#allocation2 + $0x4c] sm:$0xf] %vm1071, %v1026
          %1092 = vst.msk [vmem:[#allocation2 + $0x50] sm:$0xf] %vm1071, %v1027
          %1093 = vst.msk [vmem:[#allocation2 + $0x54] sm:$0xf] %vm1071, %v1028
          %1094 = vst.msk [vmem:[#allocation2 + $0x58] sm:$0xf] %vm1071, %v1029
          %1095 = vst.msk [vmem:[#allocation2 + $0x5c] sm:$0xf] %vm1071, %v1030
          %1096 = vst.msk [vmem:[#allocation2 + $0x60] sm:$0xf] %vm1071, %v1031
          %1097 = vst.msk [vmem:[#allocation2 + $0x64] sm:$0xf] %vm1071, %v1032
          %1098 = vst.msk [vmem:[#allocation2 + $0x68] sm:$0xf] %vm1071, %v1033
          %1099 = vst.msk [vmem:[#allocation2 + $0x6c] sm:$0xf] %vm1071, %v1034
          %1100 = vst.msk [vmem:[#allocation2 + $0x70] sm:$0xf] %vm1071, %v1035
          %1101 = vst.msk [vmem:[#allocation2 + $0x74] sm:$0xf] %vm1071, %v1036
          %1102 = vst.msk [vmem:[#allocation2 + $0x78] sm:$0xf] %vm1071, %v1037
          %1103 = vst.msk [vmem:[#allocation2 + $0x7c] sm:$0xf] %vm1071, %v1038
        $region92: #{tpu_custom_call.1} parent=83 // pred_fallthru
          _
        %v1104 = vld [vmem:[#allocation6] sm:$0xff]
        %v1105 = vld [vmem:[#allocation6 + $0x8] sm:$0xff]
        %v1106 = vld [vmem:[#allocation6 + $0x10] sm:$0xff]
        %v1107 = vld [vmem:[#allocation6 + $0x18] sm:$0xff]
        %v1108 = vadd.f32 %v1104, %v1105
        %v1109 = vadd.f32 %v1108, %v1106
        %v1110 = vadd.f32 %v1109, %v1107
        %v1111 = vrot.slane %v1110, 4
        %v1112 = vadd.f32 %v1110, %v1111
        %v1113 = vrot.slane %v1112, 2
        %v1114 = vadd.f32 %v1112, %v1113
        %v1115 = vrot.slane %v1114, 1
        %v1116 = vadd.f32 %v1114, %v1115
        %v1117 = vrcp.pop 32.0
        %v1118 = vmul.f32 %v1116, %v1117
        %v1119 = vsub.f32 %v1104, %v1118
        %v1120 = vsub.f32 %v1105, %v1118
        %v1121 = vsub.f32 %v1106, %v1118
        %v1122 = vsub.f32 %v1107, %v1118
        %v1123 = vmul.f32 %v1119, %v1119
        %v1124 = vmul.f32 %v1120, %v1120
        %v1125 = vmul.f32 %v1121, %v1121
        %v1126 = vmul.f32 %v1122, %v1122
        %v1127 = vadd.f32 %v1123, %v1124
        %v1128 = vadd.f32 %v1127, %v1125
        %v1129 = vadd.f32 %v1128, %v1126
        %v1130 = vrot.slane %v1129, 4
        %v1131 = vadd.f32 %v1129, %v1130
        %v1132 = vrot.slane %v1131, 2
        %v1133 = vadd.f32 %v1131, %v1132
        %v1134 = vrot.slane %v1133, 1
        %v1135 = vadd.f32 %v1133, %v1134
        %v1136 = vmul.f32 %v1135, %v1117
        %v1137 = vadd.f32 %v1136, 1e-05
        %v1138 = vrsqrt.pop %v1137
        %v1139 = vmul.f32 %v1119, %v1138
        %v1140 = vmul.f32 %v1120, %v1138
        %v1141 = vmul.f32 %v1121, %v1138
        %v1142 = vmul.f32 %v1122, %v1138
        %v1143 = vld [vmem:[%s606] sm:$0x1]
        %v1145 = vlaneseq
        %v1146 = vshrl.u32 %v1145, 7
        %v1147 = vsub.s32 0, %v1146
        %v1148 = vrot.slane %v1143, %v1147
        %v1150 = vmul.f32 %v1139, %v1148
        %v1151 = vmul.f32 %v1140, %v1148
        %v1152 = vmul.f32 %v1141, %v1148
        %v1153 = vmul.f32 %v1142, %v1148
        %v1154 = vld [vmem:[%s609] sm:$0x1]
        %v1156 = vlaneseq
        %v1157 = vshrl.u32 %v1156, 7
        %v1158 = vsub.s32 0, %v1157
        %v1159 = vrot.slane %v1154, %v1158
        %v1161 = vadd.f32 %v1150, %v1159
        %v1162 = vadd.f32 %v1151, %v1159
        %v1163 = vadd.f32 %v1152, %v1159
        %v1164 = vadd.f32 %v1153, %v1159
        %v1165 = vmax.f32 %v1161, 0.0
        %v1166 = vmax.f32 %v1162, 0.0
        %v1167 = vmax.f32 %v1163, 0.0
        %v1168 = vmax.f32 %v1164, 0.0
        %v1169 = vld [vmem:[#allocation2] sm:$0xf]
        %v1170 = vld [vmem:[#allocation2 + $0x4] sm:$0xf]
        %v1171 = vld [vmem:[#allocation2 + $0x8] sm:$0xf]
        %v1172 = vld [vmem:[#allocation2 + $0xc] sm:$0xf]
        %v1173 = vld [vmem:[#allocation2 + $0x10] sm:$0xf]
        %v1174 = vld [vmem:[#allocation2 + $0x14] sm:$0xf]
        %v1175 = vld [vmem:[#allocation2 + $0x18] sm:$0xf]
        %v1176 = vld [vmem:[#allocation2 + $0x1c] sm:$0xf]
        %v1177 = vld [vmem:[#allocation2 + $0x20] sm:$0xf]
        %v1178 = vld [vmem:[#allocation2 + $0x24] sm:$0xf]
        %v1179 = vld [vmem:[#allocation2 + $0x28] sm:$0xf]
        %v1180 = vld [vmem:[#allocation2 + $0x2c] sm:$0xf]
        %v1181 = vld [vmem:[#allocation2 + $0x30] sm:$0xf]
        %v1182 = vld [vmem:[#allocation2 + $0x34] sm:$0xf]
        %v1183 = vld [vmem:[#allocation2 + $0x38] sm:$0xf]
        %v1184 = vld [vmem:[#allocation2 + $0x3c] sm:$0xf]
        %v1185 = vld [vmem:[#allocation2 + $0x40] sm:$0xf]
        %v1186 = vld [vmem:[#allocation2 + $0x44] sm:$0xf]
        %v1187 = vld [vmem:[#allocation2 + $0x48] sm:$0xf]
        %v1188 = vld [vmem:[#allocation2 + $0x4c] sm:$0xf]
        %v1189 = vld [vmem:[#allocation2 + $0x50] sm:$0xf]
        %v1190 = vld [vmem:[#allocation2 + $0x54] sm:$0xf]
        %v1191 = vld [vmem:[#allocation2 + $0x58] sm:$0xf]
        %v1192 = vld [vmem:[#allocation2 + $0x5c] sm:$0xf]
        %v1193 = vld [vmem:[#allocation2 + $0x60] sm:$0xf]
        %v1194 = vld [vmem:[#allocation2 + $0x64] sm:$0xf]
        %v1195 = vld [vmem:[#allocation2 + $0x68] sm:$0xf]
        %v1196 = vld [vmem:[#allocation2 + $0x6c] sm:$0xf]
        %v1197 = vld [vmem:[#allocation2 + $0x70] sm:$0xf]
        %v1198 = vld [vmem:[#allocation2 + $0x74] sm:$0xf]
        %v1199 = vld [vmem:[#allocation2 + $0x78] sm:$0xf]
        %v1200 = vld [vmem:[#allocation2 + $0x7c] sm:$0xf]
        %v1201 = vpack.c.bf16 %v1166, %v1165
        %v1202 = vpack.c.bf16 %v1168, %v1167
        %v1203 = vld [vmem:[%s2] sm:$0xff]
        %v1204 = vld [vmem:[%s2 + $0x8] sm:$0xff]
        %v1205 = vld [vmem:[%s2 + $0x10] sm:$0xff]
        %v1206 = vld [vmem:[%s2 + $0x18] sm:$0xff]
        %v1207 = vld [vmem:[%s2 + $0x20] sm:$0xff]
        %v1208 = vld [vmem:[%s2 + $0x28] sm:$0xff]
        %v1209 = vld [vmem:[%s2 + $0x30] sm:$0xff]
        %v1210 = vld [vmem:[%s2 + $0x38] sm:$0xff]
        %v1211 = vld [vmem:[%s2 + $0x40] sm:$0xff]
        %v1212 = vld [vmem:[%s2 + $0x48] sm:$0xff]
        %v1213 = vld [vmem:[%s2 + $0x50] sm:$0xff]
        %v1214 = vld [vmem:[%s2 + $0x58] sm:$0xff]
        %v1215 = vld [vmem:[%s2 + $0x60] sm:$0xff]
        %v1216 = vld [vmem:[%s2 + $0x68] sm:$0xff]
        %v1217 = vld [vmem:[%s2 + $0x70] sm:$0xff]
        %v1218 = vld [vmem:[%s2 + $0x78] sm:$0xff]
        %v1219 = vld [vmem:[%s2 + $0x80] sm:$0xff]
        %v1220 = vld [vmem:[%s2 + $0x88] sm:$0xff]
        %v1221 = vld [vmem:[%s2 + $0x90] sm:$0xff]
        %v1222 = vld [vmem:[%s2 + $0x98] sm:$0xff]
        %v1223 = vld [vmem:[%s2 + $0xa0] sm:$0xff]
        %v1224 = vld [vmem:[%s2 + $0xa8] sm:$0xff]
        %v1225 = vld [vmem:[%s2 + $0xb0] sm:$0xff]
        %v1226 = vld [vmem:[%s2 + $0xb8] sm:$0xff]
        %v1227 = vld [vmem:[%s2 + $0xc0] sm:$0xff]
        %v1228 = vld [vmem:[%s2 + $0xc8] sm:$0xff]
        %v1229 = vld [vmem:[%s2 + $0xd0] sm:$0xff]
        %v1230 = vld [vmem:[%s2 + $0xd8] sm:$0xff]
        %v1231 = vld [vmem:[%s2 + $0xe0] sm:$0xff]
        %v1232 = vld [vmem:[%s2 + $0xe8] sm:$0xff]
        %v1233 = vld [vmem:[%s2 + $0xf0] sm:$0xff]
        %v1234 = vld [vmem:[%s2 + $0xf8] sm:$0xff]
        %v1235 = vld [vmem:[%s5] sm:$0x1]
        %1237 = vset.pattern.permute.xlu0 0
        %1238 = vperm.xlu0 %1237, %v1203
        %v1239 = vpop.permute.xlu0 %1238
        %1242 = vset.pattern.permute.xlu0 0
        %1243 = vperm.xlu0 %1242, %v1204
        %v1244 = vpop.permute.xlu0 %1243
        %1247 = vset.pattern.permute.xlu0 0
        %1248 = vperm.xlu0 %1247, %v1205
        %v1249 = vpop.permute.xlu0 %1248
        %1252 = vset.pattern.permute.xlu0 0
        %1253 = vperm.xlu0 %1252, %v1206
        %v1254 = vpop.permute.xlu0 %1253
        %1257 = vset.pattern.permute.xlu0 0
        %1258 = vperm.xlu0 %1257, %v1207
        %v1259 = vpop.permute.xlu0 %1258
        %1262 = vset.pattern.permute.xlu0 0
        %1263 = vperm.xlu0 %1262, %v1208
        %v1264 = vpop.permute.xlu0 %1263
        %1267 = vset.pattern.permute.xlu0 0
        %1268 = vperm.xlu0 %1267, %v1209
        %v1269 = vpop.permute.xlu0 %1268
        %1272 = vset.pattern.permute.xlu0 0
        %1273 = vperm.xlu0 %1272, %v1210
        %v1274 = vpop.permute.xlu0 %1273
        %1277 = vset.pattern.permute.xlu0 0
        %1278 = vperm.xlu0 %1277, %v1211
        %v1279 = vpop.permute.xlu0 %1278
        %1282 = vset.pattern.permute.xlu0 0
        %1283 = vperm.xlu0 %1282, %v1212
        %v1284 = vpop.permute.xlu0 %1283
        %1287 = vset.pattern.permute.xlu0 0
        %1288 = vperm.xlu0 %1287, %v1213
        %v1289 = vpop.permute.xlu0 %1288
        %1292 = vset.pattern.permute.xlu0 0
        %1293 = vperm.xlu0 %1292, %v1214
        %v1294 = vpop.permute.xlu0 %1293
        %1297 = vset.pattern.permute.xlu0 0
        %1298 = vperm.xlu0 %1297, %v1215
        %v1299 = vpop.permute.xlu0 %1298
        %1302 = vset.pattern.permute.xlu0 0
        %1303 = vperm.xlu0 %1302, %v1216
        %v1304 = vpop.permute.xlu0 %1303
        %1307 = vset.pattern.permute.xlu0 0
        %1308 = vperm.xlu0 %1307, %v1217
        %v1309 = vpop.permute.xlu0 %1308
        %1312 = vset.pattern.permute.xlu0 0
        %1313 = vperm.xlu0 %1312, %v1218
        %v1314 = vpop.permute.xlu0 %1313
        %1317 = vset.pattern.permute.xlu0 0
        %1318 = vperm.xlu0 %1317, %v1219
        %v1319 = vpop.permute.xlu0 %1318
        %1322 = vset.pattern.permute.xlu0 0
        %1323 = vperm.xlu0 %1322, %v1220
        %v1324 = vpop.permute.xlu0 %1323
        %1327 = vset.pattern.permute.xlu0 0
        %1328 = vperm.xlu0 %1327, %v1221
        %v1329 = vpop.permute.xlu0 %1328
        %1332 = vset.pattern.permute.xlu0 0
        %1333 = vperm.xlu0 %1332, %v1222
        %v1334 = vpop.permute.xlu0 %1333
        %1337 = vset.pattern.permute.xlu0 0
        %1338 = vperm.xlu0 %1337, %v1223
        %v1339 = vpop.permute.xlu0 %1338
        %1342 = vset.pattern.permute.xlu0 0
        %1343 = vperm.xlu0 %1342, %v1224
        %v1344 = vpop.permute.xlu0 %1343
        %1347 = vset.pattern.permute.xlu0 0
        %1348 = vperm.xlu0 %1347, %v1225
        %v1349 = vpop.permute.xlu0 %1348
        %1352 = vset.pattern.permute.xlu0 0
        %1353 = vperm.xlu0 %1352, %v1226
        %v1354 = vpop.permute.xlu0 %1353
        %1357 = vset.pattern.permute.xlu0 0
        %1358 = vperm.xlu0 %1357, %v1227
        %v1359 = vpop.permute.xlu0 %1358
        %1362 = vset.pattern.permute.xlu0 0
        %1363 = vperm.xlu0 %1362, %v1228
        %v1364 = vpop.permute.xlu0 %1363
        %1367 = vset.pattern.permute.xlu0 0
        %1368 = vperm.xlu0 %1367, %v1229
        %v1369 = vpop.permute.xlu0 %1368
        %1372 = vset.pattern.permute.xlu0 0
        %1373 = vperm.xlu0 %1372, %v1230
        %v1374 = vpop.permute.xlu0 %1373
        %1377 = vset.pattern.permute.xlu0 0
        %1378 = vperm.xlu0 %1377, %v1231
        %v1379 = vpop.permute.xlu0 %1378
        %1382 = vset.pattern.permute.xlu0 0
        %1383 = vperm.xlu0 %1382, %v1232
        %v1384 = vpop.permute.xlu0 %1383
        %1387 = vset.pattern.permute.xlu0 0
        %1388 = vperm.xlu0 %1387, %v1233
        %v1389 = vpop.permute.xlu0 %1388
        %1392 = vset.pattern.permute.xlu0 0
        %1393 = vperm.xlu0 %1392, %v1234
        %v1394 = vpop.permute.xlu0 %1393
        %v1397 = vlaneseq
        %v1398 = vshrl.u32 %v1397, 7
        %v1399 = vsub.s32 0, %v1398
        %v1400 = vrot.slane %v1235, %v1399
        %v1402 = vmul.f32 %v1239, %v1400
        %v1403 = vmul.f32 %v1244, %v1400
        %v1404 = vmul.f32 %v1249, %v1400
        %v1405 = vmul.f32 %v1254, %v1400
        %v1406 = vmul.f32 %v1259, %v1400
        %v1407 = vmul.f32 %v1264, %v1400
        %v1408 = vmul.f32 %v1269, %v1400
        %v1409 = vmul.f32 %v1274, %v1400
        %v1410 = vmul.f32 %v1279, %v1400
        %v1411 = vmul.f32 %v1284, %v1400
        %v1412 = vmul.f32 %v1289, %v1400
        %v1413 = vmul.f32 %v1294, %v1400
        %v1414 = vmul.f32 %v1299, %v1400
        %v1415 = vmul.f32 %v1304, %v1400
        %v1416 = vmul.f32 %v1309, %v1400
        %v1417 = vmul.f32 %v1314, %v1400
        %v1418 = vmul.f32 %v1319, %v1400
        %v1419 = vmul.f32 %v1324, %v1400
        %v1420 = vmul.f32 %v1329, %v1400
        %v1421 = vmul.f32 %v1334, %v1400
        %v1422 = vmul.f32 %v1339, %v1400
        %v1423 = vmul.f32 %v1344, %v1400
        %v1424 = vmul.f32 %v1349, %v1400
        %v1425 = vmul.f32 %v1354, %v1400
        %v1426 = vmul.f32 %v1359, %v1400
        %v1427 = vmul.f32 %v1364, %v1400
        %v1428 = vmul.f32 %v1369, %v1400
        %v1429 = vmul.f32 %v1374, %v1400
        %v1430 = vmul.f32 %v1379, %v1400
        %v1431 = vmul.f32 %v1384, %v1400
        %v1432 = vmul.f32 %v1389, %v1400
        %v1433 = vmul.f32 %v1394, %v1400
        %v1434 = vld [vmem:[%s6] sm:$0x1]
        %v1436 = vlaneseq
        %v1437 = vshrl.u32 %v1436, 7
        %v1438 = vsub.s32 0, %v1437
        %v1439 = vrot.slane %v1434, %v1438
        %v1441 = vadd.f32 %v1402, %v1439
        %v1442 = vadd.f32 %v1403, %v1439
        %v1443 = vadd.f32 %v1404, %v1439
        %v1444 = vadd.f32 %v1405, %v1439
        %v1445 = vadd.f32 %v1406, %v1439
        %v1446 = vadd.f32 %v1407, %v1439
        %v1447 = vadd.f32 %v1408, %v1439
        %v1448 = vadd.f32 %v1409, %v1439
        %v1449 = vadd.f32 %v1410, %v1439
        %v1450 = vadd.f32 %v1411, %v1439
        %v1451 = vadd.f32 %v1412, %v1439
        %v1452 = vadd.f32 %v1413, %v1439
        %v1453 = vadd.f32 %v1414, %v1439
        %v1454 = vadd.f32 %v1415, %v1439
        %v1455 = vadd.f32 %v1416, %v1439
        %v1456 = vadd.f32 %v1417, %v1439
        %v1457 = vadd.f32 %v1418, %v1439
        %v1458 = vadd.f32 %v1419, %v1439
        %v1459 = vadd.f32 %v1420, %v1439
        %v1460 = vadd.f32 %v1421, %v1439
        %v1461 = vadd.f32 %v1422, %v1439
        %v1462 = vadd.f32 %v1423, %v1439
        %v1463 = vadd.f32 %v1424, %v1439
        %v1464 = vadd.f32 %v1425, %v1439
        %v1465 = vadd.f32 %v1426, %v1439
        %v1466 = vadd.f32 %v1427, %v1439
        %v1467 = vadd.f32 %v1428, %v1439
        %v1468 = vadd.f32 %v1429, %v1439
        %v1469 = vadd.f32 %v1430, %v1439
        %v1470 = vadd.f32 %v1431, %v1439
        %v1471 = vadd.f32 %v1432, %v1439
        %v1472 = vadd.f32 %v1433, %v1439
        %v1505 = vunpack.c.l.b16 %v1169
        %v1506 = vunpack.c.l.b16 %v1170
        %v1507 = vunpack.c.l.b16 %v1171
        %v1508 = vunpack.c.l.b16 %v1172
        %v1509 = vunpack.c.l.b16 %v1173
        %v1510 = vunpack.c.l.b16 %v1174
        %v1511 = vunpack.c.l.b16 %v1175
        %v1512 = vunpack.c.l.b16 %v1176
        %v1513 = vunpack.c.l.b16 %v1177
        %v1514 = vunpack.c.l.b16 %v1178
        %v1515 = vunpack.c.l.b16 %v1179
        %v1516 = vunpack.c.l.b16 %v1180
        %v1517 = vunpack.c.l.b16 %v1181
        %v1518 = vunpack.c.l.b16 %v1182
        %v1519 = vunpack.c.l.b16 %v1183
        %v1520 = vunpack.c.l.b16 %v1184
        %v1521 = vunpack.c.l.b16 %v1185
        %v1522 = vunpack.c.l.b16 %v1186
        %v1523 = vunpack.c.l.b16 %v1187
        %v1524 = vunpack.c.l.b16 %v1188
        %v1525 = vunpack.c.l.b16 %v1189
        %v1526 = vunpack.c.l.b16 %v1190
        %v1527 = vunpack.c.l.b16 %v1191
        %v1528 = vunpack.c.l.b16 %v1192
        %v1529 = vunpack.c.l.b16 %v1193
        %v1530 = vunpack.c.l.b16 %v1194
        %v1531 = vunpack.c.l.b16 %v1195
        %v1532 = vunpack.c.l.b16 %v1196
        %v1533 = vunpack.c.l.b16 %v1197
        %v1534 = vunpack.c.l.b16 %v1198
        %v1535 = vunpack.c.l.b16 %v1199
        %v1536 = vunpack.c.l.b16 %v1200
        %v1537 = vpack.c.b16 %v1506, %v1505
        %v1538 = vpack.c.b16 %v1508, %v1507
        %v1539 = vpack.c.b16 %v1510, %v1509
        %v1540 = vpack.c.b16 %v1512, %v1511
        %v1541 = vpack.c.b16 %v1514, %v1513
        %v1542 = vpack.c.b16 %v1516, %v1515
        %v1543 = vpack.c.b16 %v1518, %v1517
        %v1544 = vpack.c.b16 %v1520, %v1519
        %v1545 = vpack.c.b16 %v1522, %v1521
        %v1546 = vpack.c.b16 %v1524, %v1523
        %v1547 = vpack.c.b16 %v1526, %v1525
        %v1548 = vpack.c.b16 %v1528, %v1527
        %v1549 = vpack.c.b16 %v1530, %v1529
        %v1550 = vpack.c.b16 %v1532, %v1531
        %v1551 = vpack.c.b16 %v1534, %v1533
        %v1552 = vpack.c.b16 %v1536, %v1535
        %vm1553 = vcmask 261120
        %v1555 = vsel %vm1553, %v1537, 0
        %v1558 = vsel %vm1553, %v1538, 0
        %v1561 = vsel %vm1553, %v1539, 0
        %v1564 = vsel %vm1553, %v1540, 0
        %v1567 = vsel %vm1553, %v1541, 0
        %v1570 = vsel %vm1553, %v1542, 0
        %v1573 = vsel %vm1553, %v1543, 0
        %v1576 = vsel %vm1553, %v1544, 0
        %v1579 = vsel %vm1553, %v1545, 0
        %v1582 = vsel %vm1553, %v1546, 0
        %v1585 = vsel %vm1553, %v1547, 0
        %v1588 = vsel %vm1553, %v1548, 0
        %v1591 = vsel %vm1553, %v1549, 0
        %v1594 = vsel %vm1553, %v1550, 0
        %v1597 = vsel %vm1553, %v1551, 0
        %v1600 = vsel %vm1553, %v1552, 0
        %1602 = vmatprep.subr.bf16.mxu0 0
        %1603 = vmatpush1.bf16.msra.mxu0 0
        %1604 = vmatprep.subr.bf16.mxu0 0
        %1605 = vmatpush1.bf16.msra.mxu0 0
        %1606 = vmatprep.subr.bf16.mxu0 0
        %1607 = vmatpush1.bf16.msra.mxu0 0
        %1608 = vmatprep.subr.bf16.mxu0 0
        %1609 = vmatpush1.bf16.msra.mxu0 0
        %1610 = vmatprep.subr.bf16.mxu0 0
        %1611 = vmatpush1.bf16.msra.mxu0 0
        %1612 = vmatprep.subr.bf16.mxu0 0
        %1613 = vmatpush1.bf16.msra.mxu0 0
        %1614 = vmatprep.subr.bf16.mxu0 0
        %1615 = vmatpush1.bf16.msra.mxu0 %v1202
        %1616 = vmatprep.subr.bf16.mxu0 0
        %1617 = vmatpush1.bf16.msra.mxu0 %v1201
        %1618 = vmatprep.subr.bf16.mxu0 0
        %1619 = vmatpush2.bf16.msra.mxu0 0
        %1620 = vmatprep.subr.bf16.mxu0 0
        %1621 = vmatpush2.bf16.msra.mxu0 0
        %1622 = vmatprep.subr.bf16.mxu0 0
        %1623 = vmatpush2.bf16.msra.mxu0 0
        %1624 = vmatprep.subr.bf16.mxu0 0
        %1625 = vmatpush2.bf16.msra.mxu0 0
        %1626 = vmatprep.subr.bf16.mxu0 0
        %1627 = vmatpush2.bf16.msra.mxu0 0
        %1628 = vmatprep.subr.bf16.mxu0 0
        %1629 = vmatpush2.bf16.msra.mxu0 0
        %1630 = vmatprep.subr.bf16.mxu0 0
        %1631 = vmatpush2.bf16.msra.mxu0 0
        %1632 = vmatprep.subr.bf16.mxu0 0
        %1633 = vmatpush2.bf16.msra.mxu0 0
        %1634 = vmatprep.mubr.bf16.mxu0 0
        %1635 = vmatmul.mubr.bf16.gmra.mxu0 %v1555
        %v1636 = vpop.f32.mrf.mxu0
        %v1637 = vadd.f32 %v1441, %v1636
        %v1638 = vpop.f32.mrf.mxu0
        %v1639 = vpop.f32.mrf.mxu0
        %v1640 = vadd.f32 %v1442, %v1639
        %v1641 = vpop.f32.mrf.mxu0
        %1642 = vmatprep.mubr.bf16.mxu0 0
        %1643 = vmatmul.mubr.bf16.gmra.mxu0 %v1558
        %v1644 = vpop.f32.mrf.mxu0
        %v1645 = vadd.f32 %v1443, %v1644
        %v1646 = vpop.f32.mrf.mxu0
        %v1647 = vpop.f32.mrf.mxu0
        %v1648 = vadd.f32 %v1444, %v1647
        %v1649 = vpop.f32.mrf.mxu0
        %1650 = vmatprep.mubr.bf16.mxu0 0
        %1651 = vmatmul.mubr.bf16.gmra.mxu0 %v1561
        %v1652 = vpop.f32.mrf.mxu0
        %v1653 = vadd.f32 %v1445, %v1652
        %v1654 = vpop.f32.mrf.mxu0
        %v1655 = vpop.f32.mrf.mxu0
        %v1656 = vadd.f32 %v1446, %v1655
        %v1657 = vpop.f32.mrf.mxu0
        %1658 = vmatprep.mubr.bf16.mxu0 0
        %1659 = vmatmul.mubr.bf16.gmra.mxu0 %v1564
        %v1660 = vpop.f32.mrf.mxu0
        %v1661 = vadd.f32 %v1447, %v1660
        %v1662 = vpop.f32.mrf.mxu0
        %v1663 = vpop.f32.mrf.mxu0
        %v1664 = vadd.f32 %v1448, %v1663
        %v1665 = vpop.f32.mrf.mxu0
        %1666 = vmatprep.mubr.bf16.mxu0 0
        %1667 = vmatmul.mubr.bf16.gmra.mxu0 %v1567
        %v1668 = vpop.f32.mrf.mxu0
        %v1669 = vadd.f32 %v1449, %v1668
        %v1670 = vpop.f32.mrf.mxu0
        %v1671 = vpop.f32.mrf.mxu0
        %v1672 = vadd.f32 %v1450, %v1671
        %v1673 = vpop.f32.mrf.mxu0
        %1674 = vmatprep.mubr.bf16.mxu0 0
        %1675 = vmatmul.mubr.bf16.gmra.mxu0 %v1570
        %v1676 = vpop.f32.mrf.mxu0
        %v1677 = vadd.f32 %v1451, %v1676
        %v1678 = vpop.f32.mrf.mxu0
        %v1679 = vpop.f32.mrf.mxu0
        %v1680 = vadd.f32 %v1452, %v1679
        %v1681 = vpop.f32.mrf.mxu0
        %1682 = vmatprep.mubr.bf16.mxu0 0
        %1683 = vmatmul.mubr.bf16.gmra.mxu0 %v1573
        %v1684 = vpop.f32.mrf.mxu0
        %v1685 = vadd.f32 %v1453, %v1684
        %v1686 = vpop.f32.mrf.mxu0
        %v1687 = vpop.f32.mrf.mxu0
        %v1688 = vadd.f32 %v1454, %v1687
        %v1689 = vpop.f32.mrf.mxu0
        %1690 = vmatprep.mubr.bf16.mxu0 0
        %1691 = vmatmul.mubr.bf16.gmra.mxu0 %v1576
        %v1692 = vpop.f32.mrf.mxu0
        %v1693 = vadd.f32 %v1455, %v1692
        %v1694 = vpop.f32.mrf.mxu0
        %v1695 = vpop.f32.mrf.mxu0
        %v1696 = vadd.f32 %v1456, %v1695
        %v1697 = vpop.f32.mrf.mxu0
        %1698 = vmatprep.mubr.bf16.mxu0 0
        %1699 = vmatmul.mubr.bf16.gmra.mxu0 %v1579
        %v1700 = vpop.f32.mrf.mxu0
        %v1701 = vadd.f32 %v1457, %v1700
        %v1702 = vpop.f32.mrf.mxu0
        %v1703 = vpop.f32.mrf.mxu0
        %v1704 = vadd.f32 %v1458, %v1703
        %v1705 = vpop.f32.mrf.mxu0
        %1706 = vmatprep.mubr.bf16.mxu0 0
        %1707 = vmatmul.mubr.bf16.gmra.mxu0 %v1582
        %v1708 = vpop.f32.mrf.mxu0
        %v1709 = vadd.f32 %v1459, %v1708
        %v1710 = vpop.f32.mrf.mxu0
        %v1711 = vpop.f32.mrf.mxu0
        %v1712 = vadd.f32 %v1460, %v1711
        %v1713 = vpop.f32.mrf.mxu0
        %1714 = vmatprep.mubr.bf16.mxu0 0
        %1715 = vmatmul.mubr.bf16.gmra.mxu0 %v1585
        %v1716 = vpop.f32.mrf.mxu0
        %v1717 = vadd.f32 %v1461, %v1716
        %v1718 = vpop.f32.mrf.mxu0
        %v1719 = vpop.f32.mrf.mxu0
        %v1720 = vadd.f32 %v1462, %v1719
        %v1721 = vpop.f32.mrf.mxu0
        %1722 = vmatprep.mubr.bf16.mxu0 0
        %1723 = vmatmul.mubr.bf16.gmra.mxu0 %v1588
        %v1724 = vpop.f32.mrf.mxu0
        %v1725 = vadd.f32 %v1463, %v1724
        %v1726 = vpop.f32.mrf.mxu0
        %v1727 = vpop.f32.mrf.mxu0
        %v1728 = vadd.f32 %v1464, %v1727
        %v1729 = vpop.f32.mrf.mxu0
        %1730 = vmatprep.mubr.bf16.mxu0 0
        %1731 = vmatmul.mubr.bf16.gmra.mxu0 %v1591
        %v1732 = vpop.f32.mrf.mxu0
        %v1733 = vadd.f32 %v1465, %v1732
        %v1734 = vpop.f32.mrf.mxu0
        %v1735 = vpop.f32.mrf.mxu0
        %v1736 = vadd.f32 %v1466, %v1735
        %v1737 = vpop.f32.mrf.mxu0
        %1738 = vmatprep.mubr.bf16.mxu0 0
        %1739 = vmatmul.mubr.bf16.gmra.mxu0 %v1594
        %v1740 = vpop.f32.mrf.mxu0
        %v1741 = vadd.f32 %v1467, %v1740
        %v1742 = vpop.f32.mrf.mxu0
        %v1743 = vpop.f32.mrf.mxu0
        %v1744 = vadd.f32 %v1468, %v1743
        %v1745 = vpop.f32.mrf.mxu0
        %1746 = vmatprep.mubr.bf16.mxu0 0
        %1747 = vmatmul.mubr.bf16.gmra.mxu0 %v1597
        %v1748 = vpop.f32.mrf.mxu0
        %v1749 = vadd.f32 %v1469, %v1748
        %v1750 = vpop.f32.mrf.mxu0
        %v1751 = vpop.f32.mrf.mxu0
        %v1752 = vadd.f32 %v1470, %v1751
        %v1753 = vpop.f32.mrf.mxu0
        %1754 = vmatprep.mubr.bf16.mxu0 0
        %1755 = vmatmul.mubr.bf16.gmra.mxu0 %v1600
        %v1756 = vpop.f32.mrf.mxu0
        %v1757 = vadd.f32 %v1471, %v1756
        %v1758 = vpop.f32.mrf.mxu0
        %v1759 = vpop.f32.mrf.mxu0
        %v1760 = vadd.f32 %v1472, %v1759
        %v1761 = vpop.f32.mrf.mxu0
        %1762 = vdwg.mxu0
        %v1763 = vmax.f32 %v1637, 0.0
        %v1764 = vmax.f32 %v1640, 0.0
        %v1765 = vmax.f32 %v1645, 0.0
        %v1766 = vmax.f32 %v1648, 0.0
        %v1767 = vmax.f32 %v1653, 0.0
        %v1768 = vmax.f32 %v1656, 0.0
        %v1769 = vmax.f32 %v1661, 0.0
        %v1770 = vmax.f32 %v1664, 0.0
        %v1771 = vmax.f32 %v1669, 0.0
        %v1772 = vmax.f32 %v1672, 0.0
        %v1773 = vmax.f32 %v1677, 0.0
        %v1774 = vmax.f32 %v1680, 0.0
        %v1775 = vmax.f32 %v1685, 0.0
        %v1776 = vmax.f32 %v1688, 0.0
        %v1777 = vmax.f32 %v1693, 0.0
        %v1778 = vmax.f32 %v1696, 0.0
        %v1779 = vmax.f32 %v1701, 0.0
        %v1780 = vmax.f32 %v1704, 0.0
        %v1781 = vmax.f32 %v1709, 0.0
        %v1782 = vmax.f32 %v1712, 0.0
        %v1783 = vmax.f32 %v1717, 0.0
        %v1784 = vmax.f32 %v1720, 0.0
        %v1785 = vmax.f32 %v1725, 0.0
        %v1786 = vmax.f32 %v1728, 0.0
        %v1787 = vmax.f32 %v1733, 0.0
        %v1788 = vmax.f32 %v1736, 0.0
        %v1789 = vmax.f32 %v1741, 0.0
        %v1790 = vmax.f32 %v1744, 0.0
        %v1791 = vmax.f32 %v1749, 0.0
        %v1792 = vmax.f32 %v1752, 0.0
        %v1793 = vmax.f32 %v1757, 0.0
        %v1794 = vmax.f32 %v1760, 0.0
        %v1795 = vadd.f32 %v1763, 1e-07
        %v1796 = vadd.f32 %v1764, 1e-07
        %v1797 = vadd.f32 %v1765, 1e-07
        %v1798 = vadd.f32 %v1766, 1e-07
        %v1799 = vadd.f32 %v1767, 1e-07
        %v1800 = vadd.f32 %v1768, 1e-07
        %v1801 = vadd.f32 %v1769, 1e-07
        %v1802 = vadd.f32 %v1770, 1e-07
        %v1803 = vadd.f32 %v1771, 1e-07
        %v1804 = vadd.f32 %v1772, 1e-07
        %v1805 = vadd.f32 %v1773, 1e-07
        %v1806 = vadd.f32 %v1774, 1e-07
        %v1807 = vadd.f32 %v1775, 1e-07
        %v1808 = vadd.f32 %v1776, 1e-07
        %v1809 = vadd.f32 %v1777, 1e-07
        %v1810 = vadd.f32 %v1778, 1e-07
        %v1811 = vadd.f32 %v1779, 1e-07
        %v1812 = vadd.f32 %v1780, 1e-07
        %v1813 = vadd.f32 %v1781, 1e-07
        %v1814 = vadd.f32 %v1782, 1e-07
        %v1815 = vadd.f32 %v1783, 1e-07
        %v1816 = vadd.f32 %v1784, 1e-07
        %v1817 = vadd.f32 %v1785, 1e-07
        %v1818 = vadd.f32 %v1786, 1e-07
        %v1819 = vadd.f32 %v1787, 1e-07
        %v1820 = vadd.f32 %v1788, 1e-07
        %v1821 = vadd.f32 %v1789, 1e-07
        %v1822 = vadd.f32 %v1790, 1e-07
        %v1823 = vadd.f32 %v1791, 1e-07
        %v1824 = vadd.f32 %v1792, 1e-07
        %v1825 = vadd.f32 %v1793, 1e-07
        %v1826 = vadd.f32 %v1794, 1e-07
        %s1827 = sld [smem:[#allocation3 + %s29]]
        %v1828 = vstv %s1827
        %v1829 = vmul.f32 %v1795, %v1828
        %v1830 = vmul.f32 %v1796, %v1828
        %v1831 = vmul.f32 %v1797, %v1828
        %v1832 = vmul.f32 %v1798, %v1828
        %v1833 = vmul.f32 %v1799, %v1828
        %v1834 = vmul.f32 %v1800, %v1828
        %v1835 = vmul.f32 %v1801, %v1828
        %v1836 = vmul.f32 %v1802, %v1828
        %v1837 = vmul.f32 %v1803, %v1828
        %v1838 = vmul.f32 %v1804, %v1828
        %v1839 = vmul.f32 %v1805, %v1828
        %v1840 = vmul.f32 %v1806, %v1828
        %v1841 = vmul.f32 %v1807, %v1828
        %v1842 = vmul.f32 %v1808, %v1828
        %v1843 = vmul.f32 %v1809, %v1828
        %v1844 = vmul.f32 %v1810, %v1828
        %v1845 = vmul.f32 %v1811, %v1828
        %v1846 = vmul.f32 %v1812, %v1828
        %v1847 = vmul.f32 %v1813, %v1828
        %v1848 = vmul.f32 %v1814, %v1828
        %v1849 = vmul.f32 %v1815, %v1828
        %v1850 = vmul.f32 %v1816, %v1828
        %v1851 = vmul.f32 %v1817, %v1828
        %v1852 = vmul.f32 %v1818, %v1828
        %v1853 = vmul.f32 %v1819, %v1828
        %v1854 = vmul.f32 %v1820, %v1828
        %v1855 = vmul.f32 %v1821, %v1828
        %v1856 = vmul.f32 %v1822, %v1828
        %v1857 = vmul.f32 %v1823, %v1828
        %v1858 = vmul.f32 %v1824, %v1828
        %v1859 = vmul.f32 %v1825, %v1828
        %v1860 = vmul.f32 %v1826, %v1828
        %v1861 = vrot.slane %v1829, 4
        %v1862 = vmax.f32 %v1829, %v1861
        %v1863 = vrot.slane %v1862, 2
        %v1864 = vmax.f32 %v1862, %v1863
        %v1865 = vrot.slane %v1864, 1
        %v1866 = vmax.f32 %v1864, %v1865
        %v1867 = vrot.slane %v1830, 4
        %v1868 = vmax.f32 %v1830, %v1867
        %v1869 = vrot.slane %v1868, 2
        %v1870 = vmax.f32 %v1868, %v1869
        %v1871 = vrot.slane %v1870, 1
        %v1872 = vmax.f32 %v1870, %v1871
        %v1873 = vrot.slane %v1831, 4
        %v1874 = vmax.f32 %v1831, %v1873
        %v1875 = vrot.slane %v1874, 2
        %v1876 = vmax.f32 %v1874, %v1875
        %v1877 = vrot.slane %v1876, 1
        %v1878 = vmax.f32 %v1876, %v1877
        %v1879 = vrot.slane %v1832, 4
        %v1880 = vmax.f32 %v1832, %v1879
        %v1881 = vrot.slane %v1880, 2
        %v1882 = vmax.f32 %v1880, %v1881
        %v1883 = vrot.slane %v1882, 1
        %v1884 = vmax.f32 %v1882, %v1883
        %v1885 = vrot.slane %v1833, 4
        %v1886 = vmax.f32 %v1833, %v1885
        %v1887 = vrot.slane %v1886, 2
        %v1888 = vmax.f32 %v1886, %v1887
        %v1889 = vrot.slane %v1888, 1
        %v1890 = vmax.f32 %v1888, %v1889
        %v1891 = vrot.slane %v1834, 4
        %v1892 = vmax.f32 %v1834, %v1891
        %v1893 = vrot.slane %v1892, 2
        %v1894 = vmax.f32 %v1892, %v1893
        %v1895 = vrot.slane %v1894, 1
        %v1896 = vmax.f32 %v1894, %v1895
        %v1897 = vrot.slane %v1835, 4
        %v1898 = vmax.f32 %v1835, %v1897
        %v1899 = vrot.slane %v1898, 2
        %v1900 = vmax.f32 %v1898, %v1899
        %v1901 = vrot.slane %v1900, 1
        %v1902 = vmax.f32 %v1900, %v1901
        %v1903 = vrot.slane %v1836, 4
        %v1904 = vmax.f32 %v1836, %v1903
        %v1905 = vrot.slane %v1904, 2
        %v1906 = vmax.f32 %v1904, %v1905
        %v1907 = vrot.slane %v1906, 1
        %v1908 = vmax.f32 %v1906, %v1907
        %v1909 = vrot.slane %v1837, 4
        %v1910 = vmax.f32 %v1837, %v1909
        %v1911 = vrot.slane %v1910, 2
        %v1912 = vmax.f32 %v1910, %v1911
        %v1913 = vrot.slane %v1912, 1
        %v1914 = vmax.f32 %v1912, %v1913
        %v1915 = vrot.slane %v1838, 4
        %v1916 = vmax.f32 %v1838, %v1915
        %v1917 = vrot.slane %v1916, 2
        %v1918 = vmax.f32 %v1916, %v1917
        %v1919 = vrot.slane %v1918, 1
        %v1920 = vmax.f32 %v1918, %v1919
        %v1921 = vrot.slane %v1839, 4
        %v1922 = vmax.f32 %v1839, %v1921
        %v1923 = vrot.slane %v1922, 2
        %v1924 = vmax.f32 %v1922, %v1923
        %v1925 = vrot.slane %v1924, 1
        %v1926 = vmax.f32 %v1924, %v1925
        %v1927 = vrot.slane %v1840, 4
        %v1928 = vmax.f32 %v1840, %v1927
        %v1929 = vrot.slane %v1928, 2
        %v1930 = vmax.f32 %v1928, %v1929
        %v1931 = vrot.slane %v1930, 1
        %v1932 = vmax.f32 %v1930, %v1931
        %v1933 = vrot.slane %v1841, 4
        %v1934 = vmax.f32 %v1841, %v1933
        %v1935 = vrot.slane %v1934, 2
        %v1936 = vmax.f32 %v1934, %v1935
        %v1937 = vrot.slane %v1936, 1
        %v1938 = vmax.f32 %v1936, %v1937
        %v1939 = vrot.slane %v1842, 4
        %v1940 = vmax.f32 %v1842, %v1939
        %v1941 = vrot.slane %v1940, 2
        %v1942 = vmax.f32 %v1940, %v1941
        %v1943 = vrot.slane %v1942, 1
        %v1944 = vmax.f32 %v1942, %v1943
        %v1945 = vrot.slane %v1843, 4
        %v1946 = vmax.f32 %v1843, %v1945
        %v1947 = vrot.slane %v1946, 2
        %v1948 = vmax.f32 %v1946, %v1947
        %v1949 = vrot.slane %v1948, 1
        %v1950 = vmax.f32 %v1948, %v1949
        %v1951 = vrot.slane %v1844, 4
        %v1952 = vmax.f32 %v1844, %v1951
        %v1953 = vrot.slane %v1952, 2
        %v1954 = vmax.f32 %v1952, %v1953
        %v1955 = vrot.slane %v1954, 1
        %v1956 = vmax.f32 %v1954, %v1955
        %v1957 = vrot.slane %v1845, 4
        %v1958 = vmax.f32 %v1845, %v1957
        %v1959 = vrot.slane %v1958, 2
        %v1960 = vmax.f32 %v1958, %v1959
        %v1961 = vrot.slane %v1960, 1
        %v1962 = vmax.f32 %v1960, %v1961
        %v1963 = vrot.slane %v1846, 4
        %v1964 = vmax.f32 %v1846, %v1963
        %v1965 = vrot.slane %v1964, 2
        %v1966 = vmax.f32 %v1964, %v1965
        %v1967 = vrot.slane %v1966, 1
        %v1968 = vmax.f32 %v1966, %v1967
        %v1969 = vrot.slane %v1847, 4
        %v1970 = vmax.f32 %v1847, %v1969
        %v1971 = vrot.slane %v1970, 2
        %v1972 = vmax.f32 %v1970, %v1971
        %v1973 = vrot.slane %v1972, 1
        %v1974 = vmax.f32 %v1972, %v1973
        %v1975 = vrot.slane %v1848, 4
        %v1976 = vmax.f32 %v1848, %v1975
        %v1977 = vrot.slane %v1976, 2
        %v1978 = vmax.f32 %v1976, %v1977
        %v1979 = vrot.slane %v1978, 1
        %v1980 = vmax.f32 %v1978, %v1979
        %v1981 = vrot.slane %v1849, 4
        %v1982 = vmax.f32 %v1849, %v1981
        %v1983 = vrot.slane %v1982, 2
        %v1984 = vmax.f32 %v1982, %v1983
        %v1985 = vrot.slane %v1984, 1
        %v1986 = vmax.f32 %v1984, %v1985
        %v1987 = vrot.slane %v1850, 4
        %v1988 = vmax.f32 %v1850, %v1987
        %v1989 = vrot.slane %v1988, 2
        %v1990 = vmax.f32 %v1988, %v1989
        %v1991 = vrot.slane %v1990, 1
        %v1992 = vmax.f32 %v1990, %v1991
        %v1993 = vrot.slane %v1851, 4
        %v1994 = vmax.f32 %v1851, %v1993
        %v1995 = vrot.slane %v1994, 2
        %v1996 = vmax.f32 %v1994, %v1995
        %v1997 = vrot.slane %v1996, 1
        %v1998 = vmax.f32 %v1996, %v1997
        %v1999 = vrot.slane %v1852, 4
        %v2000 = vmax.f32 %v1852, %v1999
        %v2001 = vrot.slane %v2000, 2
        %v2002 = vmax.f32 %v2000, %v2001
        %v2003 = vrot.slane %v2002, 1
        %v2004 = vmax.f32 %v2002, %v2003
        %v2005 = vrot.slane %v1853, 4
        %v2006 = vmax.f32 %v1853, %v2005
        %v2007 = vrot.slane %v2006, 2
        %v2008 = vmax.f32 %v2006, %v2007
        %v2009 = vrot.slane %v2008, 1
        %v2010 = vmax.f32 %v2008, %v2009
        %v2011 = vrot.slane %v1854, 4
        %v2012 = vmax.f32 %v1854, %v2011
        %v2013 = vrot.slane %v2012, 2
        %v2014 = vmax.f32 %v2012, %v2013
        %v2015 = vrot.slane %v2014, 1
        %v2016 = vmax.f32 %v2014, %v2015
        %v2017 = vrot.slane %v1855, 4
        %v2018 = vmax.f32 %v1855, %v2017
        %v2019 = vrot.slane %v2018, 2
        %v2020 = vmax.f32 %v2018, %v2019
        %v2021 = vrot.slane %v2020, 1
        %v2022 = vmax.f32 %v2020, %v2021
        %v2023 = vrot.slane %v1856, 4
        %v2024 = vmax.f32 %v1856, %v2023
        %v2025 = vrot.slane %v2024, 2
        %v2026 = vmax.f32 %v2024, %v2025
        %v2027 = vrot.slane %v2026, 1
        %v2028 = vmax.f32 %v2026, %v2027
        %v2029 = vrot.slane %v1857, 4
        %v2030 = vmax.f32 %v1857, %v2029
        %v2031 = vrot.slane %v2030, 2
        %v2032 = vmax.f32 %v2030, %v2031
        %v2033 = vrot.slane %v2032, 1
        %v2034 = vmax.f32 %v2032, %v2033
        %v2035 = vrot.slane %v1858, 4
        %v2036 = vmax.f32 %v1858, %v2035
        %v2037 = vrot.slane %v2036, 2
        %v2038 = vmax.f32 %v2036, %v2037
        %v2039 = vrot.slane %v2038, 1
        %v2040 = vmax.f32 %v2038, %v2039
        %v2041 = vrot.slane %v1859, 4
        %v2042 = vmax.f32 %v1859, %v2041
        %v2043 = vrot.slane %v2042, 2
        %v2044 = vmax.f32 %v2042, %v2043
        %v2045 = vrot.slane %v2044, 1
        %v2046 = vmax.f32 %v2044, %v2045
        %v2047 = vrot.slane %v1860, 4
        %v2048 = vmax.f32 %v1860, %v2047
        %v2049 = vrot.slane %v2048, 2
        %v2050 = vmax.f32 %v2048, %v2049
        %v2051 = vrot.slane %v2050, 1
        %v2052 = vmax.f32 %v2050, %v2051
        %v2053 = vsub.f32 %v1829, %v1866
        %v2054 = vsub.f32 %v1830, %v1872
        %v2055 = vsub.f32 %v1831, %v1878
        %v2056 = vsub.f32 %v1832, %v1884
        %v2057 = vsub.f32 %v1833, %v1890
        %v2058 = vsub.f32 %v1834, %v1896
        %v2059 = vsub.f32 %v1835, %v1902
        %v2060 = vsub.f32 %v1836, %v1908
        %v2061 = vsub.f32 %v1837, %v1914
        %v2062 = vsub.f32 %v1838, %v1920
        %v2063 = vsub.f32 %v1839, %v1926
        %v2064 = vsub.f32 %v1840, %v1932
        %v2065 = vsub.f32 %v1841, %v1938
        %v2066 = vsub.f32 %v1842, %v1944
        %v2067 = vsub.f32 %v1843, %v1950
        %v2068 = vsub.f32 %v1844, %v1956
        %v2069 = vsub.f32 %v1845, %v1962
        %v2070 = vsub.f32 %v1846, %v1968
        %v2071 = vsub.f32 %v1847, %v1974
        %v2072 = vsub.f32 %v1848, %v1980
        %v2073 = vsub.f32 %v1849, %v1986
        %v2074 = vsub.f32 %v1850, %v1992
        %v2075 = vsub.f32 %v1851, %v1998
        %v2076 = vsub.f32 %v1852, %v2004
        %v2077 = vsub.f32 %v1853, %v2010
        %v2078 = vsub.f32 %v1854, %v2016
        %v2079 = vsub.f32 %v1855, %v2022
        %v2080 = vsub.f32 %v1856, %v2028
        %v2081 = vsub.f32 %v1857, %v2034
        %v2082 = vsub.f32 %v1858, %v2040
        %v2083 = vsub.f32 %v1859, %v2046
        %v2084 = vsub.f32 %v1860, %v2052
        %v2085 = vmul.f32 %v2053, 1.442695
        %v2086 = vpow.pop %v2085
        %v2087 = vmul.f32 %v2054, 1.442695
        %v2088 = vpow.pop %v2087
        %v2089 = vmul.f32 %v2055, 1.442695
        %v2090 = vpow.pop %v2089
        %v2091 = vmul.f32 %v2056, 1.442695
        %v2092 = vpow.pop %v2091
        %v2093 = vmul.f32 %v2057, 1.442695
        %v2094 = vpow.pop %v2093
        %v2095 = vmul.f32 %v2058, 1.442695
        %v2096 = vpow.pop %v2095
        %v2097 = vmul.f32 %v2059, 1.442695
        %v2098 = vpow.pop %v2097
        %v2099 = vmul.f32 %v2060, 1.442695
        %v2100 = vpow.pop %v2099
        %v2101 = vmul.f32 %v2061, 1.442695
        %v2102 = vpow.pop %v2101
        %v2103 = vmul.f32 %v2062, 1.442695
        %v2104 = vpow.pop %v2103
        %v2105 = vmul.f32 %v2063, 1.442695
        %v2106 = vpow.pop %v2105
        %v2107 = vmul.f32 %v2064, 1.442695
        %v2108 = vpow.pop %v2107
        %v2109 = vmul.f32 %v2065, 1.442695
        %v2110 = vpow.pop %v2109
        %v2111 = vmul.f32 %v2066, 1.442695
        %v2112 = vpow.pop %v2111
        %v2113 = vmul.f32 %v2067, 1.442695
        %v2114 = vpow.pop %v2113
        %v2115 = vmul.f32 %v2068, 1.442695
        %v2116 = vpow.pop %v2115
        %v2117 = vmul.f32 %v2069, 1.442695
        %v2118 = vpow.pop %v2117
        %v2119 = vmul.f32 %v2070, 1.442695
        %v2120 = vpow.pop %v2119
        %v2121 = vmul.f32 %v2071, 1.442695
        %v2122 = vpow.pop %v2121
        %v2123 = vmul.f32 %v2072, 1.442695
        %v2124 = vpow.pop %v2123
        %v2125 = vmul.f32 %v2073, 1.442695
        %v2126 = vpow.pop %v2125
        %v2127 = vmul.f32 %v2074, 1.442695
        %v2128 = vpow.pop %v2127
        %v2129 = vmul.f32 %v2075, 1.442695
        %v2130 = vpow.pop %v2129
        %v2131 = vmul.f32 %v2076, 1.442695
        %v2132 = vpow.pop %v2131
        %v2133 = vmul.f32 %v2077, 1.442695
        %v2134 = vpow.pop %v2133
        %v2135 = vmul.f32 %v2078, 1.442695
        %v2136 = vpow.pop %v2135
        %v2137 = vmul.f32 %v2079, 1.442695
        %v2138 = vpow.pop %v2137
        %v2139 = vmul.f32 %v2080, 1.442695
        %v2140 = vpow.pop %v2139
        %v2141 = vmul.f32 %v2081, 1.442695
        %v2142 = vpow.pop %v2141
        %v2143 = vmul.f32 %v2082, 1.442695
        %v2144 = vpow.pop %v2143
        %v2145 = vmul.f32 %v2083, 1.442695
        %v2146 = vpow.pop %v2145
        %v2147 = vmul.f32 %v2084, 1.442695
        %v2148 = vpow.pop %v2147
        %v2149 = vmul.f32 %v2086, %v1795
        %v2150 = vmul.f32 %v2088, %v1796
        %v2151 = vmul.f32 %v2090, %v1797
        %v2152 = vmul.f32 %v2092, %v1798
        %v2153 = vmul.f32 %v2094, %v1799
        %v2154 = vmul.f32 %v2096, %v1800
        %v2155 = vmul.f32 %v2098, %v1801
        %v2156 = vmul.f32 %v2100, %v1802
        %v2157 = vmul.f32 %v2102, %v1803
        %v2158 = vmul.f32 %v2104, %v1804
        %v2159 = vmul.f32 %v2106, %v1805
        %v2160 = vmul.f32 %v2108, %v1806
        %v2161 = vmul.f32 %v2110, %v1807
        %v2162 = vmul.f32 %v2112, %v1808
        %v2163 = vmul.f32 %v2114, %v1809
        %v2164 = vmul.f32 %v2116, %v1810
        %v2165 = vmul.f32 %v2118, %v1811
        %v2166 = vmul.f32 %v2120, %v1812
        %v2167 = vmul.f32 %v2122, %v1813
        %v2168 = vmul.f32 %v2124, %v1814
        %v2169 = vmul.f32 %v2126, %v1815
        %v2170 = vmul.f32 %v2128, %v1816
        %v2171 = vmul.f32 %v2130, %v1817
        %v2172 = vmul.f32 %v2132, %v1818
        %v2173 = vmul.f32 %v2134, %v1819
        %v2174 = vmul.f32 %v2136, %v1820
        %v2175 = vmul.f32 %v2138, %v1821
        %v2176 = vmul.f32 %v2140, %v1822
        %v2177 = vmul.f32 %v2142, %v1823
        %v2178 = vmul.f32 %v2144, %v1824
        %v2179 = vmul.f32 %v2146, %v1825
        %v2180 = vmul.f32 %v2148, %v1826
        %v2181 = vrot.slane %v2149, 4
        %v2182 = vadd.f32 %v2149, %v2181
        %v2183 = vrot.slane %v2182, 2
        %v2184 = vadd.f32 %v2182, %v2183
        %v2185 = vrot.slane %v2184, 1
        %v2186 = vadd.f32 %v2184, %v2185
        %v2187 = vrot.slane %v2150, 4
        %v2188 = vadd.f32 %v2150, %v2187
        %v2189 = vrot.slane %v2188, 2
        %v2190 = vadd.f32 %v2188, %v2189
        %v2191 = vrot.slane %v2190, 1
        %v2192 = vadd.f32 %v2190, %v2191
        %v2193 = vrot.slane %v2151, 4
        %v2194 = vadd.f32 %v2151, %v2193
        %v2195 = vrot.slane %v2194, 2
        %v2196 = vadd.f32 %v2194, %v2195
        %v2197 = vrot.slane %v2196, 1
        %v2198 = vadd.f32 %v2196, %v2197
        %v2199 = vrot.slane %v2152, 4
        %v2200 = vadd.f32 %v2152, %v2199
        %v2201 = vrot.slane %v2200, 2
        %v2202 = vadd.f32 %v2200, %v2201
        %v2203 = vrot.slane %v2202, 1
        %v2204 = vadd.f32 %v2202, %v2203
        %v2205 = vrot.slane %v2153, 4
        %v2206 = vadd.f32 %v2153, %v2205
        %v2207 = vrot.slane %v2206, 2
        %v2208 = vadd.f32 %v2206, %v2207
        %v2209 = vrot.slane %v2208, 1
        %v2210 = vadd.f32 %v2208, %v2209
        %v2211 = vrot.slane %v2154, 4
        %v2212 = vadd.f32 %v2154, %v2211
        %v2213 = vrot.slane %v2212, 2
        %v2214 = vadd.f32 %v2212, %v2213
        %v2215 = vrot.slane %v2214, 1
        %v2216 = vadd.f32 %v2214, %v2215
        %v2217 = vrot.slane %v2155, 4
        %v2218 = vadd.f32 %v2155, %v2217
        %v2219 = vrot.slane %v2218, 2
        %v2220 = vadd.f32 %v2218, %v2219
        %v2221 = vrot.slane %v2220, 1
        %v2222 = vadd.f32 %v2220, %v2221
        %v2223 = vrot.slane %v2156, 4
        %v2224 = vadd.f32 %v2156, %v2223
        %v2225 = vrot.slane %v2224, 2
        %v2226 = vadd.f32 %v2224, %v2225
        %v2227 = vrot.slane %v2226, 1
        %v2228 = vadd.f32 %v2226, %v2227
        %v2229 = vrot.slane %v2157, 4
        %v2230 = vadd.f32 %v2157, %v2229
        %v2231 = vrot.slane %v2230, 2
        %v2232 = vadd.f32 %v2230, %v2231
        %v2233 = vrot.slane %v2232, 1
        %v2234 = vadd.f32 %v2232, %v2233
        %v2235 = vrot.slane %v2158, 4
        %v2236 = vadd.f32 %v2158, %v2235
        %v2237 = vrot.slane %v2236, 2
        %v2238 = vadd.f32 %v2236, %v2237
        %v2239 = vrot.slane %v2238, 1
        %v2240 = vadd.f32 %v2238, %v2239
        %v2241 = vrot.slane %v2159, 4
        %v2242 = vadd.f32 %v2159, %v2241
        %v2243 = vrot.slane %v2242, 2
        %v2244 = vadd.f32 %v2242, %v2243
        %v2245 = vrot.slane %v2244, 1
        %v2246 = vadd.f32 %v2244, %v2245
        %v2247 = vrot.slane %v2160, 4
        %v2248 = vadd.f32 %v2160, %v2247
        %v2249 = vrot.slane %v2248, 2
        %v2250 = vadd.f32 %v2248, %v2249
        %v2251 = vrot.slane %v2250, 1
        %v2252 = vadd.f32 %v2250, %v2251
        %v2253 = vrot.slane %v2161, 4
        %v2254 = vadd.f32 %v2161, %v2253
        %v2255 = vrot.slane %v2254, 2
        %v2256 = vadd.f32 %v2254, %v2255
        %v2257 = vrot.slane %v2256, 1
        %v2258 = vadd.f32 %v2256, %v2257
        %v2259 = vrot.slane %v2162, 4
        %v2260 = vadd.f32 %v2162, %v2259
        %v2261 = vrot.slane %v2260, 2
        %v2262 = vadd.f32 %v2260, %v2261
        %v2263 = vrot.slane %v2262, 1
        %v2264 = vadd.f32 %v2262, %v2263
        %v2265 = vrot.slane %v2163, 4
        %v2266 = vadd.f32 %v2163, %v2265
        %v2267 = vrot.slane %v2266, 2
        %v2268 = vadd.f32 %v2266, %v2267
        %v2269 = vrot.slane %v2268, 1
        %v2270 = vadd.f32 %v2268, %v2269
        %v2271 = vrot.slane %v2164, 4
        %v2272 = vadd.f32 %v2164, %v2271
        %v2273 = vrot.slane %v2272, 2
        %v2274 = vadd.f32 %v2272, %v2273
        %v2275 = vrot.slane %v2274, 1
        %v2276 = vadd.f32 %v2274, %v2275
        %v2277 = vrot.slane %v2165, 4
        %v2278 = vadd.f32 %v2165, %v2277
        %v2279 = vrot.slane %v2278, 2
        %v2280 = vadd.f32 %v2278, %v2279
        %v2281 = vrot.slane %v2280, 1
        %v2282 = vadd.f32 %v2280, %v2281
        %v2283 = vrot.slane %v2166, 4
        %v2284 = vadd.f32 %v2166, %v2283
        %v2285 = vrot.slane %v2284, 2
        %v2286 = vadd.f32 %v2284, %v2285
        %v2287 = vrot.slane %v2286, 1
        %v2288 = vadd.f32 %v2286, %v2287
        %v2289 = vrot.slane %v2167, 4
        %v2290 = vadd.f32 %v2167, %v2289
        %v2291 = vrot.slane %v2290, 2
        %v2292 = vadd.f32 %v2290, %v2291
        %v2293 = vrot.slane %v2292, 1
        %v2294 = vadd.f32 %v2292, %v2293
        %v2295 = vrot.slane %v2168, 4
        %v2296 = vadd.f32 %v2168, %v2295
        %v2297 = vrot.slane %v2296, 2
        %v2298 = vadd.f32 %v2296, %v2297
        %v2299 = vrot.slane %v2298, 1
        %v2300 = vadd.f32 %v2298, %v2299
        %v2301 = vrot.slane %v2169, 4
        %v2302 = vadd.f32 %v2169, %v2301
        %v2303 = vrot.slane %v2302, 2
        %v2304 = vadd.f32 %v2302, %v2303
        %v2305 = vrot.slane %v2304, 1
        %v2306 = vadd.f32 %v2304, %v2305
        %v2307 = vrot.slane %v2170, 4
        %v2308 = vadd.f32 %v2170, %v2307
        %v2309 = vrot.slane %v2308, 2
        %v2310 = vadd.f32 %v2308, %v2309
        %v2311 = vrot.slane %v2310, 1
        %v2312 = vadd.f32 %v2310, %v2311
        %v2313 = vrot.slane %v2171, 4
        %v2314 = vadd.f32 %v2171, %v2313
        %v2315 = vrot.slane %v2314, 2
        %v2316 = vadd.f32 %v2314, %v2315
        %v2317 = vrot.slane %v2316, 1
        %v2318 = vadd.f32 %v2316, %v2317
        %v2319 = vrot.slane %v2172, 4
        %v2320 = vadd.f32 %v2172, %v2319
        %v2321 = vrot.slane %v2320, 2
        %v2322 = vadd.f32 %v2320, %v2321
        %v2323 = vrot.slane %v2322, 1
        %v2324 = vadd.f32 %v2322, %v2323
        %v2325 = vrot.slane %v2173, 4
        %v2326 = vadd.f32 %v2173, %v2325
        %v2327 = vrot.slane %v2326, 2
        %v2328 = vadd.f32 %v2326, %v2327
        %v2329 = vrot.slane %v2328, 1
        %v2330 = vadd.f32 %v2328, %v2329
        %v2331 = vrot.slane %v2174, 4
        %v2332 = vadd.f32 %v2174, %v2331
        %v2333 = vrot.slane %v2332, 2
        %v2334 = vadd.f32 %v2332, %v2333
        %v2335 = vrot.slane %v2334, 1
        %v2336 = vadd.f32 %v2334, %v2335
        %v2337 = vrot.slane %v2175, 4
        %v2338 = vadd.f32 %v2175, %v2337
        %v2339 = vrot.slane %v2338, 2
        %v2340 = vadd.f32 %v2338, %v2339
        %v2341 = vrot.slane %v2340, 1
        %v2342 = vadd.f32 %v2340, %v2341
        %v2343 = vrot.slane %v2176, 4
        %v2344 = vadd.f32 %v2176, %v2343
        %v2345 = vrot.slane %v2344, 2
        %v2346 = vadd.f32 %v2344, %v2345
        %v2347 = vrot.slane %v2346, 1
        %v2348 = vadd.f32 %v2346, %v2347
        %v2349 = vrot.slane %v2177, 4
        %v2350 = vadd.f32 %v2177, %v2349
        %v2351 = vrot.slane %v2350, 2
        %v2352 = vadd.f32 %v2350, %v2351
        %v2353 = vrot.slane %v2352, 1
        %v2354 = vadd.f32 %v2352, %v2353
        %v2355 = vrot.slane %v2178, 4
        %v2356 = vadd.f32 %v2178, %v2355
        %v2357 = vrot.slane %v2356, 2
        %v2358 = vadd.f32 %v2356, %v2357
        %v2359 = vrot.slane %v2358, 1
        %v2360 = vadd.f32 %v2358, %v2359
        %v2361 = vrot.slane %v2179, 4
        %v2362 = vadd.f32 %v2179, %v2361
        %v2363 = vrot.slane %v2362, 2
        %v2364 = vadd.f32 %v2362, %v2363
        %v2365 = vrot.slane %v2364, 1
        %v2366 = vadd.f32 %v2364, %v2365
        %v2367 = vrot.slane %v2180, 4
        %v2368 = vadd.f32 %v2180, %v2367
        %v2369 = vrot.slane %v2368, 2
        %v2370 = vadd.f32 %v2368, %v2369
        %v2371 = vrot.slane %v2370, 1
        %v2372 = vadd.f32 %v2370, %v2371
        %v2373 = vrot.slane %v2086, 4
        %v2374 = vadd.f32 %v2086, %v2373
        %v2375 = vrot.slane %v2374, 2
        %v2376 = vadd.f32 %v2374, %v2375
        %v2377 = vrot.slane %v2376, 1
        %v2378 = vadd.f32 %v2376, %v2377
        %v2379 = vrot.slane %v2088, 4
        %v2380 = vadd.f32 %v2088, %v2379
        %v2381 = vrot.slane %v2380, 2
        %v2382 = vadd.f32 %v2380, %v2381
        %v2383 = vrot.slane %v2382, 1
        %v2384 = vadd.f32 %v2382, %v2383
        %v2385 = vrot.slane %v2090, 4
        %v2386 = vadd.f32 %v2090, %v2385
        %v2387 = vrot.slane %v2386, 2
        %v2388 = vadd.f32 %v2386, %v2387
        %v2389 = vrot.slane %v2388, 1
        %v2390 = vadd.f32 %v2388, %v2389
        %v2391 = vrot.slane %v2092, 4
        %v2392 = vadd.f32 %v2092, %v2391
        %v2393 = vrot.slane %v2392, 2
        %v2394 = vadd.f32 %v2392, %v2393
        %v2395 = vrot.slane %v2394, 1
        %v2396 = vadd.f32 %v2394, %v2395
        %v2397 = vrot.slane %v2094, 4
        %v2398 = vadd.f32 %v2094, %v2397
        %v2399 = vrot.slane %v2398, 2
        %v2400 = vadd.f32 %v2398, %v2399
        %v2401 = vrot.slane %v2400, 1
        %v2402 = vadd.f32 %v2400, %v2401
        %v2403 = vrot.slane %v2096, 4
        %v2404 = vadd.f32 %v2096, %v2403
        %v2405 = vrot.slane %v2404, 2
        %v2406 = vadd.f32 %v2404, %v2405
        %v2407 = vrot.slane %v2406, 1
        %v2408 = vadd.f32 %v2406, %v2407
        %v2409 = vrot.slane %v2098, 4
        %v2410 = vadd.f32 %v2098, %v2409
        %v2411 = vrot.slane %v2410, 2
        %v2412 = vadd.f32 %v2410, %v2411
        %v2413 = vrot.slane %v2412, 1
        %v2414 = vadd.f32 %v2412, %v2413
        %v2415 = vrot.slane %v2100, 4
        %v2416 = vadd.f32 %v2100, %v2415
        %v2417 = vrot.slane %v2416, 2
        %v2418 = vadd.f32 %v2416, %v2417
        %v2419 = vrot.slane %v2418, 1
        %v2420 = vadd.f32 %v2418, %v2419
        %v2421 = vrot.slane %v2102, 4
        %v2422 = vadd.f32 %v2102, %v2421
        %v2423 = vrot.slane %v2422, 2
        %v2424 = vadd.f32 %v2422, %v2423
        %v2425 = vrot.slane %v2424, 1
        %v2426 = vadd.f32 %v2424, %v2425
        %v2427 = vrot.slane %v2104, 4
        %v2428 = vadd.f32 %v2104, %v2427
        %v2429 = vrot.slane %v2428, 2
        %v2430 = vadd.f32 %v2428, %v2429
        %v2431 = vrot.slane %v2430, 1
        %v2432 = vadd.f32 %v2430, %v2431
        %v2433 = vrot.slane %v2106, 4
        %v2434 = vadd.f32 %v2106, %v2433
        %v2435 = vrot.slane %v2434, 2
        %v2436 = vadd.f32 %v2434, %v2435
        %v2437 = vrot.slane %v2436, 1
        %v2438 = vadd.f32 %v2436, %v2437
        %v2439 = vrot.slane %v2108, 4
        %v2440 = vadd.f32 %v2108, %v2439
        %v2441 = vrot.slane %v2440, 2
        %v2442 = vadd.f32 %v2440, %v2441
        %v2443 = vrot.slane %v2442, 1
        %v2444 = vadd.f32 %v2442, %v2443
        %v2445 = vrot.slane %v2110, 4
        %v2446 = vadd.f32 %v2110, %v2445
        %v2447 = vrot.slane %v2446, 2
        %v2448 = vadd.f32 %v2446, %v2447
        %v2449 = vrot.slane %v2448, 1
        %v2450 = vadd.f32 %v2448, %v2449
        %v2451 = vrot.slane %v2112, 4
        %v2452 = vadd.f32 %v2112, %v2451
        %v2453 = vrot.slane %v2452, 2
        %v2454 = vadd.f32 %v2452, %v2453
        %v2455 = vrot.slane %v2454, 1
        %v2456 = vadd.f32 %v2454, %v2455
        %v2457 = vrot.slane %v2114, 4
        %v2458 = vadd.f32 %v2114, %v2457
        %v2459 = vrot.slane %v2458, 2
        %v2460 = vadd.f32 %v2458, %v2459
        %v2461 = vrot.slane %v2460, 1
        %v2462 = vadd.f32 %v2460, %v2461
        %v2463 = vrot.slane %v2116, 4
        %v2464 = vadd.f32 %v2116, %v2463
        %v2465 = vrot.slane %v2464, 2
        %v2466 = vadd.f32 %v2464, %v2465
        %v2467 = vrot.slane %v2466, 1
        %v2468 = vadd.f32 %v2466, %v2467
        %v2469 = vrot.slane %v2118, 4
        %v2470 = vadd.f32 %v2118, %v2469
        %v2471 = vrot.slane %v2470, 2
        %v2472 = vadd.f32 %v2470, %v2471
        %v2473 = vrot.slane %v2472, 1
        %v2474 = vadd.f32 %v2472, %v2473
        %v2475 = vrot.slane %v2120, 4
        %v2476 = vadd.f32 %v2120, %v2475
        %v2477 = vrot.slane %v2476, 2
        %v2478 = vadd.f32 %v2476, %v2477
        %v2479 = vrot.slane %v2478, 1
        %v2480 = vadd.f32 %v2478, %v2479
        %v2481 = vrot.slane %v2122, 4
        %v2482 = vadd.f32 %v2122, %v2481
        %v2483 = vrot.slane %v2482, 2
        %v2484 = vadd.f32 %v2482, %v2483
        %v2485 = vrot.slane %v2484, 1
        %v2486 = vadd.f32 %v2484, %v2485
        %v2487 = vrot.slane %v2124, 4
        %v2488 = vadd.f32 %v2124, %v2487
        %v2489 = vrot.slane %v2488, 2
        %v2490 = vadd.f32 %v2488, %v2489
        %v2491 = vrot.slane %v2490, 1
        %v2492 = vadd.f32 %v2490, %v2491
        %v2493 = vrot.slane %v2126, 4
        %v2494 = vadd.f32 %v2126, %v2493
        %v2495 = vrot.slane %v2494, 2
        %v2496 = vadd.f32 %v2494, %v2495
        %v2497 = vrot.slane %v2496, 1
        %v2498 = vadd.f32 %v2496, %v2497
        %v2499 = vrot.slane %v2128, 4
        %v2500 = vadd.f32 %v2128, %v2499
        %v2501 = vrot.slane %v2500, 2
        %v2502 = vadd.f32 %v2500, %v2501
        %v2503 = vrot.slane %v2502, 1
        %v2504 = vadd.f32 %v2502, %v2503
        %v2505 = vrot.slane %v2130, 4
        %v2506 = vadd.f32 %v2130, %v2505
        %v2507 = vrot.slane %v2506, 2
        %v2508 = vadd.f32 %v2506, %v2507
        %v2509 = vrot.slane %v2508, 1
        %v2510 = vadd.f32 %v2508, %v2509
        %v2511 = vrot.slane %v2132, 4
        %v2512 = vadd.f32 %v2132, %v2511
        %v2513 = vrot.slane %v2512, 2
        %v2514 = vadd.f32 %v2512, %v2513
        %v2515 = vrot.slane %v2514, 1
        %v2516 = vadd.f32 %v2514, %v2515
        %v2517 = vrot.slane %v2134, 4
        %v2518 = vadd.f32 %v2134, %v2517
        %v2519 = vrot.slane %v2518, 2
        %v2520 = vadd.f32 %v2518, %v2519
        %v2521 = vrot.slane %v2520, 1
        %v2522 = vadd.f32 %v2520, %v2521
        %v2523 = vrot.slane %v2136, 4
        %v2524 = vadd.f32 %v2136, %v2523
        %v2525 = vrot.slane %v2524, 2
        %v2526 = vadd.f32 %v2524, %v2525
        %v2527 = vrot.slane %v2526, 1
        %v2528 = vadd.f32 %v2526, %v2527
        %v2529 = vrot.slane %v2138, 4
        %v2530 = vadd.f32 %v2138, %v2529
        %v2531 = vrot.slane %v2530, 2
        %v2532 = vadd.f32 %v2530, %v2531
        %v2533 = vrot.slane %v2532, 1
        %v2534 = vadd.f32 %v2532, %v2533
        %v2535 = vrot.slane %v2140, 4
        %v2536 = vadd.f32 %v2140, %v2535
        %v2537 = vrot.slane %v2536, 2
        %v2538 = vadd.f32 %v2536, %v2537
        %v2539 = vrot.slane %v2538, 1
        %v2540 = vadd.f32 %v2538, %v2539
        %v2541 = vrot.slane %v2142, 4
        %v2542 = vadd.f32 %v2142, %v2541
        %v2543 = vrot.slane %v2542, 2
        %v2544 = vadd.f32 %v2542, %v2543
        %v2545 = vrot.slane %v2544, 1
        %v2546 = vadd.f32 %v2544, %v2545
        %v2547 = vrot.slane %v2144, 4
        %v2548 = vadd.f32 %v2144, %v2547
        %v2549 = vrot.slane %v2548, 2
        %v2550 = vadd.f32 %v2548, %v2549
        %v2551 = vrot.slane %v2550, 1
        %v2552 = vadd.f32 %v2550, %v2551
        %v2553 = vrot.slane %v2146, 4
        %v2554 = vadd.f32 %v2146, %v2553
        %v2555 = vrot.slane %v2554, 2
        %v2556 = vadd.f32 %v2554, %v2555
        %v2557 = vrot.slane %v2556, 1
        %v2558 = vadd.f32 %v2556, %v2557
        %v2559 = vrot.slane %v2148, 4
        %v2560 = vadd.f32 %v2148, %v2559
        %v2561 = vrot.slane %v2560, 2
        %v2562 = vadd.f32 %v2560, %v2561
        %v2563 = vrot.slane %v2562, 1
        %v2564 = vadd.f32 %v2562, %v2563
        %v2565 = vrcp.pop %v2378
        %v2566 = vrcp.pop %v2384
        %v2567 = vrcp.pop %v2390
        %v2568 = vrcp.pop %v2396
        %v2569 = vrcp.pop %v2402
        %v2570 = vrcp.pop %v2408
        %v2571 = vrcp.pop %v2414
        %v2572 = vrcp.pop %v2420
        %v2573 = vrcp.pop %v2426
        %v2574 = vrcp.pop %v2432
        %v2575 = vrcp.pop %v2438
        %v2576 = vrcp.pop %v2444
        %v2577 = vrcp.pop %v2450
        %v2578 = vrcp.pop %v2456
        %v2579 = vrcp.pop %v2462
        %v2580 = vrcp.pop %v2468
        %v2581 = vrcp.pop %v2474
        %v2582 = vrcp.pop %v2480
        %v2583 = vrcp.pop %v2486
        %v2584 = vrcp.pop %v2492
        %v2585 = vrcp.pop %v2498
        %v2586 = vrcp.pop %v2504
        %v2587 = vrcp.pop %v2510
        %v2588 = vrcp.pop %v2516
        %v2589 = vrcp.pop %v2522
        %v2590 = vrcp.pop %v2528
        %v2591 = vrcp.pop %v2534
        %v2592 = vrcp.pop %v2540
        %v2593 = vrcp.pop %v2546
        %v2594 = vrcp.pop %v2552
        %v2595 = vrcp.pop %v2558
        %v2596 = vrcp.pop %v2564
        %v2597 = vmul.f32 %v2186, %v2565
        %v2598 = vmul.f32 %v2192, %v2566
        %v2599 = vmul.f32 %v2198, %v2567
        %v2600 = vmul.f32 %v2204, %v2568
        %v2601 = vmul.f32 %v2210, %v2569
        %v2602 = vmul.f32 %v2216, %v2570
        %v2603 = vmul.f32 %v2222, %v2571
        %v2604 = vmul.f32 %v2228, %v2572
        %v2605 = vmul.f32 %v2234, %v2573
        %v2606 = vmul.f32 %v2240, %v2574
        %v2607 = vmul.f32 %v2246, %v2575
        %v2608 = vmul.f32 %v2252, %v2576
        %v2609 = vmul.f32 %v2258, %v2577
        %v2610 = vmul.f32 %v2264, %v2578
        %v2611 = vmul.f32 %v2270, %v2579
        %v2612 = vmul.f32 %v2276, %v2580
        %v2613 = vmul.f32 %v2282, %v2581
        %v2614 = vmul.f32 %v2288, %v2582
        %v2615 = vmul.f32 %v2294, %v2583
        %v2616 = vmul.f32 %v2300, %v2584
        %v2617 = vmul.f32 %v2306, %v2585
        %v2618 = vmul.f32 %v2312, %v2586
        %v2619 = vmul.f32 %v2318, %v2587
        %v2620 = vmul.f32 %v2324, %v2588
        %v2621 = vmul.f32 %v2330, %v2589
        %v2622 = vmul.f32 %v2336, %v2590
        %v2623 = vmul.f32 %v2342, %v2591
        %v2624 = vmul.f32 %v2348, %v2592
        %v2625 = vmul.f32 %v2354, %v2593
        %v2626 = vmul.f32 %v2360, %v2594
        %v2627 = vmul.f32 %v2366, %v2595
        %v2628 = vmul.f32 %v2372, %v2596
        %v2633 = vrot.slane %v1165, 1
        %v2634 = vrot.slane %v1165, 2
        %v2635 = vrot.slane %v1165, 3
        %v2636 = vrot.slane %v1165, 4
        %v2637 = vrot.slane %v1165, 5
        %v2638 = vrot.slane %v1165, 6
        %v2639 = vrot.slane %v1165, 7
        %v2640 = vrot.slane %v1166, 1
        %v2641 = vrot.slane %v1166, 2
        %v2642 = vrot.slane %v1166, 3
        %v2643 = vrot.slane %v1166, 4
        %v2644 = vrot.slane %v1166, 5
        %v2645 = vrot.slane %v1166, 6
        %v2646 = vrot.slane %v1166, 7
        %v2647 = vrot.slane %v1167, 1
        %v2648 = vrot.slane %v1167, 2
        %v2649 = vrot.slane %v1167, 3
        %v2650 = vrot.slane %v1167, 4
        %v2651 = vrot.slane %v1167, 5
        %v2652 = vrot.slane %v1167, 6
        %v2653 = vrot.slane %v1167, 7
        %v2654 = vrot.slane %v1168, 1
        %v2655 = vrot.slane %v1168, 2
        %v2656 = vrot.slane %v1168, 3
        %v2657 = vrot.slane %v1168, 4
        %v2658 = vrot.slane %v1168, 5
        %v2659 = vrot.slane %v1168, 6
        %v2660 = vrot.slane %v1168, 7
        %v2693 = vadd.f32 %v2597, %v1165
        %v2694 = vadd.f32 %v2598, %v2633
        %v2695 = vadd.f32 %v2599, %v2634
        %v2696 = vadd.f32 %v2600, %v2635
        %v2697 = vadd.f32 %v2601, %v2636
        %v2698 = vadd.f32 %v2602, %v2637
        %v2699 = vadd.f32 %v2603, %v2638
        %v2700 = vadd.f32 %v2604, %v2639
        %v2701 = vadd.f32 %v2605, %v1166
        %v2702 = vadd.f32 %v2606, %v2640
        %v2703 = vadd.f32 %v2607, %v2641
        %v2704 = vadd.f32 %v2608, %v2642
        %v2705 = vadd.f32 %v2609, %v2643
        %v2706 = vadd.f32 %v2610, %v2644
        %v2707 = vadd.f32 %v2611, %v2645
        %v2708 = vadd.f32 %v2612, %v2646
        %v2709 = vadd.f32 %v2613, %v1167
        %v2710 = vadd.f32 %v2614, %v2647
        %v2711 = vadd.f32 %v2615, %v2648
        %v2712 = vadd.f32 %v2616, %v2649
        %v2713 = vadd.f32 %v2617, %v2650
        %v2714 = vadd.f32 %v2618, %v2651
        %v2715 = vadd.f32 %v2619, %v2652
        %v2716 = vadd.f32 %v2620, %v2653
        %v2717 = vadd.f32 %v2621, %v1168
        %v2718 = vadd.f32 %v2622, %v2654
        %v2719 = vadd.f32 %v2623, %v2655
        %v2720 = vadd.f32 %v2624, %v2656
        %v2721 = vadd.f32 %v2625, %v2657
        %v2722 = vadd.f32 %v2626, %v2658
        %v2723 = vadd.f32 %v2627, %v2659
        %v2724 = vadd.f32 %v2628, %v2660
        %v2725 = vpack.c.bf16 %v2693, %v2693
        %v2726 = vpack.c.bf16 %v2694, %v2694
        %v2727 = vpack.c.bf16 %v2695, %v2695
        %v2728 = vpack.c.bf16 %v2696, %v2696
        %v2729 = vpack.c.bf16 %v2697, %v2697
        %v2730 = vpack.c.bf16 %v2698, %v2698
        %v2731 = vpack.c.bf16 %v2699, %v2699
        %v2732 = vpack.c.bf16 %v2700, %v2700
        %v2733 = vpack.c.bf16 %v2701, %v2701
        %v2734 = vpack.c.bf16 %v2702, %v2702
        %v2735 = vpack.c.bf16 %v2703, %v2703
        %v2736 = vpack.c.bf16 %v2704, %v2704
        %v2737 = vpack.c.bf16 %v2705, %v2705
        %v2738 = vpack.c.bf16 %v2706, %v2706
        %v2739 = vpack.c.bf16 %v2707, %v2707
        %v2740 = vpack.c.bf16 %v2708, %v2708
        %v2741 = vpack.c.bf16 %v2709, %v2709
        %v2742 = vpack.c.bf16 %v2710, %v2710
        %v2743 = vpack.c.bf16 %v2711, %v2711
        %v2744 = vpack.c.bf16 %v2712, %v2712
        %v2745 = vpack.c.bf16 %v2713, %v2713
        %v2746 = vpack.c.bf16 %v2714, %v2714
        %v2747 = vpack.c.bf16 %v2715, %v2715
        %v2748 = vpack.c.bf16 %v2716, %v2716
        %v2749 = vpack.c.bf16 %v2717, %v2717
        %v2750 = vpack.c.bf16 %v2718, %v2718
        %v2751 = vpack.c.bf16 %v2719, %v2719
        %v2752 = vpack.c.bf16 %v2720, %v2720
        %v2753 = vpack.c.bf16 %v2721, %v2721
        %v2754 = vpack.c.bf16 %v2722, %v2722
        %v2755 = vpack.c.bf16 %v2723, %v2723
        %v2756 = vpack.c.bf16 %v2724, %v2724
        %v2757 = vld [vmem:[%s614] sm:$0xff]
        %v2758 = vld [vmem:[%s614 + $0x8] sm:$0xff]
        %v2759 = vld [vmem:[%s614 + $0x10] sm:$0xff]
        %v2760 = vld [vmem:[%s614 + $0x18] sm:$0xff]
        %v2761 = vld [vmem:[%s614 + $0x20] sm:$0xff]
        %v2762 = vld [vmem:[%s614 + $0x28] sm:$0xff]
        %v2763 = vld [vmem:[%s614 + $0x30] sm:$0xff]
        %v2764 = vld [vmem:[%s614 + $0x38] sm:$0xff]
        %v2765 = vld [vmem:[%s614 + $0x40] sm:$0xff]
        %v2766 = vld [vmem:[%s614 + $0x48] sm:$0xff]
        %v2767 = vld [vmem:[%s614 + $0x50] sm:$0xff]
        %v2768 = vld [vmem:[%s614 + $0x58] sm:$0xff]
        %v2769 = vld [vmem:[%s614 + $0x60] sm:$0xff]
        %v2770 = vld [vmem:[%s614 + $0x68] sm:$0xff]
        %v2771 = vld [vmem:[%s614 + $0x70] sm:$0xff]
        %v2772 = vld [vmem:[%s614 + $0x78] sm:$0xff]
        %v2773 = vld [vmem:[%s618] sm:$0x3]
        %v2775 = vlaneseq
        %v2776 = vshrl.u32 %v2775, 7
        %v2777 = vsub.s32 0, %v2776
        %v2778 = vrot.slane %v2773, %v2777
        %v2779 = vlaneseq
        %v2780 = vshrl.u32 %v2779, 7
        %v2781 = vsub.s32 1, %v2780
        %v2782 = vrot.slane %v2773, %v2781
        %v2817 = vunpack.c.l.b16 %v2725
        %v2818 = vunpack.c.l.b16 %v2726
        %v2819 = vunpack.c.l.b16 %v2727
        %v2820 = vunpack.c.l.b16 %v2728
        %v2821 = vunpack.c.l.b16 %v2729
        %v2822 = vunpack.c.l.b16 %v2730
        %v2823 = vunpack.c.l.b16 %v2731
        %v2824 = vunpack.c.l.b16 %v2732
        %v2825 = vunpack.c.l.b16 %v2733
        %v2826 = vunpack.c.l.b16 %v2734
        %v2827 = vunpack.c.l.b16 %v2735
        %v2828 = vunpack.c.l.b16 %v2736
        %v2829 = vunpack.c.l.b16 %v2737
        %v2830 = vunpack.c.l.b16 %v2738
        %v2831 = vunpack.c.l.b16 %v2739
        %v2832 = vunpack.c.l.b16 %v2740
        %v2833 = vunpack.c.l.b16 %v2741
        %v2834 = vunpack.c.l.b16 %v2742
        %v2835 = vunpack.c.l.b16 %v2743
        %v2836 = vunpack.c.l.b16 %v2744
        %v2837 = vunpack.c.l.b16 %v2745
        %v2838 = vunpack.c.l.b16 %v2746
        %v2839 = vunpack.c.l.b16 %v2747
        %v2840 = vunpack.c.l.b16 %v2748
        %v2841 = vunpack.c.l.b16 %v2749
        %v2842 = vunpack.c.l.b16 %v2750
        %v2843 = vunpack.c.l.b16 %v2751
        %v2844 = vunpack.c.l.b16 %v2752
        %v2845 = vunpack.c.l.b16 %v2753
        %v2846 = vunpack.c.l.b16 %v2754
        %v2847 = vunpack.c.l.b16 %v2755
        %v2848 = vunpack.c.l.b16 %v2756
        %v2849 = vrot.slane %v2818, 7
        %vm2850 = vcmask 1041409
        %v2851 = vsel %vm2850, %v2849, %v2817
        %v2852 = vrot.slane %v2819, 6
        %vm2853 = vcmask 1042434
        %v2854 = vsel %vm2853, %v2852, %v2851
        %v2855 = vrot.slane %v2820, 5
        %vm2856 = vcmask 1043459
        %v2857 = vsel %vm2856, %v2855, %v2854
        %v2858 = vrot.slane %v2821, 4
        %vm2859 = vcmask 1044484
        %v2860 = vsel %vm2859, %v2858, %v2857
        %v2861 = vrot.slane %v2822, 3
        %vm2862 = vcmask 1045509
        %v2863 = vsel %vm2862, %v2861, %v2860
        %v2864 = vrot.slane %v2823, 2
        %vm2865 = vcmask 1046534
        %v2866 = vsel %vm2865, %v2864, %v2863
        %v2867 = vrot.slane %v2824, 1
        %vm2868 = vcmask 1047559
        %v2869 = vsel %vm2868, %v2867, %v2866
        %v2870 = vrot.slane %v2826, 7
        %v2871 = vsel %vm2850, %v2870, %v2825
        %v2872 = vrot.slane %v2827, 6
        %v2873 = vsel %vm2853, %v2872, %v2871
        %v2874 = vrot.slane %v2828, 5
        %v2875 = vsel %vm2856, %v2874, %v2873
        %v2876 = vrot.slane %v2829, 4
        %v2877 = vsel %vm2859, %v2876, %v2875
        %v2878 = vrot.slane %v2830, 3
        %v2879 = vsel %vm2862, %v2878, %v2877
        %v2880 = vrot.slane %v2831, 2
        %v2881 = vsel %vm2865, %v2880, %v2879
        %v2882 = vrot.slane %v2832, 1
        %v2883 = vsel %vm2868, %v2882, %v2881
        %v2884 = vrot.slane %v2834, 7
        %v2885 = vsel %vm2850, %v2884, %v2833
        %v2886 = vrot.slane %v2835, 6
        %v2887 = vsel %vm2853, %v2886, %v2885
        %v2888 = vrot.slane %v2836, 5
        %v2889 = vsel %vm2856, %v2888, %v2887
        %v2890 = vrot.slane %v2837, 4
        %v2891 = vsel %vm2859, %v2890, %v2889
        %v2892 = vrot.slane %v2838, 3
        %v2893 = vsel %vm2862, %v2892, %v2891
        %v2894 = vrot.slane %v2839, 2
        %v2895 = vsel %vm2865, %v2894, %v2893
        %v2896 = vrot.slane %v2840, 1
        %v2897 = vsel %vm2868, %v2896, %v2895
        %v2898 = vrot.slane %v2842, 7
        %v2899 = vsel %vm2850, %v2898, %v2841
        %v2900 = vrot.slane %v2843, 6
        %v2901 = vsel %vm2853, %v2900, %v2899
        %v2902 = vrot.slane %v2844, 5
        %v2903 = vsel %vm2856, %v2902, %v2901
        %v2904 = vrot.slane %v2845, 4
        %v2905 = vsel %vm2859, %v2904, %v2903
        %v2906 = vrot.slane %v2846, 3
        %v2907 = vsel %vm2862, %v2906, %v2905
        %v2908 = vrot.slane %v2847, 2
        %v2909 = vsel %vm2865, %v2908, %v2907
        %v2910 = vrot.slane %v2848, 1
        %v2911 = vsel %vm2868, %v2910, %v2909
        %v2912 = vpack.c.b16 %v2883, %v2869
        %v2913 = vpack.c.b16 %v2911, %v2897
        %v2932 = vunpack.c.l.b16 %v2757
        %v2933 = vunpack.c.h.b16 %v2757
        %v2934 = vunpack.c.l.b16 %v2758
        %v2935 = vunpack.c.h.b16 %v2758
        %v2936 = vunpack.c.l.b16 %v2759
        %v2937 = vunpack.c.h.b16 %v2759
        %v2938 = vunpack.c.l.b16 %v2760
        %v2939 = vunpack.c.h.b16 %v2760
        %v2940 = vunpack.c.l.b16 %v2761
        %v2941 = vunpack.c.h.b16 %v2761
        %v2942 = vunpack.c.l.b16 %v2762
        %v2943 = vunpack.c.h.b16 %v2762
        %v2944 = vunpack.c.l.b16 %v2763
        %v2945 = vunpack.c.h.b16 %v2763
        %v2946 = vunpack.c.l.b16 %v2764
        %v2947 = vunpack.c.h.b16 %v2764
        %v2948 = vunpack.c.l.b16 %v2765
        %v2949 = vunpack.c.h.b16 %v2765
        %v2950 = vunpack.c.l.b16 %v2766
        %v2951 = vunpack.c.h.b16 %v2766
        %v2952 = vunpack.c.l.b16 %v2767
        %v2953 = vunpack.c.h.b16 %v2767
        %v2954 = vunpack.c.l.b16 %v2768
        %v2955 = vunpack.c.h.b16 %v2768
        %v2956 = vunpack.c.l.b16 %v2769
        %v2957 = vunpack.c.h.b16 %v2769
        %v2958 = vunpack.c.l.b16 %v2770
        %v2959 = vunpack.c.h.b16 %v2770
        %v2960 = vunpack.c.l.b16 %v2771
        %v2961 = vunpack.c.h.b16 %v2771
        %v2962 = vunpack.c.l.b16 %v2772
        %v2963 = vunpack.c.h.b16 %v2772
        %v2964 = vpack.c.b16 %v2934, %v2932
        %v2965 = vpack.c.b16 %v2935, %v2933
        %v2966 = vpack.c.b16 %v2938, %v2936
        %v2967 = vpack.c.b16 %v2939, %v2937
        %v2968 = vpack.c.b16 %v2942, %v2940
        %v2969 = vpack.c.b16 %v2943, %v2941
        %v2970 = vpack.c.b16 %v2946, %v2944
        %v2971 = vpack.c.b16 %v2947, %v2945
        %v2972 = vpack.c.b16 %v2950, %v2948
        %v2973 = vpack.c.b16 %v2951, %v2949
        %v2974 = vpack.c.b16 %v2954, %v2952
        %v2975 = vpack.c.b16 %v2955, %v2953
        %v2976 = vpack.c.b16 %v2958, %v2956
        %v2977 = vpack.c.b16 %v2959, %v2957
        %v2978 = vpack.c.b16 %v2962, %v2960
        %v2979 = vpack.c.b16 %v2963, %v2961
        %2996 = vmatprep.subr.bf16.mxu0 %v2979
        %2997 = vmatpush1.bf16.msra.mxu0 %v2978
        %2998 = vmatprep.subr.bf16.mxu0 %v2977
        %2999 = vmatpush1.bf16.msra.mxu0 %v2976
        %3000 = vmatprep.subr.bf16.mxu0 %v2975
        %3001 = vmatpush1.bf16.msra.mxu0 %v2974
        %3002 = vmatprep.subr.bf16.mxu0 %v2973
        %3003 = vmatpush1.bf16.msra.mxu0 %v2972
        %3004 = vmatprep.subr.bf16.mxu0 %v2971
        %3005 = vmatpush1.bf16.msra.mxu0 %v2970
        %3006 = vmatprep.subr.bf16.mxu0 %v2969
        %3007 = vmatpush1.bf16.msra.mxu0 %v2968
        %3008 = vmatprep.subr.bf16.mxu0 %v2967
        %3009 = vmatpush1.bf16.msra.mxu0 %v2966
        %3010 = vmatprep.subr.bf16.mxu0 %v2965
        %3011 = vmatpush1.bf16.msra.mxu0 %v2964
        %3012 = vmatprep.subr.bf16.mxu0 0
        %3013 = vmatpush2.bf16.msra.mxu0 0
        %3014 = vmatprep.subr.bf16.mxu0 0
        %3015 = vmatpush2.bf16.msra.mxu0 0
        %3016 = vmatprep.subr.bf16.mxu0 0
        %3017 = vmatpush2.bf16.msra.mxu0 0
        %3018 = vmatprep.subr.bf16.mxu0 0
        %3019 = vmatpush2.bf16.msra.mxu0 0
        %3020 = vmatprep.subr.bf16.mxu0 0
        %3021 = vmatpush2.bf16.msra.mxu0 0
        %3022 = vmatprep.subr.bf16.mxu0 0
        %3023 = vmatpush2.bf16.msra.mxu0 0
        %3024 = vmatprep.subr.bf16.mxu0 0
        %3025 = vmatpush2.bf16.msra.mxu0 0
        %3026 = vmatprep.subr.bf16.mxu0 0
        %3027 = vmatpush2.bf16.msra.mxu0 0
        %3028 = vmatprep.mubr.bf16.mxu0 0
        %3029 = vmatmul.mubr.bf16.gmra.mxu0 %v2912
        %v3030 = vpop.f32.mrf.mxu0
        %v3031 = vadd.f32 %v2778, %v3030
        %v3032 = vpop.f32.mrf.mxu0
        %v3033 = vadd.f32 %v2782, %v3032
        %v3034 = vpop.f32.mrf.mxu0
        %v3035 = vadd.f32 %v2778, %v3034
        %v3036 = vpop.f32.mrf.mxu0
        %v3037 = vadd.f32 %v2782, %v3036
        %3038 = vmatprep.mubr.bf16.mxu0 0
        %3039 = vmatmul.mubr.bf16.gmra.mxu0 %v2913
        %v3040 = vpop.f32.mrf.mxu0
        %v3041 = vadd.f32 %v2778, %v3040
        %v3042 = vpop.f32.mrf.mxu0
        %v3043 = vadd.f32 %v2782, %v3042
        %v3044 = vpop.f32.mrf.mxu0
        %v3045 = vadd.f32 %v2778, %v3044
        %v3046 = vpop.f32.mrf.mxu0
        %v3047 = vadd.f32 %v2782, %v3046
        %3048 = vdwg.mxu0
        %v3049 = vadd.f32 %v3031, %v3033
        %3050 = vadd.xlane.f32.xlu0 %v3049
        %v3051 = vpop.xlane.xlu0 %3050
        %v3052 = vadd.f32 %v3035, %v3037
        %3053 = vadd.xlane.f32.xlu0 %v3052
        %v3054 = vpop.xlane.xlu0 %3053
        %v3055 = vadd.f32 %v3041, %v3043
        %3056 = vadd.xlane.f32.xlu0 %v3055
        %v3057 = vpop.xlane.xlu0 %3056
        %v3058 = vadd.f32 %v3045, %v3047
        %3059 = vadd.xlane.f32.xlu0 %v3058
        %v3060 = vpop.xlane.xlu0 %3059
        %v3061 = vrcp.pop 256.0
        %v3062 = vmul.f32 %v3051, %v3061
        %v3063 = vmul.f32 %v3054, %v3061
        %v3064 = vmul.f32 %v3057, %v3061
        %v3065 = vmul.f32 %v3060, %v3061
        %v3066 = vsub.f32 %v3031, %v3062
        %v3067 = vsub.f32 %v3033, %v3062
        %v3068 = vsub.f32 %v3035, %v3063
        %v3069 = vsub.f32 %v3037, %v3063
        %v3070 = vsub.f32 %v3041, %v3064
        %v3071 = vsub.f32 %v3043, %v3064
        %v3072 = vsub.f32 %v3045, %v3065
        %v3073 = vsub.f32 %v3047, %v3065
        %v3074 = vmul.f32 %v3066, %v3066
        %v3075 = vmul.f32 %v3067, %v3067
        %v3076 = vmul.f32 %v3068, %v3068
        %v3077 = vmul.f32 %v3069, %v3069
        %v3078 = vmul.f32 %v3070, %v3070
        %v3079 = vmul.f32 %v3071, %v3071
        %v3080 = vmul.f32 %v3072, %v3072
        %v3081 = vmul.f32 %v3073, %v3073
        %v3082 = vadd.f32 %v3074, %v3075
        %3083 = vadd.xlane.f32.xlu0 %v3082
        %v3084 = vpop.xlane.xlu0 %3083
        %v3085 = vadd.f32 %v3076, %v3077
        %3086 = vadd.xlane.f32.xlu0 %v3085
        %v3087 = vpop.xlane.xlu0 %3086
        %v3088 = vadd.f32 %v3078, %v3079
        %3089 = vadd.xlane.f32.xlu0 %v3088
        %v3090 = vpop.xlane.xlu0 %3089
        %v3091 = vadd.f32 %v3080, %v3081
        %3092 = vadd.xlane.f32.xlu0 %v3091
        %v3093 = vpop.xlane.xlu0 %3092
        %v3094 = vmul.f32 %v3084, %v3061
        %v3095 = vmul.f32 %v3087, %v3061
        %v3096 = vmul.f32 %v3090, %v3061
        %v3097 = vmul.f32 %v3093, %v3061
        %v3098 = vadd.f32 %v3094, 1e-05
        %v3099 = vadd.f32 %v3095, 1e-05
        %v3100 = vadd.f32 %v3096, 1e-05
        %v3101 = vadd.f32 %v3097, 1e-05
        %v3102 = vrsqrt.pop %v3098
        %v3103 = vrsqrt.pop %v3099
        %v3104 = vrsqrt.pop %v3100
        %v3105 = vrsqrt.pop %v3101
        %v3106 = vmul.f32 %v3066, %v3102
        %v3107 = vmul.f32 %v3067, %v3102
        %v3108 = vmul.f32 %v3068, %v3103
        %v3109 = vmul.f32 %v3069, %v3103
        %v3110 = vmul.f32 %v3070, %v3104
        %v3111 = vmul.f32 %v3071, %v3104
        %v3112 = vmul.f32 %v3072, %v3105
        %v3113 = vmul.f32 %v3073, %v3105
        %v3114 = vld [vmem:[%s622] sm:$0x3]
        %v3116 = vlaneseq
        %v3117 = vshrl.u32 %v3116, 7
        %v3118 = vsub.s32 0, %v3117
        %v3119 = vrot.slane %v3114, %v3118
        %v3120 = vlaneseq
        %v3121 = vshrl.u32 %v3120, 7
        %v3122 = vsub.s32 1, %v3121
        %v3123 = vrot.slane %v3114, %v3122
        %v3126 = vmul.f32 %v3106, %v3119
        %v3127 = vmul.f32 %v3107, %v3123
        %v3128 = vmul.f32 %v3108, %v3119
        %v3129 = vmul.f32 %v3109, %v3123
        %v3130 = vmul.f32 %v3110, %v3119
        %v3131 = vmul.f32 %v3111, %v3123
        %v3132 = vmul.f32 %v3112, %v3119
        %v3133 = vmul.f32 %v3113, %v3123
        %v3134 = vld [vmem:[%s626] sm:$0x3]
        %v3136 = vlaneseq
        %v3137 = vshrl.u32 %v3136, 7
        %v3138 = vsub.s32 0, %v3137
        %v3139 = vrot.slane %v3134, %v3138
        %v3140 = vlaneseq
        %v3141 = vshrl.u32 %v3140, 7
        %v3142 = vsub.s32 1, %v3141
        %v3143 = vrot.slane %v3134, %v3142
        %v3146 = vadd.f32 %v3126, %v3139
        %v3147 = vadd.f32 %v3127, %v3143
        %v3148 = vadd.f32 %v3128, %v3139
        %v3149 = vadd.f32 %v3129, %v3143
        %v3150 = vadd.f32 %v3130, %v3139
        %v3151 = vadd.f32 %v3131, %v3143
        %v3152 = vadd.f32 %v3132, %v3139
        %v3153 = vadd.f32 %v3133, %v3143
        %v3154 = vmax.f32 %v3146, 0.0
        %v3155 = vmax.f32 %v3147, 0.0
        %v3156 = vmax.f32 %v3148, 0.0
        %v3157 = vmax.f32 %v3149, 0.0
        %v3158 = vmax.f32 %v3150, 0.0
        %v3159 = vmax.f32 %v3151, 0.0
        %v3160 = vmax.f32 %v3152, 0.0
        %v3161 = vmax.f32 %v3153, 0.0
        %v3162 = vpack.c.bf16 %v3156, %v3154
        %v3163 = vpack.c.bf16 %v3157, %v3155
        %v3164 = vpack.c.bf16 %v3160, %v3158
        %v3165 = vpack.c.bf16 %v3161, %v3159
        %v3166 = vld [vmem:[%s631] sm:$0xf]
        %v3167 = vld [vmem:[%s631 + $0x4] sm:$0xf]
        %v3168 = vld [vmem:[%s631 + $0x8] sm:$0xf]
        %v3169 = vld [vmem:[%s631 + $0xc] sm:$0xf]
        %v3170 = vld [vmem:[%s631 + $0x10] sm:$0xf]
        %v3171 = vld [vmem:[%s631 + $0x14] sm:$0xf]
        %v3172 = vld [vmem:[%s631 + $0x18] sm:$0xf]
        %v3173 = vld [vmem:[%s631 + $0x1c] sm:$0xf]
        %v3174 = vld [vmem:[%s631 + $0x20] sm:$0xf]
        %v3175 = vld [vmem:[%s631 + $0x24] sm:$0xf]
        %v3176 = vld [vmem:[%s631 + $0x28] sm:$0xf]
        %v3177 = vld [vmem:[%s631 + $0x2c] sm:$0xf]
        %v3178 = vld [vmem:[%s631 + $0x30] sm:$0xf]
        %v3179 = vld [vmem:[%s631 + $0x34] sm:$0xf]
        %v3180 = vld [vmem:[%s631 + $0x38] sm:$0xf]
        %v3181 = vld [vmem:[%s631 + $0x3c] sm:$0xf]
        %v3182 = vld [vmem:[%s631 + $0x40] sm:$0xf]
        %v3183 = vld [vmem:[%s631 + $0x44] sm:$0xf]
        %v3184 = vld [vmem:[%s631 + $0x48] sm:$0xf]
        %v3185 = vld [vmem:[%s631 + $0x4c] sm:$0xf]
        %v3186 = vld [vmem:[%s631 + $0x50] sm:$0xf]
        %v3187 = vld [vmem:[%s631 + $0x54] sm:$0xf]
        %v3188 = vld [vmem:[%s631 + $0x58] sm:$0xf]
        %v3189 = vld [vmem:[%s631 + $0x5c] sm:$0xf]
        %v3190 = vld [vmem:[%s631 + $0x60] sm:$0xf]
        %v3191 = vld [vmem:[%s631 + $0x64] sm:$0xf]
        %v3192 = vld [vmem:[%s631 + $0x68] sm:$0xf]
        %v3193 = vld [vmem:[%s631 + $0x6c] sm:$0xf]
        %v3194 = vld [vmem:[%s631 + $0x70] sm:$0xf]
        %v3195 = vld [vmem:[%s631 + $0x74] sm:$0xf]
        %v3196 = vld [vmem:[%s631 + $0x78] sm:$0xf]
        %v3197 = vld [vmem:[%s631 + $0x7c] sm:$0xf]
        %v3198 = vld [vmem:[%s634] sm:$0x1]
        %v3200 = vlaneseq
        %v3201 = vshrl.u32 %v3200, 7
        %v3202 = vsub.s32 0, %v3201
        %v3203 = vrot.slane %v3198, %v3202
        %v3237 = vunpack.c.l.b16 %v3166
        %v3238 = vunpack.c.l.b16 %v3167
        %v3239 = vunpack.c.l.b16 %v3168
        %v3240 = vunpack.c.l.b16 %v3169
        %v3241 = vunpack.c.l.b16 %v3170
        %v3242 = vunpack.c.l.b16 %v3171
        %v3243 = vunpack.c.l.b16 %v3172
        %v3244 = vunpack.c.l.b16 %v3173
        %v3245 = vunpack.c.l.b16 %v3174
        %v3246 = vunpack.c.l.b16 %v3175
        %v3247 = vunpack.c.l.b16 %v3176
        %v3248 = vunpack.c.l.b16 %v3177
        %v3249 = vunpack.c.l.b16 %v3178
        %v3250 = vunpack.c.l.b16 %v3179
        %v3251 = vunpack.c.l.b16 %v3180
        %v3252 = vunpack.c.l.b16 %v3181
        %v3253 = vunpack.c.l.b16 %v3182
        %v3254 = vunpack.c.l.b16 %v3183
        %v3255 = vunpack.c.l.b16 %v3184
        %v3256 = vunpack.c.l.b16 %v3185
        %v3257 = vunpack.c.l.b16 %v3186
        %v3258 = vunpack.c.l.b16 %v3187
        %v3259 = vunpack.c.l.b16 %v3188
        %v3260 = vunpack.c.l.b16 %v3189
        %v3261 = vunpack.c.l.b16 %v3190
        %v3262 = vunpack.c.l.b16 %v3191
        %v3263 = vunpack.c.l.b16 %v3192
        %v3264 = vunpack.c.l.b16 %v3193
        %v3265 = vunpack.c.l.b16 %v3194
        %v3266 = vunpack.c.l.b16 %v3195
        %v3267 = vunpack.c.l.b16 %v3196
        %v3268 = vunpack.c.l.b16 %v3197
        %v3269 = vpack.c.b16 %v3238, %v3237
        %v3270 = vpack.c.b16 %v3240, %v3239
        %v3271 = vpack.c.b16 %v3242, %v3241
        %v3272 = vpack.c.b16 %v3244, %v3243
        %v3273 = vpack.c.b16 %v3246, %v3245
        %v3274 = vpack.c.b16 %v3248, %v3247
        %v3275 = vpack.c.b16 %v3250, %v3249
        %v3276 = vpack.c.b16 %v3252, %v3251
        %v3277 = vpack.c.b16 %v3254, %v3253
        %v3278 = vpack.c.b16 %v3256, %v3255
        %v3279 = vpack.c.b16 %v3258, %v3257
        %v3280 = vpack.c.b16 %v3260, %v3259
        %v3281 = vpack.c.b16 %v3262, %v3261
        %v3282 = vpack.c.b16 %v3264, %v3263
        %v3283 = vpack.c.b16 %v3266, %v3265
        %v3284 = vpack.c.b16 %v3268, %v3267
        %3301 = vmatprep.subr.bf16.mxu0 0
        %3302 = vmatpush1.bf16.msra.mxu0 %v3276
        %3303 = vmatprep.subr.bf16.mxu0 0
        %3304 = vmatpush1.bf16.msra.mxu0 %v3275
        %3305 = vmatprep.subr.bf16.mxu0 0
        %3306 = vmatpush1.bf16.msra.mxu0 %v3274
        %3307 = vmatprep.subr.bf16.mxu0 0
        %3308 = vmatpush1.bf16.msra.mxu0 %v3273
        %3309 = vmatprep.subr.bf16.mxu0 0
        %3310 = vmatpush1.bf16.msra.mxu0 %v3272
        %3311 = vmatprep.subr.bf16.mxu0 0
        %3312 = vmatpush1.bf16.msra.mxu0 %v3271
        %3313 = vmatprep.subr.bf16.mxu0 0
        %3314 = vmatpush1.bf16.msra.mxu0 %v3270
        %3315 = vmatprep.subr.bf16.mxu0 0
        %3316 = vmatpush1.bf16.msra.mxu0 %v3269
        %3317 = vmatprep.subr.bf16.mxu0 0
        %3318 = vmatpush2.bf16.msra.mxu0 %v3284
        %3319 = vmatprep.subr.bf16.mxu0 0
        %3320 = vmatpush2.bf16.msra.mxu0 %v3283
        %3321 = vmatprep.subr.bf16.mxu0 0
        %3322 = vmatpush2.bf16.msra.mxu0 %v3282
        %3323 = vmatprep.subr.bf16.mxu0 0
        %3324 = vmatpush2.bf16.msra.mxu0 %v3281
        %3325 = vmatprep.subr.bf16.mxu0 0
        %3326 = vmatpush2.bf16.msra.mxu0 %v3280
        %3327 = vmatprep.subr.bf16.mxu0 0
        %3328 = vmatpush2.bf16.msra.mxu0 %v3279
        %3329 = vmatprep.subr.bf16.mxu0 0
        %3330 = vmatpush2.bf16.msra.mxu0 %v3278
        %3331 = vmatprep.subr.bf16.mxu0 0
        %3332 = vmatpush2.bf16.msra.mxu0 %v3277
        %3333 = vmatprep.mubr.bf16.mxu0 %v3163
        %3334 = vmatmul.mubr.bf16.gmra.mxu0 %v3162
        %v3335 = vpop.f32.mrf.mxu0
        %v3336 = vadd.f32 %v3203, %v3335
        %v3337 = vpop.f32.mrf.mxu0
        %v3338 = vpop.f32.mrf.mxu0
        %v3339 = vadd.f32 %v3203, %v3338
        %v3340 = vpop.f32.mrf.mxu0
        %3341 = vmatprep.mubr.bf16.mxu0 %v3165
        %3342 = vmatmul.mubr.bf16.gmra.mxu0 %v3164
        %v3343 = vpop.f32.mrf.mxu0
        %v3344 = vadd.f32 %v3203, %v3343
        %v3345 = vpop.f32.mrf.mxu0
        %v3346 = vpop.f32.mrf.mxu0
        %v3347 = vadd.f32 %v3203, %v3346
        %v3348 = vpop.f32.mrf.mxu0
        %3349 = vdwg.mxu0
        %v3350 = vadd.f32 %v1104, %v3336
        %v3351 = vadd.f32 %v1105, %v3339
        %v3352 = vadd.f32 %v1106, %v3344
        %v3353 = vadd.f32 %v1107, %v3347
        %3354 = vst [vmem:[#allocation6] sm:$0xff] %v3350
        %3355 = vst [vmem:[#allocation6 + $0x8] sm:$0xff] %v3351
        %3356 = vst [vmem:[#allocation6 + $0x10] sm:$0xff] %v3352
        %3357 = vst [vmem:[#allocation6 + $0x18] sm:$0xff] %v3353
        // Predicated region
        $region93: #{tpu_custom_call.1} parent=83 // pred_check
          %p3358 = pneg %p418
        $region94: #{tpu_custom_call.1} parent=83 // pred_check_branch
          %3360 = sbr.rel (%p3358) target = $region96
        $region95: #{tpu_custom_call.1} parent=83 // pred_region
          %s3362 = ssub.s32 512, 512
          %3363 = vsyncadd [#allocation4], %s3362
          %s3364 = sshll.u32 [#allocation6], 4
          %s3365 = int_to_ptr.vmem [resolvable:$true] %s3364
          %3370 = dma.vmem_to_hbm [thread:$0]  %s3365, 512, %s16, [#allocation4], 128, 128, 8
        $region96: #{tpu_custom_call.1} parent=83 // pred_fallthru
          _
        // Predicated region
        $region97: #{tpu_custom_call.1} parent=83 // pred_check
          %p3371 = pneg %p418
        $region98: #{tpu_custom_call.1} parent=83 // pred_check_branch
          %3373 = sbr.rel (%p3371) target = $region100
        $region99: #{tpu_custom_call.1} parent=83 // pred_region
          %3374 = dma.done [#allocation4], 512
        $region100: #{tpu_custom_call.1} parent=83 // pred_fallthru
          _
      $region84: #{tpu_custom_call.1} parent=5 // pred_fallthru
        _
      %p3375 = scmp.le.s32.totalorder 2, %s24
      // Predicated region
      $region101: #{tpu_custom_call.1} parent=5 // pred_check
        %p3376 = pneg %p3375
      $region102: #{tpu_custom_call.1} parent=5 // pred_check_branch
        %3378 = sbr.rel (%p3376) target = $region104
      $region103: #{tpu_custom_call.1} parent=5 // pred_region
        %s3379 = ssub.s32 %s24, 2
      $region104: #{tpu_custom_call.1} parent=5 // pred_fallthru
        _
    $region6: #{tpu_custom_call.1} parent=1 // loop_footer
      %s28 = sadd.s32 1, %s24
    $region7: #{tpu_custom_call.1} parent=1 // loop_footer_branch
      %23 = sbr.rel target = $region3
    $region8: #{tpu_custom_call.1} parent=1 // loop_exit
      _
    %3380 = vsyncpa [#allocation4], 1
    %s3381 = scalar_lea.sflag [#allocation4], 1
    %3382 = vsyncpa %s3381, 1
    %3383 = vsyncpa [#allocation5], 1
    %s3384 = scalar_lea.sflag [#allocation5], 1
    %3385 = vsyncpa %s3384, 1

</llo_original>
